<compile_context>
chip_gen: v5e
topology: v5e:2x2
jax: 0.10.0
libtpu: 0.0.40
codegen_flags: <defaults>
</compile_context>

<pallas_src>
import functools

import jax
import jax.numpy as jnp
from jax import lax
from jax.experimental import pallas as pl
from jax.experimental.pallas import tpu as pltpu


def _ceil_to(v, m):
    return ((v + m - 1) // m) * m


# ---------------------------------------------------------------------------
# Fused RDB kernel (one grid step per image)
#
# refs = [x, mask, (w_i, b_i) * L, w1x1, b1x1, out, canvas_scratch]
#   x      : (1, A0, Pr)        pre-padded input (channels padded to A0,
#                                spatial ring of zeros, lanes padded to Pr)
#   mask   : (1, Pr)            1.0 at interior canvas pixels, 0.0 elsewhere
#   w_i    : (9, Gp, Ci_pad)    tap-major packed 3x3 weights (zero padding)
#   b_i    : (Gp, 1)
#   w1x1   : (A0, Ctot_pad)     packed 1x1 weights (zero padding rows/cols)
#   b1x1   : (A0, 1)
#   out    : (1, A0, Pr)        result in canvas coordinates (cropped later)
#   canvas : (Ctot_pad, Ptot)   VMEM feature canvas with left/right lane halo
# ---------------------------------------------------------------------------
def _rdb_kernel(*refs, Wp, cin_pad, growth_pad, num_layers, pad, Pr):
    L = num_layers
    A0 = cin_pad
    Gp = growth_pad

    x_ref = refs[0]
    mask_ref = refs[1]
    w_refs = [refs[2 + 2 * i] for i in range(L)]
    b_refs = [refs[3 + 2 * i] for i in range(L)]
    w1_ref = refs[2 + 2 * L]
    b1_ref = refs[3 + 2 * L]
    o_ref = refs[4 + 2 * L]
    canvas_ref = refs[5 + 2 * L]

    # No canvas zeroing needed:
    #   rows [0, A0)                     <- rewritten here from x_ref each step
    #   rows [A0+i*Gp, A0+(i+1)*Gp)      <- rewritten by layer i each step
    # Halo lanes [0, pad) / [pad+Pr, Ptot) are never read into *interior*
    # outputs; ring outputs that do touch them are forced to exactly 0 via
    # jnp.where below (safe even if the halo holds NaN/Inf garbage).
    canvas_ref[0:A0, pad:pad + Pr] = x_ref[0]           # aligned, unmasked store

    interior = mask_ref[...] > 0.5                      # (1, Pr) bool

    taps = [(dy, dx) for dy in (-1, 0, 1) for dx in (-1, 0, 1)]

    for i in range(L):
        ci_pad = A0 + i * Gp                            # channels feeding layer i
        # 9 accumulated MXU dots straight from lane-offset canvas windows
        # (no patch scratch, no patch copy traffic).
        acc = jnp.zeros((Gp, Pr), jnp.float32)
        for t, (dy, dx) in enumerate(taps):
            off = pad + dy * Wp + dx
            acc = acc + jnp.dot(
                w_refs[i][t],                           # (Gp, ci_pad)
                canvas_ref[0:ci_pad, off:off + Pr],     # (ci_pad, Pr)
                preferred_element_type=jnp.float32)
        out = acc + b_refs[i][...]                      # bias (Gp, 1)
        out = jnp.where(out >= 0, out, 0.1 * out)       # LeakyReLU(0.1)
        out = jnp.where(interior, out, 0.0)             # zero the padding ring
        row0 = A0 + i * Gp
        canvas_ref[row0:row0 + Gp, pad:pad + Pr] = out.astype(canvas_ref.dtype)

    # Final 1x1 conv over all (padded) channels + residual, straight from VMEM.
    feat = canvas_ref[:, pad:pad + Pr]                  # (Ctot_pad, Pr)
    out = jnp.dot(w1_ref[...], feat, preferred_element_type=jnp.float32)
    out = out + b1_ref[...]                             # (A0, 1)
    out = out + feat[0:A0, :]                           # residual (x rows)
    o_ref[0] = out.astype(o_ref.dtype)


# ---------------------------------------------------------------------------
# Wrapper: packs PyTorch-layout parameters and calls the fused kernel.
# ---------------------------------------------------------------------------
def _chan_rows(num_ch, cin, growth, A0, Gp):
    """Map conceptual concatenated channel c -> row in the padded canvas."""
    rows = []
    for c in range(num_ch):
        if c < cin:
            rows.append(c)
        else:
            j, g = divmod(c - cin, growth)
            rows.append(A0 + j * Gp + g)
    return rows


def rdb_forward(x, params, num_dense_layer, growth_rate):
    """x: (N, Cin, H, W) NCHW.  params use PyTorch layouts (OIHW weights)."""
    N, Cin, H, W = x.shape
    G = growth_rate
    L = num_dense_layer
    Hp, Wp = H + 2, W + 2
    P = Hp * Wp
    Pr = _ceil_to(P, 128)                 # lane-dense padded spatial extent
    pad = _ceil_to(Wp + 1, 128)           # lane-aligned left/right canvas halo
    Ptot = 2 * pad + Pr
    A0 = _ceil_to(Cin, 8)                 # 8-aligned channel blocks
    Gp = _ceil_to(G, 8)
    Ctot_pad = A0 + L * Gp
    dtype = x.dtype

    # Pad once in XLA: channels -> A0 (zeros), spatial ring of zeros, flatten
    # spatial onto lanes, pad lanes -> Pr (zeros).
    xp = jnp.pad(x, ((0, 0), (0, A0 - Cin), (1, 1), (1, 1))).reshape(N, A0, P)
    xp = jnp.pad(xp, ((0, 0), (0, 0), (0, Pr - P)))

    # Interior mask in canvas coordinates (zeros on the ring and past P).
    mask = jnp.pad(jnp.ones((H, W), jnp.float32), ((1, 1), (1, 1))).reshape(1, P)
    mask = jnp.pad(mask, ((0, 0), (0, Pr - P)))

    args = [xp, mask]
    in_specs = [
        pl.BlockSpec((1, A0, Pr), lambda n: (n, 0, 0)),
        pl.BlockSpec((1, Pr), lambda n: (0, 0)),
    ]

    # Pack dense-layer weights: (G, Ci, 3, 3) OIHW -> (9, Gp, Ci_pad),
    # tap-major, zero rows/columns at all alignment padding.
    for i in range(L):
        ci = Cin + i * G
        ci_pad = A0 + i * Gp
        rows = jnp.array(_chan_rows(ci, Cin, G, A0, Gp), dtype=jnp.int32)
        w = params[f"dense{i}_w"]                                # (G, Ci, 3, 3)
        wt = jnp.transpose(w, (2, 3, 0, 1)).reshape(9, G, ci)    # (tap, g, c)
        kw = jnp.zeros((9, Gp, ci_pad), jnp.float32).at[:, :G, rows].set(wt)
        kb = jnp.zeros((Gp, 1), jnp.float32).at[:G, 0].set(params[f"dense{i}_b"])
        args += [kw, kb]
        in_specs += [
            pl.BlockSpec((9, Gp, ci_pad), lambda n: (0, 0, 0)),
            pl.BlockSpec((Gp, 1), lambda n: (0, 0)),
        ]

    ctot = Cin + L * G
    rows_all = jnp.array(_chan_rows(ctot, Cin, G, A0, Gp), dtype=jnp.int32)
    w1 = params["conv1x1_w"].reshape(Cin, ctot)                  # (Cin, Ctot,1,1)
    w1p = jnp.zeros((A0, Ctot_pad), jnp.float32).at[:Cin, rows_all].set(w1)
    b1 = jnp.zeros((A0, 1), jnp.float32).at[:Cin, 0].set(params["conv1x1_b"])
    args += [w1p, b1]
    in_specs += [
        pl.BlockSpec((A0, Ctot_pad), lambda n: (0, 0)),
        pl.BlockSpec((A0, 1), lambda n: (0, 0)),
    ]

    kernel = functools.partial(
        _rdb_kernel, Wp=Wp, cin_pad=A0, growth_pad=Gp, num_layers=L,
        pad=pad, Pr=Pr)

    out_flat = pl.pallas_call(
        kernel,
        out_shape=jax.ShapeDtypeStruct((N, A0, Pr), dtype),
        grid_spec=pltpu.PrefetchScalarGridSpec(
            num_scalar_prefetch=0,
            grid=(N,),
            in_specs=in_specs,
            out_specs=pl.BlockSpec((1, A0, Pr), lambda n: (n, 0, 0)),
            scratch_shapes=[
                pltpu.VMEM((Ctot_pad, Ptot), jnp.float32),   # feature canvas
            ],
        ),
        compiler_params=pltpu.CompilerParams(
            dimension_semantics=("parallel",),
            vmem_limit_bytes=32 * 1024 * 1024),
    )(*args)

    # Crop padding channels / lanes / ring (cheap XLA slices).
    out = out_flat[:, :Cin, :P].reshape(N, Cin, Hp, Wp)[:, :, 1:H + 1, 1:W + 1]
    return out


# ---------------------------------------------------------------------------
# Parameter init (PyTorch layouts) and pure-JAX reference for correctness.
# ---------------------------------------------------------------------------
def init_rdb_params(key, in_channels, num_dense_layer, growth_rate):
    params = {}
    c = in_channels
    for i in range(num_dense_layer):
        key, k1, k2 = jax.random.split(key, 3)
        params[f"dense{i}_w"] = (
            jax.random.normal(k1, (growth_rate, c, 3, 3), jnp.float32) * 0.05)
        params[f"dense{i}_b"] = (
            jax.random.normal(k2, (growth_rate,), jnp.float32) * 0.05)
        c += growth_rate
    key, k1, k2 = jax.random.split(key, 3)
    params["conv1x1_w"] = jax.random.normal(
        k1, (in_channels, c, 1, 1), jnp.float32) * 0.05
    params["conv1x1_b"] = jax.random.normal(
        k2, (in_channels,), jnp.float32) * 0.05
    return params


def rdb_reference(x, params, num_dense_layer):
    dn = ("NCHW", "OIHW", "NCHW")
    feat = x
    for i in range(num_dense_layer):
        w = params[f"dense{i}_w"]
        b = params[f"dense{i}_b"]
        o = lax.conv_general_dilated(feat, w, (1, 1), "SAME",
                                     dimension_numbers=dn)
        o = o + b[None, :, None, None]
        o = jnp.where(o >= 0, o, 0.1 * o)                 # LeakyReLU(0.1)
        feat = jnp.concatenate([feat, o], axis=1)         # torch.cat((x, out), 1)
    o = lax.conv_general_dilated(feat, params["conv1x1_w"], (1, 1), "SAME",
                                 dimension_numbers=dn)
    o = o + params["conv1x1_b"][None, :, None, None]
    return o + x


if __name__ == "__main__":
    in_channels = 4
    num_dense_layer = 3
    growth_rate = 4
    N, H, W = 2, 16, 16

    key = jax.random.PRNGKey(0)
    key, kx = jax.random.split(key)
    x = jax.random.normal(kx, (N, in_channels, H, W), jnp.float32)
    params = init_rdb_params(key, in_channels, num_dense_layer, growth_rate)

    out = rdb_forward(x, params, num_dense_layer, growth_rate)
    out = jax.block_until_ready(out)

    ref = rdb_reference(x, params, num_dense_layer)
    assert out.shape == (N, in_channels, H, W)
    assert jnp.allclose(out, ref, atol=1e-3, rtol=1e-3), "mismatch vs reference"

    print("KERNEL_OK")
</pallas_src>

<mosaic_0001>
module attributes {stable_mosaic.version = 11 : i64} {
  func.func @_rdb_kernel(%arg0: i32, %arg1: memref<1x8x384xf32, #tpu.memory_space<vmem>>, %arg2: memref<1x384xf32, #tpu.memory_space<vmem>>, %arg3: memref<9x8x8xf32, #tpu.memory_space<vmem>>, %arg4: memref<8x1xf32, #tpu.memory_space<vmem>>, %arg5: memref<9x8x16xf32, #tpu.memory_space<vmem>>, %arg6: memref<8x1xf32, #tpu.memory_space<vmem>>, %arg7: memref<9x8x24xf32, #tpu.memory_space<vmem>>, %arg8: memref<8x1xf32, #tpu.memory_space<vmem>>, %arg9: memref<8x32xf32, #tpu.memory_space<vmem>>, %arg10: memref<8x1xf32, #tpu.memory_space<vmem>>, %arg11: memref<1x8x384xf32, #tpu.memory_space<vmem>>, %arg12: memref<32x640xf32, #tpu.memory_space<vmem>>) attributes {dimension_semantics = [#tpu.dimension_semantics<parallel>], iteration_bounds = array<i64: 2>, scalar_prefetch = 0 : i64, scratch_operands = 1 : i64, tpu.core_type = #tpu.core_type<tc>, window_params = [{transform_indices = @transform_0, window_bounds = array<i64: 1, 8, 384>}, {pipeline_mode = #tpu.pipeline_mode<synchronous>, transform_indices = @transform_1, window_bounds = array<i64: 1, 384>}, {pipeline_mode = #tpu.pipeline_mode<synchronous>, transform_indices = @transform_2, window_bounds = array<i64: 9, 8, 8>}, {pipeline_mode = #tpu.pipeline_mode<synchronous>, transform_indices = @transform_3, window_bounds = array<i64: 8, 1>}, {pipeline_mode = #tpu.pipeline_mode<synchronous>, transform_indices = @transform_4, window_bounds = array<i64: 9, 8, 16>}, {pipeline_mode = #tpu.pipeline_mode<synchronous>, transform_indices = @transform_5, window_bounds = array<i64: 8, 1>}, {pipeline_mode = #tpu.pipeline_mode<synchronous>, transform_indices = @transform_6, window_bounds = array<i64: 9, 8, 24>}, {pipeline_mode = #tpu.pipeline_mode<synchronous>, transform_indices = @transform_7, window_bounds = array<i64: 8, 1>}, {pipeline_mode = #tpu.pipeline_mode<synchronous>, transform_indices = @transform_8, window_bounds = array<i64: 8, 32>}, {pipeline_mode = #tpu.pipeline_mode<synchronous>, transform_indices = @transform_9, window_bounds = array<i64: 8, 1>}, {transform_indices = @transform_10, window_bounds = array<i64: 1, 8, 384>}]} {
    %c0 = arith.constant 0 : index
    %c0_0 = arith.constant 0 : index
    %c0_1 = arith.constant 0 : index
    %0 = vector.load %arg1[%c0, %c0_0, %c0_1] : memref<1x8x384xf32, #tpu.memory_space<vmem>>, vector<1x8x384xf32>
    %1 = vector.shape_cast %0 : vector<1x8x384xf32> to vector<8x384xf32>
    %c0_2 = arith.constant 0 : index
    %c128 = arith.constant 128 : index
    %2 = vector.load %arg12[%c0_2, %c128] : memref<32x640xf32, #tpu.memory_space<vmem>>, vector<8x384xf32>
    tpu.vector_store %arg12[%c0_2, %c128], %1 {strides = array<i32>} : memref<32x640xf32, #tpu.memory_space<vmem>>, vector<8x384xf32>,
    %c0_3 = arith.constant 0 : index
    %c0_4 = arith.constant 0 : index
    %3 = vector.load %arg2[%c0_3, %c0_4] : memref<1x384xf32, #tpu.memory_space<vmem>>, vector<1x384xf32>
    %cst = arith.constant 5.000000e-01 : f32
    %4 = vector.broadcast %cst : f32 to vector<1x384xf32>
    %5 = arith.cmpf ogt, %3, %4 : vector<1x384xf32>
    %cst_5 = arith.constant 0.000000e+00 : f32
    %6 = vector.broadcast %cst_5 : f32 to vector<8x384xf32>
    %c0_6 = arith.constant 0 : index
    %c0_7 = arith.constant 0 : index
    %c0_8 = arith.constant 0 : index
    %7 = vector.load %arg3[%c0_6, %c0_7, %c0_8] : memref<9x8x8xf32, #tpu.memory_space<vmem>>, vector<1x8x8xf32>
    %8 = vector.shape_cast %7 : vector<1x8x8xf32> to vector<8x8xf32>
    %c0_9 = arith.constant 0 : index
    %c109 = arith.constant 109 : index
    %9 = vector.load %arg12[%c0_9, %c109] : memref<32x640xf32, #tpu.memory_space<vmem>>, vector<8x384xf32>
    %cst_10 = arith.constant dense<0.000000e+00> : vector<8x384xf32>
    %10 = tpu.matmul %8, %9, %cst_10 {dimension_numbers = #tpu.dot_dimension_numbers<[1], [0], [0], [1], [0, 0, 1, 1], [], []>} : vector<8x8xf32>, vector<8x384xf32>, vector<8x384xf32> -> vector<8x384xf32>
    %11 = arith.addf %6, %10 : vector<8x384xf32>
    %c1 = arith.constant 1 : index
    %c0_11 = arith.constant 0 : index
    %c0_12 = arith.constant 0 : index
    %12 = vector.load %arg3[%c1, %c0_11, %c0_12] : memref<9x8x8xf32, #tpu.memory_space<vmem>>, vector<1x8x8xf32>
    %13 = vector.shape_cast %12 : vector<1x8x8xf32> to vector<8x8xf32>
    %c0_13 = arith.constant 0 : index
    %c110 = arith.constant 110 : index
    %14 = vector.load %arg12[%c0_13, %c110] : memref<32x640xf32, #tpu.memory_space<vmem>>, vector<8x384xf32>
    %cst_14 = arith.constant dense<0.000000e+00> : vector<8x384xf32>
    %15 = tpu.matmul %13, %14, %cst_14 {dimension_numbers = #tpu.dot_dimension_numbers<[1], [0], [0], [1], [0, 0, 1, 1], [], []>} : vector<8x8xf32>, vector<8x384xf32>, vector<8x384xf32> -> vector<8x384xf32>
    %16 = arith.addf %11, %15 : vector<8x384xf32>
    %c2 = arith.constant 2 : index
    %c0_15 = arith.constant 0 : index
    %c0_16 = arith.constant 0 : index
    %17 = vector.load %arg3[%c2, %c0_15, %c0_16] : memref<9x8x8xf32, #tpu.memory_space<vmem>>, vector<1x8x8xf32>
    %18 = vector.shape_cast %17 : vector<1x8x8xf32> to vector<8x8xf32>
    %c0_17 = arith.constant 0 : index
    %c111 = arith.constant 111 : index
    %19 = vector.load %arg12[%c0_17, %c111] : memref<32x640xf32, #tpu.memory_space<vmem>>, vector<8x384xf32>
    %cst_18 = arith.constant dense<0.000000e+00> : vector<8x384xf32>
    %20 = tpu.matmul %18, %19, %cst_18 {dimension_numbers = #tpu.dot_dimension_numbers<[1], [0], [0], [1], [0, 0, 1, 1], [], []>} : vector<8x8xf32>, vector<8x384xf32>, vector<8x384xf32> -> vector<8x384xf32>
    %21 = arith.addf %16, %20 : vector<8x384xf32>
    %c3 = arith.constant 3 : index
    %c0_19 = arith.constant 0 : index
    %c0_20 = arith.constant 0 : index
    %22 = vector.load %arg3[%c3, %c0_19, %c0_20] : memref<9x8x8xf32, #tpu.memory_space<vmem>>, vector<1x8x8xf32>
    %23 = vector.shape_cast %22 : vector<1x8x8xf32> to vector<8x8xf32>
    %c0_21 = arith.constant 0 : index
    %c127 = arith.constant 127 : index
    %24 = vector.load %arg12[%c0_21, %c127] : memref<32x640xf32, #tpu.memory_space<vmem>>, vector<8x384xf32>
    %cst_22 = arith.constant dense<0.000000e+00> : vector<8x384xf32>
    %25 = tpu.matmul %23, %24, %cst_22 {dimension_numbers = #tpu.dot_dimension_numbers<[1], [0], [0], [1], [0, 0, 1, 1], [], []>} : vector<8x8xf32>, vector<8x384xf32>, vector<8x384xf32> -> vector<8x384xf32>
    %26 = arith.addf %21, %25 : vector<8x384xf32>
    %c4 = arith.constant 4 : index
    %c0_23 = arith.constant 0 : index
    %c0_24 = arith.constant 0 : index
    %27 = vector.load %arg3[%c4, %c0_23, %c0_24] : memref<9x8x8xf32, #tpu.memory_space<vmem>>, vector<1x8x8xf32>
    %28 = vector.shape_cast %27 : vector<1x8x8xf32> to vector<8x8xf32>
    %c0_25 = arith.constant 0 : index
    %c128_26 = arith.constant 128 : index
    %29 = vector.load %arg12[%c0_25, %c128_26] : memref<32x640xf32, #tpu.memory_space<vmem>>, vector<8x384xf32>
    %cst_27 = arith.constant dense<0.000000e+00> : vector<8x384xf32>
    %30 = tpu.matmul %28, %29, %cst_27 {dimension_numbers = #tpu.dot_dimension_numbers<[1], [0], [0], [1], [0, 0, 1, 1], [], []>} : vector<8x8xf32>, vector<8x384xf32>, vector<8x384xf32> -> vector<8x384xf32>
    %31 = arith.addf %26, %30 : vector<8x384xf32>
    %c5 = arith.constant 5 : index
    %c0_28 = arith.constant 0 : index
    %c0_29 = arith.constant 0 : index
    %32 = vector.load %arg3[%c5, %c0_28, %c0_29] : memref<9x8x8xf32, #tpu.memory_space<vmem>>, vector<1x8x8xf32>
    %33 = vector.shape_cast %32 : vector<1x8x8xf32> to vector<8x8xf32>
    %c0_30 = arith.constant 0 : index
    %c129 = arith.constant 129 : index
    %34 = vector.load %arg12[%c0_30, %c129] : memref<32x640xf32, #tpu.memory_space<vmem>>, vector<8x384xf32>
    %cst_31 = arith.constant dense<0.000000e+00> : vector<8x384xf32>
    %35 = tpu.matmul %33, %34, %cst_31 {dimension_numbers = #tpu.dot_dimension_numbers<[1], [0], [0], [1], [0, 0, 1, 1], [], []>} : vector<8x8xf32>, vector<8x384xf32>, vector<8x384xf32> -> vector<8x384xf32>
    %36 = arith.addf %31, %35 : vector<8x384xf32>
    %c6 = arith.constant 6 : index
    %c0_32 = arith.constant 0 : index
    %c0_33 = arith.constant 0 : index
    %37 = vector.load %arg3[%c6, %c0_32, %c0_33] : memref<9x8x8xf32, #tpu.memory_space<vmem>>, vector<1x8x8xf32>
    %38 = vector.shape_cast %37 : vector<1x8x8xf32> to vector<8x8xf32>
    %c0_34 = arith.constant 0 : index
    %c145 = arith.constant 145 : index
    %39 = vector.load %arg12[%c0_34, %c145] : memref<32x640xf32, #tpu.memory_space<vmem>>, vector<8x384xf32>
    %cst_35 = arith.constant dense<0.000000e+00> : vector<8x384xf32>
    %40 = tpu.matmul %38, %39, %cst_35 {dimension_numbers = #tpu.dot_dimension_numbers<[1], [0], [0], [1], [0, 0, 1, 1], [], []>} : vector<8x8xf32>, vector<8x384xf32>, vector<8x384xf32> -> vector<8x384xf32>
    %41 = arith.addf %36, %40 : vector<8x384xf32>
    %c7 = arith.constant 7 : index
    %c0_36 = arith.constant 0 : index
    %c0_37 = arith.constant 0 : index
    %42 = vector.load %arg3[%c7, %c0_36, %c0_37] : memref<9x8x8xf32, #tpu.memory_space<vmem>>, vector<1x8x8xf32>
    %43 = vector.shape_cast %42 : vector<1x8x8xf32> to vector<8x8xf32>
    %c0_38 = arith.constant 0 : index
    %c146 = arith.constant 146 : index
    %44 = vector.load %arg12[%c0_38, %c146] : memref<32x640xf32, #tpu.memory_space<vmem>>, vector<8x384xf32>
    %cst_39 = arith.constant dense<0.000000e+00> : vector<8x384xf32>
    %45 = tpu.matmul %43, %44, %cst_39 {dimension_numbers = #tpu.dot_dimension_numbers<[1], [0], [0], [1], [0, 0, 1, 1], [], []>} : vector<8x8xf32>, vector<8x384xf32>, vector<8x384xf32> -> vector<8x384xf32>
    %46 = arith.addf %41, %45 : vector<8x384xf32>
    %c8 = arith.constant 8 : index
    %c0_40 = arith.constant 0 : index
    %c0_41 = arith.constant 0 : index
    %47 = vector.load %arg3[%c8, %c0_40, %c0_41] : memref<9x8x8xf32, #tpu.memory_space<vmem>>, vector<1x8x8xf32>
    %48 = vector.shape_cast %47 : vector<1x8x8xf32> to vector<8x8xf32>
    %c0_42 = arith.constant 0 : index
    %c147 = arith.constant 147 : index
    %49 = vector.load %arg12[%c0_42, %c147] : memref<32x640xf32, #tpu.memory_space<vmem>>, vector<8x384xf32>
    %cst_43 = arith.constant dense<0.000000e+00> : vector<8x384xf32>
    %50 = tpu.matmul %48, %49, %cst_43 {dimension_numbers = #tpu.dot_dimension_numbers<[1], [0], [0], [1], [0, 0, 1, 1], [], []>} : vector<8x8xf32>, vector<8x384xf32>, vector<8x384xf32> -> vector<8x384xf32>
    %51 = arith.addf %46, %50 : vector<8x384xf32>
    %c0_44 = arith.constant 0 : index
    %c0_45 = arith.constant 0 : index
    %52 = vector.load %arg4[%c0_44, %c0_45] : memref<8x1xf32, #tpu.memory_space<vmem>>, vector<8x1xf32>
    %53 = vector.broadcast %52 : vector<8x1xf32> to vector<8x384xf32>
    %54 = arith.addf %51, %53 : vector<8x384xf32>
    %cst_46 = arith.constant 0.000000e+00 : f32
    %55 = vector.broadcast %cst_46 : f32 to vector<8x384xf32>
    %56 = arith.cmpf oge, %54, %55 : vector<8x384xf32>
    %cst_47 = arith.constant 1.000000e-01 : f32
    %57 = vector.broadcast %cst_47 : f32 to vector<8x384xf32>
    %58 = arith.mulf %57, %54 : vector<8x384xf32>
    %59 = arith.select %56, %54, %58 : vector<8x384xi1>, vector<8x384xf32>
    %cst_48 = arith.constant 0.000000e+00 : f32
    %60 = vector.shape_cast %5 : vector<1x384xi1> to vector<1x384xi1>
    %61 = vector.broadcast %60 : vector<1x384xi1> to vector<8x384xi1>
    %62 = vector.broadcast %cst_48 : f32 to vector<8x384xf32>
    %63 = arith.select %61, %59, %62 : vector<8x384xi1>, vector<8x384xf32>
    %c8_49 = arith.constant 8 : index
    %c128_50 = arith.constant 128 : index
    %64 = vector.load %arg12[%c8_49, %c128_50] : memref<32x640xf32, #tpu.memory_space<vmem>>, vector<8x384xf32>
    tpu.vector_store %arg12[%c8_49, %c128_50], %63 {strides = array<i32>} : memref<32x640xf32, #tpu.memory_space<vmem>>, vector<8x384xf32>,
    %cst_51 = arith.constant 0.000000e+00 : f32
    %65 = vector.broadcast %cst_51 : f32 to vector<8x384xf32>
    %c0_52 = arith.constant 0 : index
    %c0_53 = arith.constant 0 : index
    %c0_54 = arith.constant 0 : index
    %66 = vector.load %arg5[%c0_52, %c0_53, %c0_54] : memref<9x8x16xf32, #tpu.memory_space<vmem>>, vector<1x8x16xf32>
    %67 = vector.shape_cast %66 : vector<1x8x16xf32> to vector<8x16xf32>
    %c0_55 = arith.constant 0 : index
    %c109_56 = arith.constant 109 : index
    %68 = vector.load %arg12[%c0_55, %c109_56] : memref<32x640xf32, #tpu.memory_space<vmem>>, vector<16x384xf32>
    %cst_57 = arith.constant dense<0.000000e+00> : vector<8x384xf32>
    %69 = tpu.matmul %67, %68, %cst_57 {dimension_numbers = #tpu.dot_dimension_numbers<[1], [0], [0], [1], [0, 0, 1, 1], [], []>} : vector<8x16xf32>, vector<16x384xf32>, vector<8x384xf32> -> vector<8x384xf32>
    %70 = arith.addf %65, %69 : vector<8x384xf32>
    %c1_58 = arith.constant 1 : index
    %c0_59 = arith.constant 0 : index
    %c0_60 = arith.constant 0 : index
    %71 = vector.load %arg5[%c1_58, %c0_59, %c0_60] : memref<9x8x16xf32, #tpu.memory_space<vmem>>, vector<1x8x16xf32>
    %72 = vector.shape_cast %71 : vector<1x8x16xf32> to vector<8x16xf32>
    %c0_61 = arith.constant 0 : index
    %c110_62 = arith.constant 110 : index
    %73 = vector.load %arg12[%c0_61, %c110_62] : memref<32x640xf32, #tpu.memory_space<vmem>>, vector<16x384xf32>
    %cst_63 = arith.constant dense<0.000000e+00> : vector<8x384xf32>
    %74 = tpu.matmul %72, %73, %cst_63 {dimension_numbers = #tpu.dot_dimension_numbers<[1], [0], [0], [1], [0, 0, 1, 1], [], []>} : vector<8x16xf32>, vector<16x384xf32>, vector<8x384xf32> -> vector<8x384xf32>
    %75 = arith.addf %70, %74 : vector<8x384xf32>
    %c2_64 = arith.constant 2 : index
    %c0_65 = arith.constant 0 : index
    %c0_66 = arith.constant 0 : index
    %76 = vector.load %arg5[%c2_64, %c0_65, %c0_66] : memref<9x8x16xf32, #tpu.memory_space<vmem>>, vector<1x8x16xf32>
    %77 = vector.shape_cast %76 : vector<1x8x16xf32> to vector<8x16xf32>
    %c0_67 = arith.constant 0 : index
    %c111_68 = arith.constant 111 : index
    %78 = vector.load %arg12[%c0_67, %c111_68] : memref<32x640xf32, #tpu.memory_space<vmem>>, vector<16x384xf32>
    %cst_69 = arith.constant dense<0.000000e+00> : vector<8x384xf32>
    %79 = tpu.matmul %77, %78, %cst_69 {dimension_numbers = #tpu.dot_dimension_numbers<[1], [0], [0], [1], [0, 0, 1, 1], [], []>} : vector<8x16xf32>, vector<16x384xf32>, vector<8x384xf32> -> vector<8x384xf32>
    %80 = arith.addf %75, %79 : vector<8x384xf32>
    %c3_70 = arith.constant 3 : index
    %c0_71 = arith.constant 0 : index
    %c0_72 = arith.constant 0 : index
    %81 = vector.load %arg5[%c3_70, %c0_71, %c0_72] : memref<9x8x16xf32, #tpu.memory_space<vmem>>, vector<1x8x16xf32>
    %82 = vector.shape_cast %81 : vector<1x8x16xf32> to vector<8x16xf32>
    %c0_73 = arith.constant 0 : index
    %c127_74 = arith.constant 127 : index
    %83 = vector.load %arg12[%c0_73, %c127_74] : memref<32x640xf32, #tpu.memory_space<vmem>>, vector<16x384xf32>
    %cst_75 = arith.constant dense<0.000000e+00> : vector<8x384xf32>
    %84 = tpu.matmul %82, %83, %cst_75 {dimension_numbers = #tpu.dot_dimension_numbers<[1], [0], [0], [1], [0, 0, 1, 1], [], []>} : vector<8x16xf32>, vector<16x384xf32>, vector<8x384xf32> -> vector<8x384xf32>
    %85 = arith.addf %80, %84 : vector<8x384xf32>
    %c4_76 = arith.constant 4 : index
    %c0_77 = arith.constant 0 : index
    %c0_78 = arith.constant 0 : index
    %86 = vector.load %arg5[%c4_76, %c0_77, %c0_78] : memref<9x8x16xf32, #tpu.memory_space<vmem>>, vector<1x8x16xf32>
    %87 = vector.shape_cast %86 : vector<1x8x16xf32> to vector<8x16xf32>
    %c0_79 = arith.constant 0 : index
    %c128_80 = arith.constant 128 : index
    %88 = vector.load %arg12[%c0_79, %c128_80] : memref<32x640xf32, #tpu.memory_space<vmem>>, vector<16x384xf32>
    %cst_81 = arith.constant dense<0.000000e+00> : vector<8x384xf32>
    %89 = tpu.matmul %87, %88, %cst_81 {dimension_numbers = #tpu.dot_dimension_numbers<[1], [0], [0], [1], [0, 0, 1, 1], [], []>} : vector<8x16xf32>, vector<16x384xf32>, vector<8x384xf32> -> vector<8x384xf32>
    %90 = arith.addf %85, %89 : vector<8x384xf32>
    %c5_82 = arith.constant 5 : index
    %c0_83 = arith.constant 0 : index
    %c0_84 = arith.constant 0 : index
    %91 = vector.load %arg5[%c5_82, %c0_83, %c0_84] : memref<9x8x16xf32, #tpu.memory_space<vmem>>, vector<1x8x16xf32>
    %92 = vector.shape_cast %91 : vector<1x8x16xf32> to vector<8x16xf32>
    %c0_85 = arith.constant 0 : index
    %c129_86 = arith.constant 129 : index
    %93 = vector.load %arg12[%c0_85, %c129_86] : memref<32x640xf32, #tpu.memory_space<vmem>>, vector<16x384xf32>
    %cst_87 = arith.constant dense<0.000000e+00> : vector<8x384xf32>
    %94 = tpu.matmul %92, %93, %cst_87 {dimension_numbers = #tpu.dot_dimension_numbers<[1], [0], [0], [1], [0, 0, 1, 1], [], []>} : vector<8x16xf32>, vector<16x384xf32>, vector<8x384xf32> -> vector<8x384xf32>
    %95 = arith.addf %90, %94 : vector<8x384xf32>
    %c6_88 = arith.constant 6 : index
    %c0_89 = arith.constant 0 : index
    %c0_90 = arith.constant 0 : index
    %96 = vector.load %arg5[%c6_88, %c0_89, %c0_90] : memref<9x8x16xf32, #tpu.memory_space<vmem>>, vector<1x8x16xf32>
    %97 = vector.shape_cast %96 : vector<1x8x16xf32> to vector<8x16xf32>
    %c0_91 = arith.constant 0 : index
    %c145_92 = arith.constant 145 : index
    %98 = vector.load %arg12[%c0_91, %c145_92] : memref<32x640xf32, #tpu.memory_space<vmem>>, vector<16x384xf32>
    %cst_93 = arith.constant dense<0.000000e+00> : vector<8x384xf32>
    %99 = tpu.matmul %97, %98, %cst_93 {dimension_numbers = #tpu.dot_dimension_numbers<[1], [0], [0], [1], [0, 0, 1, 1], [], []>} : vector<8x16xf32>, vector<16x384xf32>, vector<8x384xf32> -> vector<8x384xf32>
    %100 = arith.addf %95, %99 : vector<8x384xf32>
    %c7_94 = arith.constant 7 : index
    %c0_95 = arith.constant 0 : index
    %c0_96 = arith.constant 0 : index
    %101 = vector.load %arg5[%c7_94, %c0_95, %c0_96] : memref<9x8x16xf32, #tpu.memory_space<vmem>>, vector<1x8x16xf32>
    %102 = vector.shape_cast %101 : vector<1x8x16xf32> to vector<8x16xf32>
    %c0_97 = arith.constant 0 : index
    %c146_98 = arith.constant 146 : index
    %103 = vector.load %arg12[%c0_97, %c146_98] : memref<32x640xf32, #tpu.memory_space<vmem>>, vector<16x384xf32>
    %cst_99 = arith.constant dense<0.000000e+00> : vector<8x384xf32>
    %104 = tpu.matmul %102, %103, %cst_99 {dimension_numbers = #tpu.dot_dimension_numbers<[1], [0], [0], [1], [0, 0, 1, 1], [], []>} : vector<8x16xf32>, vector<16x384xf32>, vector<8x384xf32> -> vector<8x384xf32>
    %105 = arith.addf %100, %104 : vector<8x384xf32>
    %c8_100 = arith.constant 8 : index
    %c0_101 = arith.constant 0 : index
    %c0_102 = arith.constant 0 : index
    %106 = vector.load %arg5[%c8_100, %c0_101, %c0_102] : memref<9x8x16xf32, #tpu.memory_space<vmem>>, vector<1x8x16xf32>
    %107 = vector.shape_cast %106 : vector<1x8x16xf32> to vector<8x16xf32>
    %c0_103 = arith.constant 0 : index
    %c147_104 = arith.constant 147 : index
    %108 = vector.load %arg12[%c0_103, %c147_104] : memref<32x640xf32, #tpu.memory_space<vmem>>, vector<16x384xf32>
    %cst_105 = arith.constant dense<0.000000e+00> : vector<8x384xf32>
    %109 = tpu.matmul %107, %108, %cst_105 {dimension_numbers = #tpu.dot_dimension_numbers<[1], [0], [0], [1], [0, 0, 1, 1], [], []>} : vector<8x16xf32>, vector<16x384xf32>, vector<8x384xf32> -> vector<8x384xf32>
    %110 = arith.addf %105, %109 : vector<8x384xf32>
    %c0_106 = arith.constant 0 : index
    %c0_107 = arith.constant 0 : index
    %111 = vector.load %arg6[%c0_106, %c0_107] : memref<8x1xf32, #tpu.memory_space<vmem>>, vector<8x1xf32>
    %112 = vector.broadcast %111 : vector<8x1xf32> to vector<8x384xf32>
    %113 = arith.addf %110, %112 : vector<8x384xf32>
    %cst_108 = arith.constant 0.000000e+00 : f32
    %114 = vector.broadcast %cst_108 : f32 to vector<8x384xf32>
    %115 = arith.cmpf oge, %113, %114 : vector<8x384xf32>
    %cst_109 = arith.constant 1.000000e-01 : f32
    %116 = vector.broadcast %cst_109 : f32 to vector<8x384xf32>
    %117 = arith.mulf %116, %113 : vector<8x384xf32>
    %118 = arith.select %115, %113, %117 : vector<8x384xi1>, vector<8x384xf32>
    %cst_110 = arith.constant 0.000000e+00 : f32
    %119 = vector.shape_cast %5 : vector<1x384xi1> to vector<1x384xi1>
    %120 = vector.broadcast %119 : vector<1x384xi1> to vector<8x384xi1>
    %121 = vector.broadcast %cst_110 : f32 to vector<8x384xf32>
    %122 = arith.select %120, %118, %121 : vector<8x384xi1>, vector<8x384xf32>
    %c16 = arith.constant 16 : index
    %c128_111 = arith.constant 128 : index
    %123 = vector.load %arg12[%c16, %c128_111] : memref<32x640xf32, #tpu.memory_space<vmem>>, vector<8x384xf32>
    tpu.vector_store %arg12[%c16, %c128_111], %122 {strides = array<i32>} : memref<32x640xf32, #tpu.memory_space<vmem>>, vector<8x384xf32>,
    %cst_112 = arith.constant 0.000000e+00 : f32
    %124 = vector.broadcast %cst_112 : f32 to vector<8x384xf32>
    %c0_113 = arith.constant 0 : index
    %c0_114 = arith.constant 0 : index
    %c0_115 = arith.constant 0 : index
    %125 = vector.load %arg7[%c0_113, %c0_114, %c0_115] : memref<9x8x24xf32, #tpu.memory_space<vmem>>, vector<1x8x24xf32>
    %126 = vector.shape_cast %125 : vector<1x8x24xf32> to vector<8x24xf32>
    %c0_116 = arith.constant 0 : index
    %c109_117 = arith.constant 109 : index
    %127 = vector.load %arg12[%c0_116, %c109_117] : memref<32x640xf32, #tpu.memory_space<vmem>>, vector<24x384xf32>
    %cst_118 = arith.constant dense<0.000000e+00> : vector<8x384xf32>
    %128 = tpu.matmul %126, %127, %cst_118 {dimension_numbers = #tpu.dot_dimension_numbers<[1], [0], [0], [1], [0, 0, 1, 1], [], []>} : vector<8x24xf32>, vector<24x384xf32>, vector<8x384xf32> -> vector<8x384xf32>
    %129 = arith.addf %124, %128 : vector<8x384xf32>
    %c1_119 = arith.constant 1 : index
    %c0_120 = arith.constant 0 : index
    %c0_121 = arith.constant 0 : index
    %130 = vector.load %arg7[%c1_119, %c0_120, %c0_121] : memref<9x8x24xf32, #tpu.memory_space<vmem>>, vector<1x8x24xf32>
    %131 = vector.shape_cast %130 : vector<1x8x24xf32> to vector<8x24xf32>
    %c0_122 = arith.constant 0 : index
    %c110_123 = arith.constant 110 : index
    %132 = vector.load %arg12[%c0_122, %c110_123] : memref<32x640xf32, #tpu.memory_space<vmem>>, vector<24x384xf32>
    %cst_124 = arith.constant dense<0.000000e+00> : vector<8x384xf32>
    %133 = tpu.matmul %131, %132, %cst_124 {dimension_numbers = #tpu.dot_dimension_numbers<[1], [0], [0], [1], [0, 0, 1, 1], [], []>} : vector<8x24xf32>, vector<24x384xf32>, vector<8x384xf32> -> vector<8x384xf32>
    %134 = arith.addf %129, %133 : vector<8x384xf32>
    %c2_125 = arith.constant 2 : index
    %c0_126 = arith.constant 0 : index
    %c0_127 = arith.constant 0 : index
    %135 = vector.load %arg7[%c2_125, %c0_126, %c0_127] : memref<9x8x24xf32, #tpu.memory_space<vmem>>, vector<1x8x24xf32>
    %136 = vector.shape_cast %135 : vector<1x8x24xf32> to vector<8x24xf32>
    %c0_128 = arith.constant 0 : index
    %c111_129 = arith.constant 111 : index
    %137 = vector.load %arg12[%c0_128, %c111_129] : memref<32x640xf32, #tpu.memory_space<vmem>>, vector<24x384xf32>
    %cst_130 = arith.constant dense<0.000000e+00> : vector<8x384xf32>
    %138 = tpu.matmul %136, %137, %cst_130 {dimension_numbers = #tpu.dot_dimension_numbers<[1], [0], [0], [1], [0, 0, 1, 1], [], []>} : vector<8x24xf32>, vector<24x384xf32>, vector<8x384xf32> -> vector<8x384xf32>
    %139 = arith.addf %134, %138 : vector<8x384xf32>
    %c3_131 = arith.constant 3 : index
    %c0_132 = arith.constant 0 : index
    %c0_133 = arith.constant 0 : index
    %140 = vector.load %arg7[%c3_131, %c0_132, %c0_133] : memref<9x8x24xf32, #tpu.memory_space<vmem>>, vector<1x8x24xf32>
    %141 = vector.shape_cast %140 : vector<1x8x24xf32> to vector<8x24xf32>
    %c0_134 = arith.constant 0 : index
    %c127_135 = arith.constant 127 : index
    %142 = vector.load %arg12[%c0_134, %c127_135] : memref<32x640xf32, #tpu.memory_space<vmem>>, vector<24x384xf32>
    %cst_136 = arith.constant dense<0.000000e+00> : vector<8x384xf32>
    %143 = tpu.matmul %141, %142, %cst_136 {dimension_numbers = #tpu.dot_dimension_numbers<[1], [0], [0], [1], [0, 0, 1, 1], [], []>} : vector<8x24xf32>, vector<24x384xf32>, vector<8x384xf32> -> vector<8x384xf32>
    %144 = arith.addf %139, %143 : vector<8x384xf32>
    %c4_137 = arith.constant 4 : index
    %c0_138 = arith.constant 0 : index
    %c0_139 = arith.constant 0 : index
    %145 = vector.load %arg7[%c4_137, %c0_138, %c0_139] : memref<9x8x24xf32, #tpu.memory_space<vmem>>, vector<1x8x24xf32>
    %146 = vector.shape_cast %145 : vector<1x8x24xf32> to vector<8x24xf32>
    %c0_140 = arith.constant 0 : index
    %c128_141 = arith.constant 128 : index
    %147 = vector.load %arg12[%c0_140, %c128_141] : memref<32x640xf32, #tpu.memory_space<vmem>>, vector<24x384xf32>
    %cst_142 = arith.constant dense<0.000000e+00> : vector<8x384xf32>
    %148 = tpu.matmul %146, %147, %cst_142 {dimension_numbers = #tpu.dot_dimension_numbers<[1], [0], [0], [1], [0, 0, 1, 1], [], []>} : vector<8x24xf32>, vector<24x384xf32>, vector<8x384xf32> -> vector<8x384xf32>
    %149 = arith.addf %144, %148 : vector<8x384xf32>
    %c5_143 = arith.constant 5 : index
    %c0_144 = arith.constant 0 : index
    %c0_145 = arith.constant 0 : index
    %150 = vector.load %arg7[%c5_143, %c0_144, %c0_145] : memref<9x8x24xf32, #tpu.memory_space<vmem>>, vector<1x8x24xf32>
    %151 = vector.shape_cast %150 : vector<1x8x24xf32> to vector<8x24xf32>
    %c0_146 = arith.constant 0 : index
    %c129_147 = arith.constant 129 : index
    %152 = vector.load %arg12[%c0_146, %c129_147] : memref<32x640xf32, #tpu.memory_space<vmem>>, vector<24x384xf32>
    %cst_148 = arith.constant dense<0.000000e+00> : vector<8x384xf32>
    %153 = tpu.matmul %151, %152, %cst_148 {dimension_numbers = #tpu.dot_dimension_numbers<[1], [0], [0], [1], [0, 0, 1, 1], [], []>} : vector<8x24xf32>, vector<24x384xf32>, vector<8x384xf32> -> vector<8x384xf32>
    %154 = arith.addf %149, %153 : vector<8x384xf32>
    %c6_149 = arith.constant 6 : index
    %c0_150 = arith.constant 0 : index
    %c0_151 = arith.constant 0 : index
    %155 = vector.load %arg7[%c6_149, %c0_150, %c0_151] : memref<9x8x24xf32, #tpu.memory_space<vmem>>, vector<1x8x24xf32>
    %156 = vector.shape_cast %155 : vector<1x8x24xf32> to vector<8x24xf32>
    %c0_152 = arith.constant 0 : index
    %c145_153 = arith.constant 145 : index
    %157 = vector.load %arg12[%c0_152, %c145_153] : memref<32x640xf32, #tpu.memory_space<vmem>>, vector<24x384xf32>
    %cst_154 = arith.constant dense<0.000000e+00> : vector<8x384xf32>
    %158 = tpu.matmul %156, %157, %cst_154 {dimension_numbers = #tpu.dot_dimension_numbers<[1], [0], [0], [1], [0, 0, 1, 1], [], []>} : vector<8x24xf32>, vector<24x384xf32>, vector<8x384xf32> -> vector<8x384xf32>
    %159 = arith.addf %154, %158 : vector<8x384xf32>
    %c7_155 = arith.constant 7 : index
    %c0_156 = arith.constant 0 : index
    %c0_157 = arith.constant 0 : index
    %160 = vector.load %arg7[%c7_155, %c0_156, %c0_157] : memref<9x8x24xf32, #tpu.memory_space<vmem>>, vector<1x8x24xf32>
    %161 = vector.shape_cast %160 : vector<1x8x24xf32> to vector<8x24xf32>
    %c0_158 = arith.constant 0 : index
    %c146_159 = arith.constant 146 : index
    %162 = vector.load %arg12[%c0_158, %c146_159] : memref<32x640xf32, #tpu.memory_space<vmem>>, vector<24x384xf32>
    %cst_160 = arith.constant dense<0.000000e+00> : vector<8x384xf32>
    %163 = tpu.matmul %161, %162, %cst_160 {dimension_numbers = #tpu.dot_dimension_numbers<[1], [0], [0], [1], [0, 0, 1, 1], [], []>} : vector<8x24xf32>, vector<24x384xf32>, vector<8x384xf32> -> vector<8x384xf32>
    %164 = arith.addf %159, %163 : vector<8x384xf32>
    %c8_161 = arith.constant 8 : index
    %c0_162 = arith.constant 0 : index
    %c0_163 = arith.constant 0 : index
    %165 = vector.load %arg7[%c8_161, %c0_162, %c0_163] : memref<9x8x24xf32, #tpu.memory_space<vmem>>, vector<1x8x24xf32>
    %166 = vector.shape_cast %165 : vector<1x8x24xf32> to vector<8x24xf32>
    %c0_164 = arith.constant 0 : index
    %c147_165 = arith.constant 147 : index
    %167 = vector.load %arg12[%c0_164, %c147_165] : memref<32x640xf32, #tpu.memory_space<vmem>>, vector<24x384xf32>
    %cst_166 = arith.constant dense<0.000000e+00> : vector<8x384xf32>
    %168 = tpu.matmul %166, %167, %cst_166 {dimension_numbers = #tpu.dot_dimension_numbers<[1], [0], [0], [1], [0, 0, 1, 1], [], []>} : vector<8x24xf32>, vector<24x384xf32>, vector<8x384xf32> -> vector<8x384xf32>
    %169 = arith.addf %164, %168 : vector<8x384xf32>
    %c0_167 = arith.constant 0 : index
    %c0_168 = arith.constant 0 : index
    %170 = vector.load %arg8[%c0_167, %c0_168] : memref<8x1xf32, #tpu.memory_space<vmem>>, vector<8x1xf32>
    %171 = vector.broadcast %170 : vector<8x1xf32> to vector<8x384xf32>
    %172 = arith.addf %169, %171 : vector<8x384xf32>
    %cst_169 = arith.constant 0.000000e+00 : f32
    %173 = vector.broadcast %cst_169 : f32 to vector<8x384xf32>
    %174 = arith.cmpf oge, %172, %173 : vector<8x384xf32>
    %cst_170 = arith.constant 1.000000e-01 : f32
    %175 = vector.broadcast %cst_170 : f32 to vector<8x384xf32>
    %176 = arith.mulf %175, %172 : vector<8x384xf32>
    %177 = arith.select %174, %172, %176 : vector<8x384xi1>, vector<8x384xf32>
    %cst_171 = arith.constant 0.000000e+00 : f32
    %178 = vector.shape_cast %5 : vector<1x384xi1> to vector<1x384xi1>
    %179 = vector.broadcast %178 : vector<1x384xi1> to vector<8x384xi1>
    %180 = vector.broadcast %cst_171 : f32 to vector<8x384xf32>
    %181 = arith.select %179, %177, %180 : vector<8x384xi1>, vector<8x384xf32>
    %c24 = arith.constant 24 : index
    %c128_172 = arith.constant 128 : index
    %182 = vector.load %arg12[%c24, %c128_172] : memref<32x640xf32, #tpu.memory_space<vmem>>, vector<8x384xf32>
    tpu.vector_store %arg12[%c24, %c128_172], %181 {strides = array<i32>} : memref<32x640xf32, #tpu.memory_space<vmem>>, vector<8x384xf32>,
    %c0_173 = arith.constant 0 : index
    %c128_174 = arith.constant 128 : index
    %183 = vector.load %arg12[%c0_173, %c128_174] : memref<32x640xf32, #tpu.memory_space<vmem>>, vector<32x384xf32>
    %c0_175 = arith.constant 0 : index
    %c0_176 = arith.constant 0 : index
    %184 = vector.load %arg9[%c0_175, %c0_176] : memref<8x32xf32, #tpu.memory_space<vmem>>, vector<8x32xf32>
    %cst_177 = arith.constant dense<0.000000e+00> : vector<8x384xf32>
    %185 = tpu.matmul %184, %183, %cst_177 {dimension_numbers = #tpu.dot_dimension_numbers<[1], [0], [0], [1], [0, 0, 1, 1], [], []>} : vector<8x32xf32>, vector<32x384xf32>, vector<8x384xf32> -> vector<8x384xf32>
    %c0_178 = arith.constant 0 : index
    %c0_179 = arith.constant 0 : index
    %186 = vector.load %arg10[%c0_178, %c0_179] : memref<8x1xf32, #tpu.memory_space<vmem>>, vector<8x1xf32>
    %187 = vector.broadcast %186 : vector<8x1xf32> to vector<8x384xf32>
    %188 = arith.addf %185, %187 : vector<8x384xf32>
    %189 = vector.extract_strided_slice %183 {offsets = [0, 0], sizes = [8, 384], strides = [1, 1]} : vector<32x384xf32> to vector<8x384xf32>
    %190 = arith.addf %188, %189 : vector<8x384xf32>
    %c0_180 = arith.constant 0 : index
    %c0_181 = arith.constant 0 : index
    %c0_182 = arith.constant 0 : index
    %191 = vector.load %arg11[%c0_180, %c0_181, %c0_182] : memref<1x8x384xf32, #tpu.memory_space<vmem>>, vector<1x8x384xf32>
    %192 = vector.shape_cast %191 : vector<1x8x384xf32> to vector<8x384xf32>
    %193 = vector.shape_cast %190 : vector<8x384xf32> to vector<1x8x384xf32>
    tpu.vector_store %arg11[%c0_180, %c0_181, %c0_182], %193 {strides = array<i32>} : memref<1x8x384xf32, #tpu.memory_space<vmem>>, vector<1x8x384xf32>,
    return
  }
  func.func @transform_0(%arg0: i32) -> (i32, i32, i32) {
    %c0_i32 = arith.constant 0 : i32
    %c0_i32_0 = arith.constant 0 : i32
    %c0_i32_1 = arith.constant 0 : i32
    return %arg0, %c0_i32, %c0_i32_0 : i32, i32, i32
  }
  func.func @transform_1(%arg0: i32) -> (i32, i32) {
    %c0_i32 = arith.constant 0 : i32
    %c0_i32_0 = arith.constant 0 : i32
    %c0_i32_1 = arith.constant 0 : i32
    return %c0_i32, %c0_i32_0 : i32, i32
  }
  func.func @transform_2(%arg0: i32) -> (i32, i32, i32) {
    %c0_i32 = arith.constant 0 : i32
    %c0_i32_0 = arith.constant 0 : i32
    %c0_i32_1 = arith.constant 0 : i32
    %c0_i32_2 = arith.constant 0 : i32
    return %c0_i32, %c0_i32_0, %c0_i32_1 : i32, i32, i32
  }
  func.func @transform_3(%arg0: i32) -> (i32, i32) {
    %c0_i32 = arith.constant 0 : i32
    %c0_i32_0 = arith.constant 0 : i32
    %c0_i32_1 = arith.constant 0 : i32
    return %c0_i32, %c0_i32_0 : i32, i32
  }
  func.func @transform_4(%arg0: i32) -> (i32, i32, i32) {
    %c0_i32 = arith.constant 0 : i32
    %c0_i32_0 = arith.constant 0 : i32
    %c0_i32_1 = arith.constant 0 : i32
    %c0_i32_2 = arith.constant 0 : i32
    return %c0_i32, %c0_i32_0, %c0_i32_1 : i32, i32, i32
  }
  func.func @transform_5(%arg0: i32) -> (i32, i32) {
    %c0_i32 = arith.constant 0 : i32
    %c0_i32_0 = arith.constant 0 : i32
    %c0_i32_1 = arith.constant 0 : i32
    return %c0_i32, %c0_i32_0 : i32, i32
  }
  func.func @transform_6(%arg0: i32) -> (i32, i32, i32) {
    %c0_i32 = arith.constant 0 : i32
    %c0_i32_0 = arith.constant 0 : i32
    %c0_i32_1 = arith.constant 0 : i32
    %c0_i32_2 = arith.constant 0 : i32
    return %c0_i32, %c0_i32_0, %c0_i32_1 : i32, i32, i32
  }
  func.func @transform_7(%arg0: i32) -> (i32, i32) {
    %c0_i32 = arith.constant 0 : i32
    %c0_i32_0 = arith.constant 0 : i32
    %c0_i32_1 = arith.constant 0 : i32
    return %c0_i32, %c0_i32_0 : i32, i32
  }
  func.func @transform_8(%arg0: i32) -> (i32, i32) {
    %c0_i32 = arith.constant 0 : i32
    %c0_i32_0 = arith.constant 0 : i32
    %c0_i32_1 = arith.constant 0 : i32
    return %c0_i32, %c0_i32_0 : i32, i32
  }
  func.func @transform_9(%arg0: i32) -> (i32, i32) {
    %c0_i32 = arith.constant 0 : i32
    %c0_i32_0 = arith.constant 0 : i32
    %c0_i32_1 = arith.constant 0 : i32
    return %c0_i32, %c0_i32_0 : i32, i32
  }
  func.func @transform_10(%arg0: i32) -> (i32, i32, i32) {
    %c0_i32 = arith.constant 0 : i32
    %c0_i32_0 = arith.constant 0 : i32
    %c0_i32_1 = arith.constant 0 : i32
    return %arg0, %c0_i32, %c0_i32_0 : i32, i32, i32
  }
}

</mosaic_0001>

<llo_original>
// kernel: tpu_custom_call.1
$region0: #{tpu_custom_call.1}
  #allocation0 [shape = 'u32[]', space=smem, size = 0x4, offset = 0x4, fixed_abs, tag = 'smem constant byte address 0x4 - core index']
  #allocation1 [shape = 'u32[72,128]{1,0:T(1,128)}', space=vmem, size = 0x9000, scoped, tag = 'internal scratch']
  #allocation2 [shape = 'f32[32,640]{1,0:T(8,128)}', space=vmem, size = 0x14000, scoped, tag = 'scratch operand']
  %s0 = inlined_call_operand.hbm [shape: f32[2,8,384], index: 0, kind: input, shape index: {}]
  %s1 = inlined_call_operand.vmem [shape: f32[1,384], index: 1, kind: input, shape index: {}]
  %s2 = inlined_call_operand.vmem [shape: f32[9,8,8], index: 2, kind: input, shape index: {}]
  %s3 = inlined_call_operand.vmem [shape: f32[8,1], index: 3, kind: input, shape index: {}]
  %s4 = inlined_call_operand.vmem [shape: f32[9,8,16], index: 4, kind: input, shape index: {}]
  %s5 = inlined_call_operand.vmem [shape: f32[8,1], index: 5, kind: input, shape index: {}]
  %s6 = inlined_call_operand.vmem [shape: f32[9,8,24], index: 6, kind: input, shape index: {}]
  %s7 = inlined_call_operand.vmem [shape: f32[8,1], index: 7, kind: input, shape index: {}]
  %s8 = inlined_call_operand.vmem [shape: f32[8,32], index: 8, kind: input, shape index: {}]
  %s9 = inlined_call_operand.vmem [shape: f32[8,1], index: 9, kind: input, shape index: {}]
  %s10 = inlined_call_operand.hbm [shape: f32[2,8,384], index: 10, kind: output, shape index: {}]
  %s11 = sld [smem:[#allocation0]]
  $region77: #{tpu_custom_call.1} parent=0
    _
  %s13 = ssub.s32 1, %s11
  %s14 = scalar_select 0, %s13, %s11
  $region1: #{tpu_custom_call.1} parent=0
    #allocation3 [shape = 'u8[24576]{0}', space=vmem, size = 0x6000, scoped, tag = 'input window, operand 0']
    #allocation4 [shape = 's32[2]{0}', space=sflag, size = 0x8, scoped, tag = 'scoped memory for tpu_custom_call.1']
    #allocation5 [shape = 's32[2]{0}', space=sflag, size = 0x8, scoped, tag = 'scoped memory for tpu_custom_call.1']
    #allocation6 [shape = 'u8[24576]{0}', space=vmem, size = 0x6000, scoped, tag = 'output window, operand 0']
    %15 = vsyncpa [#allocation4], 0
    %s16 = scalar_lea.sflag [#allocation4], 1
    %17 = vsyncpa %s16, 0
    %18 = vsyncpa [#allocation5], 0
    %s19 = scalar_lea.sflag [#allocation5], 1
    %20 = vsyncpa %s19, 0
    loop: start=0, step=1, limit=4
    $region2: #{tpu_custom_call.1} parent=1 // loop_pre_header
      _
    $region3: #{tpu_custom_call.1} parent=1 // loop_header
      %s22 = sphi 0, %s26
      %p23 = scmp.ge.s32.totalorder %s22, 4
      %s32 = sphi 0, %s34
      %s35 = sphi 0, %s32
      %s36 = sphi 0, %s35
      %s52 = sphi 0, %s36
      %s56 = sphi 0, %s56
      %s58 = sphi 0, %s56
      %s59 = sphi 0, %s58
      %s73 = sphi 0, %s59
      %s77 = sphi 0, %s77
      %s79 = sphi 0, %s77
      %s80 = sphi 0, %s79
      %s94 = sphi 0, %s80
      %s98 = sphi 0, %s98
      %s100 = sphi 0, %s98
      %s101 = sphi 0, %s100
      %s115 = sphi 0, %s101
      %s119 = sphi 0, %s119
      %s121 = sphi 0, %s119
      %s122 = sphi 0, %s121
      %s136 = sphi 0, %s122
      %s140 = sphi 0, %s140
      %s142 = sphi 0, %s140
      %s143 = sphi 0, %s142
      %s157 = sphi 0, %s143
      %s161 = sphi 0, %s161
      %s163 = sphi 0, %s161
      %s164 = sphi 0, %s163
      %s178 = sphi 0, %s164
      %s182 = sphi 0, %s182
      %s184 = sphi 0, %s182
      %s185 = sphi 0, %s184
      %s199 = sphi 0, %s185
      %s203 = sphi 0, %s203
      %s205 = sphi 0, %s203
      %s206 = sphi 0, %s205
      %s220 = sphi 0, %s206
      %s224 = sphi 0, %s224
      %s226 = sphi 0, %s224
      %s227 = sphi 0, %s226
      %s241 = sphi 0, %s227
      %s247 = sphi 0, %s249
      %s250 = sphi 0, %s247
      %s251 = sphi 0, %s250
      %s267 = sphi 0, %s251
    $region4: #{tpu_custom_call.1} parent=1 // loop_header_branch
      %25 = sbr.rel (%p23) target = $region8
    $region5: #{tpu_custom_call.1} parent=1 // loop_body
      %s27 = ssub.s32 %s22, 1
      %s28 = ssub.s32 %s22, 2
      %s29 = sadd.s32 %s22, 1
      %s30 = ssub.s32 %s22, %s29
      %p31 = scmp.eq.s32.totalorder %s30, 0
      %s33 = sadd.s32 %s32, 1
      %s34 = scalar_select %p31, %s32, %s33
      %p37 = pneg %p31
      %p38 = scmp.eq.s32.totalorder %s22, 1
      %p39 = por %p37, %p38
      %p40 = scmp.ne.s32.totalorder %s32, %s35
      %p41 = scmp.eq.s32.totalorder %s22, 0
      %p42 = por %p40, %p41
      %p43 = scmp.ne.s32.totalorder %s32, %s35
      %p44 = scmp.eq.s32.totalorder %s27, 1
      %p45 = por %p43, %p44
      %p46 = scmp.ne.s32.totalorder %s35, %s36
      %p47 = scmp.eq.s32.totalorder %s27, 0
      %p48 = por %p46, %p47
      %p49 = scmp.ne.s32.totalorder %s35, %s36
      %p50 = scmp.eq.s32.totalorder %s28, 1
      %p51 = por %p49, %p50
      %p53 = scmp.ne.s32.totalorder %s36, %s52
      %p54 = scmp.eq.s32.totalorder %s28, 0
      %p55 = por %p53, %p54
      %s57 = sadd.s32 %s56, 1
      %p60 = scmp.eq.s32.totalorder %s22, 1
      %p61 = scmp.ne.s32.totalorder %s56, %s58
      %p62 = scmp.eq.s32.totalorder %s22, 0
      %p63 = por %p61, %p62
      %p64 = scmp.ne.s32.totalorder %s56, %s58
      %p65 = scmp.eq.s32.totalorder %s27, 1
      %p66 = por %p64, %p65
      %p67 = scmp.ne.s32.totalorder %s58, %s59
      %p68 = scmp.eq.s32.totalorder %s27, 0
      %p69 = por %p67, %p68
      %p70 = scmp.ne.s32.totalorder %s58, %s59
      %p71 = scmp.eq.s32.totalorder %s28, 1
      %p72 = por %p70, %p71
      %p74 = scmp.ne.s32.totalorder %s59, %s73
      %p75 = scmp.eq.s32.totalorder %s28, 0
      %p76 = por %p74, %p75
      %s78 = sadd.s32 %s77, 1
      %p81 = scmp.eq.s32.totalorder %s22, 1
      %p82 = scmp.ne.s32.totalorder %s77, %s79
      %p83 = scmp.eq.s32.totalorder %s22, 0
      %p84 = por %p82, %p83
      %p85 = scmp.ne.s32.totalorder %s77, %s79
      %p86 = scmp.eq.s32.totalorder %s27, 1
      %p87 = por %p85, %p86
      %p88 = scmp.ne.s32.totalorder %s79, %s80
      %p89 = scmp.eq.s32.totalorder %s27, 0
      %p90 = por %p88, %p89
      %p91 = scmp.ne.s32.totalorder %s79, %s80
      %p92 = scmp.eq.s32.totalorder %s28, 1
      %p93 = por %p91, %p92
      %p95 = scmp.ne.s32.totalorder %s80, %s94
      %p96 = scmp.eq.s32.totalorder %s28, 0
      %p97 = por %p95, %p96
      %s99 = sadd.s32 %s98, 1
      %p102 = scmp.eq.s32.totalorder %s22, 1
      %p103 = scmp.ne.s32.totalorder %s98, %s100
      %p104 = scmp.eq.s32.totalorder %s22, 0
      %p105 = por %p103, %p104
      %p106 = scmp.ne.s32.totalorder %s98, %s100
      %p107 = scmp.eq.s32.totalorder %s27, 1
      %p108 = por %p106, %p107
      %p109 = scmp.ne.s32.totalorder %s100, %s101
      %p110 = scmp.eq.s32.totalorder %s27, 0
      %p111 = por %p109, %p110
      %p112 = scmp.ne.s32.totalorder %s100, %s101
      %p113 = scmp.eq.s32.totalorder %s28, 1
      %p114 = por %p112, %p113
      %p116 = scmp.ne.s32.totalorder %s101, %s115
      %p117 = scmp.eq.s32.totalorder %s28, 0
      %p118 = por %p116, %p117
      %s120 = sadd.s32 %s119, 1
      %p123 = scmp.eq.s32.totalorder %s22, 1
      %p124 = scmp.ne.s32.totalorder %s119, %s121
      %p125 = scmp.eq.s32.totalorder %s22, 0
      %p126 = por %p124, %p125
      %p127 = scmp.ne.s32.totalorder %s119, %s121
      %p128 = scmp.eq.s32.totalorder %s27, 1
      %p129 = por %p127, %p128
      %p130 = scmp.ne.s32.totalorder %s121, %s122
      %p131 = scmp.eq.s32.totalorder %s27, 0
      %p132 = por %p130, %p131
      %p133 = scmp.ne.s32.totalorder %s121, %s122
      %p134 = scmp.eq.s32.totalorder %s28, 1
      %p135 = por %p133, %p134
      %p137 = scmp.ne.s32.totalorder %s122, %s136
      %p138 = scmp.eq.s32.totalorder %s28, 0
      %p139 = por %p137, %p138
      %s141 = sadd.s32 %s140, 1
      %p144 = scmp.eq.s32.totalorder %s22, 1
      %p145 = scmp.ne.s32.totalorder %s140, %s142
      %p146 = scmp.eq.s32.totalorder %s22, 0
      %p147 = por %p145, %p146
      %p148 = scmp.ne.s32.totalorder %s140, %s142
      %p149 = scmp.eq.s32.totalorder %s27, 1
      %p150 = por %p148, %p149
      %p151 = scmp.ne.s32.totalorder %s142, %s143
      %p152 = scmp.eq.s32.totalorder %s27, 0
      %p153 = por %p151, %p152
      %p154 = scmp.ne.s32.totalorder %s142, %s143
      %p155 = scmp.eq.s32.totalorder %s28, 1
      %p156 = por %p154, %p155
      %p158 = scmp.ne.s32.totalorder %s143, %s157
      %p159 = scmp.eq.s32.totalorder %s28, 0
      %p160 = por %p158, %p159
      %s162 = sadd.s32 %s161, 1
      %p165 = scmp.eq.s32.totalorder %s22, 1
      %p166 = scmp.ne.s32.totalorder %s161, %s163
      %p167 = scmp.eq.s32.totalorder %s22, 0
      %p168 = por %p166, %p167
      %p169 = scmp.ne.s32.totalorder %s161, %s163
      %p170 = scmp.eq.s32.totalorder %s27, 1
      %p171 = por %p169, %p170
      %p172 = scmp.ne.s32.totalorder %s163, %s164
      %p173 = scmp.eq.s32.totalorder %s27, 0
      %p174 = por %p172, %p173
      %p175 = scmp.ne.s32.totalorder %s163, %s164
      %p176 = scmp.eq.s32.totalorder %s28, 1
      %p177 = por %p175, %p176
      %p179 = scmp.ne.s32.totalorder %s164, %s178
      %p180 = scmp.eq.s32.totalorder %s28, 0
      %p181 = por %p179, %p180
      %s183 = sadd.s32 %s182, 1
      %p186 = scmp.eq.s32.totalorder %s22, 1
      %p187 = scmp.ne.s32.totalorder %s182, %s184
      %p188 = scmp.eq.s32.totalorder %s22, 0
      %p189 = por %p187, %p188
      %p190 = scmp.ne.s32.totalorder %s182, %s184
      %p191 = scmp.eq.s32.totalorder %s27, 1
      %p192 = por %p190, %p191
      %p193 = scmp.ne.s32.totalorder %s184, %s185
      %p194 = scmp.eq.s32.totalorder %s27, 0
      %p195 = por %p193, %p194
      %p196 = scmp.ne.s32.totalorder %s184, %s185
      %p197 = scmp.eq.s32.totalorder %s28, 1
      %p198 = por %p196, %p197
      %p200 = scmp.ne.s32.totalorder %s185, %s199
      %p201 = scmp.eq.s32.totalorder %s28, 0
      %p202 = por %p200, %p201
      %s204 = sadd.s32 %s203, 1
      %p207 = scmp.eq.s32.totalorder %s22, 1
      %p208 = scmp.ne.s32.totalorder %s203, %s205
      %p209 = scmp.eq.s32.totalorder %s22, 0
      %p210 = por %p208, %p209
      %p211 = scmp.ne.s32.totalorder %s203, %s205
      %p212 = scmp.eq.s32.totalorder %s27, 1
      %p213 = por %p211, %p212
      %p214 = scmp.ne.s32.totalorder %s205, %s206
      %p215 = scmp.eq.s32.totalorder %s27, 0
      %p216 = por %p214, %p215
      %p217 = scmp.ne.s32.totalorder %s205, %s206
      %p218 = scmp.eq.s32.totalorder %s28, 1
      %p219 = por %p217, %p218
      %p221 = scmp.ne.s32.totalorder %s206, %s220
      %p222 = scmp.eq.s32.totalorder %s28, 0
      %p223 = por %p221, %p222
      %s225 = sadd.s32 %s224, 1
      %p228 = scmp.eq.s32.totalorder %s22, 1
      %p229 = scmp.ne.s32.totalorder %s224, %s226
      %p230 = scmp.eq.s32.totalorder %s22, 0
      %p231 = por %p229, %p230
      %p232 = scmp.ne.s32.totalorder %s224, %s226
      %p233 = scmp.eq.s32.totalorder %s27, 1
      %p234 = por %p232, %p233
      %p235 = scmp.ne.s32.totalorder %s226, %s227
      %p236 = scmp.eq.s32.totalorder %s27, 0
      %p237 = por %p235, %p236
      %p238 = scmp.ne.s32.totalorder %s226, %s227
      %p239 = scmp.eq.s32.totalorder %s28, 1
      %p240 = por %p238, %p239
      %p242 = scmp.ne.s32.totalorder %s227, %s241
      %p243 = scmp.eq.s32.totalorder %s28, 0
      %p244 = por %p242, %p243
      %s245 = ssub.s32 %s22, %s29
      %p246 = scmp.eq.s32.totalorder %s245, 0
      %s248 = sadd.s32 %s247, 1
      %s249 = scalar_select %p246, %s247, %s248
      %p252 = pneg %p246
      %p253 = scmp.eq.s32.totalorder %s22, 1
      %p254 = por %p252, %p253
      %p255 = scmp.ne.s32.totalorder %s247, %s250
      %p256 = scmp.eq.s32.totalorder %s22, 0
      %p257 = por %p255, %p256
      %p258 = scmp.ne.s32.totalorder %s247, %s250
      %p259 = scmp.eq.s32.totalorder %s27, 1
      %p260 = por %p258, %p259
      %p261 = scmp.ne.s32.totalorder %s250, %s251
      %p262 = scmp.eq.s32.totalorder %s27, 0
      %p263 = por %p261, %p262
      %p264 = scmp.ne.s32.totalorder %s250, %s251
      %p265 = scmp.eq.s32.totalorder %s28, 1
      %p266 = por %p264, %p265
      %p268 = scmp.ne.s32.totalorder %s251, %s267
      %p269 = scmp.eq.s32.totalorder %s28, 0
      %p270 = por %p268, %p269
      %p271 = scmp.le.s32.totalorder 1, %s22
      %p272 = scmp.lt.s32.totalorder %s22, 3
      %p273 = pnand %p271, %p272
      %p274 = pneg %p273
      // Predicated region
      $region9: #{tpu_custom_call.1} parent=5 // pred_check
        _
      $region10: #{tpu_custom_call.1} parent=5 // pred_check_branch
        %276 = sbr.rel (%p273) target = $region12
      $region11: #{tpu_custom_call.1} parent=5 // pred_region
        %s277 = ssub.s32 %s22, 1
        // Predicated region
        $region13: #{tpu_custom_call.1} parent=11 // pred_check
          %p278 = pneg %p69
        $region14: #{tpu_custom_call.1} parent=11 // pred_check_branch
          %280 = sbr.rel (%p278) target = $region16
        $region15: #{tpu_custom_call.1} parent=11 // pred_region
          _
        $region16: #{tpu_custom_call.1} parent=11 // pred_fallthru
          _
        // Predicated region
        $region17: #{tpu_custom_call.1} parent=11 // pred_check
          %p281 = pneg %p90
        $region18: #{tpu_custom_call.1} parent=11 // pred_check_branch
          %283 = sbr.rel (%p281) target = $region20
        $region19: #{tpu_custom_call.1} parent=11 // pred_region
          _
        $region20: #{tpu_custom_call.1} parent=11 // pred_fallthru
          _
        // Predicated region
        $region21: #{tpu_custom_call.1} parent=11 // pred_check
          %p284 = pneg %p111
        $region22: #{tpu_custom_call.1} parent=11 // pred_check_branch
          %286 = sbr.rel (%p284) target = $region24
        $region23: #{tpu_custom_call.1} parent=11 // pred_region
          _
        $region24: #{tpu_custom_call.1} parent=11 // pred_fallthru
          _
        // Predicated region
        $region25: #{tpu_custom_call.1} parent=11 // pred_check
          %p287 = pneg %p132
        $region26: #{tpu_custom_call.1} parent=11 // pred_check_branch
          %289 = sbr.rel (%p287) target = $region28
        $region27: #{tpu_custom_call.1} parent=11 // pred_region
          _
        $region28: #{tpu_custom_call.1} parent=11 // pred_fallthru
          _
        // Predicated region
        $region29: #{tpu_custom_call.1} parent=11 // pred_check
          %p290 = pneg %p153
        $region30: #{tpu_custom_call.1} parent=11 // pred_check_branch
          %292 = sbr.rel (%p290) target = $region32
        $region31: #{tpu_custom_call.1} parent=11 // pred_region
          _
        $region32: #{tpu_custom_call.1} parent=11 // pred_fallthru
          _
        // Predicated region
        $region33: #{tpu_custom_call.1} parent=11 // pred_check
          %p293 = pneg %p174
        $region34: #{tpu_custom_call.1} parent=11 // pred_check_branch
          %295 = sbr.rel (%p293) target = $region36
        $region35: #{tpu_custom_call.1} parent=11 // pred_region
          _
        $region36: #{tpu_custom_call.1} parent=11 // pred_fallthru
          _
        // Predicated region
        $region37: #{tpu_custom_call.1} parent=11 // pred_check
          %p296 = pneg %p195
        $region38: #{tpu_custom_call.1} parent=11 // pred_check_branch
          %298 = sbr.rel (%p296) target = $region40
        $region39: #{tpu_custom_call.1} parent=11 // pred_region
          _
        $region40: #{tpu_custom_call.1} parent=11 // pred_fallthru
          _
        // Predicated region
        $region41: #{tpu_custom_call.1} parent=11 // pred_check
          %p299 = pneg %p216
        $region42: #{tpu_custom_call.1} parent=11 // pred_check_branch
          %301 = sbr.rel (%p299) target = $region44
        $region43: #{tpu_custom_call.1} parent=11 // pred_region
          _
        $region44: #{tpu_custom_call.1} parent=11 // pred_fallthru
          _
        // Predicated region
        $region45: #{tpu_custom_call.1} parent=11 // pred_check
          %p302 = pneg %p237
        $region46: #{tpu_custom_call.1} parent=11 // pred_check_branch
          %304 = sbr.rel (%p302) target = $region48
        $region47: #{tpu_custom_call.1} parent=11 // pred_region
          _
        $region48: #{tpu_custom_call.1} parent=11 // pred_fallthru
          _
      $region12: #{tpu_custom_call.1} parent=5 // pred_fallthru
        _
      %p305 = scmp.lt.s32.totalorder %s22, 2
      // Predicated region
      $region49: #{tpu_custom_call.1} parent=5 // pred_check
        %p306 = pneg %p305
      $region50: #{tpu_custom_call.1} parent=5 // pred_check_branch
        %308 = sbr.rel (%p306) target = $region52
      $region51: #{tpu_custom_call.1} parent=5 // pred_region
        // Predicated region
        $region53: #{tpu_custom_call.1} parent=51 // pred_check
          %p309 = pneg %p42
        $region54: #{tpu_custom_call.1} parent=51 // pred_check_branch
          %311 = sbr.rel (%p309) target = $region56
        $region55: #{tpu_custom_call.1} parent=51 // pred_region
          %s312 = sand.u32 %s32, 1
          %s313 = scalar_lea.sflag [#allocation4], %s312
          %s314 = sand.u32 %s32, 1
          %s315 = smul.addr %s314, 24
          %s316 = scalar_lea.vmem [#allocation3], %s315
          %318 = vsyncadd %s313, 0
          %s319 = smul.addr %s22, 3
          %s320 = smul.addr %s319, 8
          %s321 = scalar_lea.hbm %s0, %s320
          %s323 = sshll.u32 %s321, 4
          %s324 = int_to_ptr.hbm [resolvable:$true] %s323
          %s325 = sshll.u32 %s316, 4
          %s326 = int_to_ptr.vmem [resolvable:$true] %s325
          %328 = dma.hbm_to_vmem [thread:$0]  %s324, 384, %s326, %s313
        $region56: #{tpu_custom_call.1} parent=51 // pred_fallthru
          _
      $region52: #{tpu_custom_call.1} parent=5 // pred_fallthru
        _
      %p329 = scmp.le.s32.totalorder 1, %s22
      %p330 = scmp.lt.s32.totalorder %s22, 3
      %p331 = pnand %p329, %p330
      %p332 = pneg %p331
      // Predicated region
      $region57: #{tpu_custom_call.1} parent=5 // pred_check
        _
      $region58: #{tpu_custom_call.1} parent=5 // pred_check_branch
        %334 = sbr.rel (%p331) target = $region60
      $region59: #{tpu_custom_call.1} parent=5 // pred_region
        %s335 = ssub.s32 %s22, 1
        %s336 = sand.u32 %s35, 1
        %s337 = scalar_lea.sflag [#allocation4], %s336
        %s338 = sand.u32 %s35, 1
        %s339 = smul.addr %s338, 24
        %s340 = scalar_lea.vmem [#allocation3], %s339
        // Predicated region
        $region61: #{tpu_custom_call.1} parent=59 // pred_check
          %p341 = pneg %p48
        $region62: #{tpu_custom_call.1} parent=59 // pred_check_branch
          %343 = sbr.rel (%p341) target = $region64
        $region63: #{tpu_custom_call.1} parent=59 // pred_region
          %345 = dma.done %s337, 384
        $region64: #{tpu_custom_call.1} parent=59 // pred_fallthru
          _
        %s346 = sand.u32 %s35, 1
        %s347 = scalar_lea.sflag [#allocation4], %s346
        %s348 = sand.u32 %s35, 1
        %s349 = smul.addr %s348, 24
        %s350 = scalar_lea.vmem [#allocation3], %s349
        %p351 = pneg %p48
        %p352 = pneg %p45
        %p353 = pneg %p69
        %p354 = pneg %p66
        %p355 = pneg %p90
        %p356 = pneg %p87
        %p357 = pneg %p111
        %p358 = pneg %p108
        %p359 = pneg %p132
        %p360 = pneg %p129
        %p361 = pneg %p153
        %p362 = pneg %p150
        %p363 = pneg %p174
        %p364 = pneg %p171
        %p365 = pneg %p195
        %p366 = pneg %p192
        %p367 = pneg %p216
        %p368 = pneg %p213
        %p369 = pneg %p237
        %p370 = pneg %p234
        %p371 = pneg %p263
        %p372 = pneg %p260
        %s373 = sand.u32 %s250, 1
        %s374 = scalar_lea.sflag [#allocation5], %s373
        %s375 = sand.u32 %s250, 1
        %s376 = smul.addr %s375, 24
        %s377 = scalar_lea.vmem [#allocation6], %s376
        %v378 = vld [vmem:[%s340] sm:$0xff]
        %v379 = vld [vmem:[%s340 + $0x8] sm:$0xff]
        %v380 = vld [vmem:[%s340 + $0x10] sm:$0xff]
        %381 = vst [vmem:[#allocation2 + $0x8] sm:$0xff] %v378
        %382 = vst [vmem:[#allocation2 + $0x10] sm:$0xff] %v379
        %383 = vst [vmem:[#allocation2 + $0x18] sm:$0xff] %v380
        %v384 = vld [vmem:[%s1] sm:$0x7]
        %vm385 = vcmp.gt.f32.partialorder %v384, 0.5
        %v386 = vld [vmem:[%s2] sm:$0xff]
        %v387 = vld [vmem:[#allocation2] sm:$0xff]
        %v388 = vld [vmem:[#allocation2 + $0x8] sm:$0xff]
        %v389 = vld [vmem:[#allocation2 + $0x10] sm:$0xff]
        %v390 = vld [vmem:[#allocation2 + $0x18] sm:$0xff]
        %s391 = scalar_lea.vmem %s2, 8
        %v392 = vld [vmem:[%s391] sm:$0xff]
        %397 = vrot.lane.b32.xlu0 %v387, 18
        %v398 = vpop.permute.xlu0 %397
        %399 = vrot.lane.b32.xlu0 %v388, 18
        %v400 = vpop.permute.xlu0 %399
        %401 = vrot.lane.b32.xlu0 %v389, 18
        %v402 = vpop.permute.xlu0 %401
        %403 = vrot.lane.b32.xlu0 %v390, 18
        %v404 = vpop.permute.xlu0 %403
        %vm405 = vcmask 146432
        %v406 = vsel %vm405, %v398, %v400
        %v407 = vsel %vm405, %v400, %v402
        %v408 = vsel %vm405, %v402, %v404
        %vm412 = vcmask 64512
        %v414 = vsel %vm412, %v392, 0
        %416 = vmatpush.msra.mxu0 0.0
        %417 = vmatpush.msra.mxu0 0.0
        %418 = vmatpush.msra.mxu0 0.0
        %419 = vmatpush.msra.mxu0 0.0
        %420 = vmatpush.msra.mxu0 0.0
        %421 = vmatpush.msra.mxu0 0.0
        %422 = vmatpush.msra.mxu0 0.0
        %423 = vmatpush.msra.mxu0 0.0
        %424 = vmatpush.msra.mxu0 0.0
        %425 = vmatpush.msra.mxu0 0.0
        %426 = vmatpush.msra.mxu0 0.0
        %427 = vmatpush.msra.mxu0 0.0
        %428 = vmatpush.msra.mxu0 0.0
        %429 = vmatpush.msra.mxu0 0.0
        %430 = vmatpush.msra.mxu0 0.0
        %431 = vmatpush.msra.mxu0 %v406
        %432 = vmatmul.f32.gmra.mxu0 %v414
        %v433 = vpop.f32.mrf.mxu0
        %v434 = vadd.f32 0.0, %v433
        %435 = vdwg.mxu0
        %436 = vmatpush.msra.mxu0 0.0
        %437 = vmatpush.msra.mxu0 0.0
        %438 = vmatpush.msra.mxu0 0.0
        %439 = vmatpush.msra.mxu0 0.0
        %440 = vmatpush.msra.mxu0 0.0
        %441 = vmatpush.msra.mxu0 0.0
        %442 = vmatpush.msra.mxu0 0.0
        %443 = vmatpush.msra.mxu0 0.0
        %444 = vmatpush.msra.mxu0 0.0
        %445 = vmatpush.msra.mxu0 0.0
        %446 = vmatpush.msra.mxu0 0.0
        %447 = vmatpush.msra.mxu0 0.0
        %448 = vmatpush.msra.mxu0 0.0
        %449 = vmatpush.msra.mxu0 0.0
        %450 = vmatpush.msra.mxu0 0.0
        %451 = vmatpush.msra.mxu0 %v407
        %452 = vmatmul.f32.gmra.mxu0 %v414
        %v453 = vpop.f32.mrf.mxu0
        %v454 = vadd.f32 0.0, %v453
        %455 = vdwg.mxu0
        %456 = vmatpush.msra.mxu0 0.0
        %457 = vmatpush.msra.mxu0 0.0
        %458 = vmatpush.msra.mxu0 0.0
        %459 = vmatpush.msra.mxu0 0.0
        %460 = vmatpush.msra.mxu0 0.0
        %461 = vmatpush.msra.mxu0 0.0
        %462 = vmatpush.msra.mxu0 0.0
        %463 = vmatpush.msra.mxu0 0.0
        %464 = vmatpush.msra.mxu0 0.0
        %465 = vmatpush.msra.mxu0 0.0
        %466 = vmatpush.msra.mxu0 0.0
        %467 = vmatpush.msra.mxu0 0.0
        %468 = vmatpush.msra.mxu0 0.0
        %469 = vmatpush.msra.mxu0 0.0
        %470 = vmatpush.msra.mxu0 0.0
        %471 = vmatpush.msra.mxu0 %v408
        %472 = vmatmul.f32.gmra.mxu0 %v414
        %v473 = vpop.f32.mrf.mxu0
        %v474 = vadd.f32 0.0, %v473
        %475 = vdwg.mxu0
        %476 = vrot.lane.b32.xlu0 %v387, 19
        %v477 = vpop.permute.xlu0 %476
        %478 = vrot.lane.b32.xlu0 %v388, 19
        %v479 = vpop.permute.xlu0 %478
        %480 = vrot.lane.b32.xlu0 %v389, 19
        %v481 = vpop.permute.xlu0 %480
        %482 = vrot.lane.b32.xlu0 %v390, 19
        %v483 = vpop.permute.xlu0 %482
        %vm484 = vcmask 154624
        %v485 = vsel %vm484, %v477, %v479
        %v486 = vsel %vm484, %v479, %v481
        %v487 = vsel %vm484, %v481, %v483
        %v492 = vsel %vm412, %v386, 0
        %494 = vmatpush.msra.mxu0 0.0
        %495 = vmatpush.msra.mxu0 0.0
        %496 = vmatpush.msra.mxu0 0.0
        %497 = vmatpush.msra.mxu0 0.0
        %498 = vmatpush.msra.mxu0 0.0
        %499 = vmatpush.msra.mxu0 0.0
        %500 = vmatpush.msra.mxu0 0.0
        %501 = vmatpush.msra.mxu0 0.0
        %502 = vmatpush.msra.mxu0 0.0
        %503 = vmatpush.msra.mxu0 0.0
        %504 = vmatpush.msra.mxu0 0.0
        %505 = vmatpush.msra.mxu0 0.0
        %506 = vmatpush.msra.mxu0 0.0
        %507 = vmatpush.msra.mxu0 0.0
        %508 = vmatpush.msra.mxu0 0.0
        %509 = vmatpush.msra.mxu0 %v485
        %510 = vmatmul.f32.gmra.mxu0 %v492
        %v511 = vpop.f32.mrf.mxu0
        %v512 = vadd.f32 %v434, %v511
        %513 = vdwg.mxu0
        %514 = vmatpush.msra.mxu0 0.0
        %515 = vmatpush.msra.mxu0 0.0
        %516 = vmatpush.msra.mxu0 0.0
        %517 = vmatpush.msra.mxu0 0.0
        %518 = vmatpush.msra.mxu0 0.0
        %519 = vmatpush.msra.mxu0 0.0
        %520 = vmatpush.msra.mxu0 0.0
        %521 = vmatpush.msra.mxu0 0.0
        %522 = vmatpush.msra.mxu0 0.0
        %523 = vmatpush.msra.mxu0 0.0
        %524 = vmatpush.msra.mxu0 0.0
        %525 = vmatpush.msra.mxu0 0.0
        %526 = vmatpush.msra.mxu0 0.0
        %527 = vmatpush.msra.mxu0 0.0
        %528 = vmatpush.msra.mxu0 0.0
        %529 = vmatpush.msra.mxu0 %v486
        %530 = vmatmul.f32.gmra.mxu0 %v492
        %v531 = vpop.f32.mrf.mxu0
        %v532 = vadd.f32 %v454, %v531
        %533 = vdwg.mxu0
        %534 = vmatpush.msra.mxu0 0.0
        %535 = vmatpush.msra.mxu0 0.0
        %536 = vmatpush.msra.mxu0 0.0
        %537 = vmatpush.msra.mxu0 0.0
        %538 = vmatpush.msra.mxu0 0.0
        %539 = vmatpush.msra.mxu0 0.0
        %540 = vmatpush.msra.mxu0 0.0
        %541 = vmatpush.msra.mxu0 0.0
        %542 = vmatpush.msra.mxu0 0.0
        %543 = vmatpush.msra.mxu0 0.0
        %544 = vmatpush.msra.mxu0 0.0
        %545 = vmatpush.msra.mxu0 0.0
        %546 = vmatpush.msra.mxu0 0.0
        %547 = vmatpush.msra.mxu0 0.0
        %548 = vmatpush.msra.mxu0 0.0
        %549 = vmatpush.msra.mxu0 %v487
        %550 = vmatmul.f32.gmra.mxu0 %v492
        %v551 = vpop.f32.mrf.mxu0
        %v552 = vadd.f32 %v474, %v551
        %553 = vdwg.mxu0
        %s554 = scalar_lea.vmem %s2, 16
        %v555 = vld [vmem:[%s554] sm:$0xff]
        %556 = vrot.lane.b32.xlu0 %v387, 17
        %v557 = vpop.permute.xlu0 %556
        %558 = vrot.lane.b32.xlu0 %v388, 17
        %v559 = vpop.permute.xlu0 %558
        %560 = vrot.lane.b32.xlu0 %v389, 17
        %v561 = vpop.permute.xlu0 %560
        %562 = vrot.lane.b32.xlu0 %v390, 17
        %v563 = vpop.permute.xlu0 %562
        %vm564 = vcmask 138240
        %v565 = vsel %vm564, %v557, %v559
        %v566 = vsel %vm564, %v559, %v561
        %v567 = vsel %vm564, %v561, %v563
        %v572 = vsel %vm412, %v555, 0
        %574 = vmatpush.msra.mxu0 0.0
        %575 = vmatpush.msra.mxu0 0.0
        %576 = vmatpush.msra.mxu0 0.0
        %577 = vmatpush.msra.mxu0 0.0
        %578 = vmatpush.msra.mxu0 0.0
        %579 = vmatpush.msra.mxu0 0.0
        %580 = vmatpush.msra.mxu0 0.0
        %581 = vmatpush.msra.mxu0 0.0
        %582 = vmatpush.msra.mxu0 0.0
        %583 = vmatpush.msra.mxu0 0.0
        %584 = vmatpush.msra.mxu0 0.0
        %585 = vmatpush.msra.mxu0 0.0
        %586 = vmatpush.msra.mxu0 0.0
        %587 = vmatpush.msra.mxu0 0.0
        %588 = vmatpush.msra.mxu0 0.0
        %589 = vmatpush.msra.mxu0 %v565
        %590 = vmatmul.f32.gmra.mxu0 %v572
        %v591 = vpop.f32.mrf.mxu0
        %v592 = vadd.f32 0.0, %v591
        %593 = vdwg.mxu0
        %594 = vmatpush.msra.mxu0 0.0
        %595 = vmatpush.msra.mxu0 0.0
        %596 = vmatpush.msra.mxu0 0.0
        %597 = vmatpush.msra.mxu0 0.0
        %598 = vmatpush.msra.mxu0 0.0
        %599 = vmatpush.msra.mxu0 0.0
        %600 = vmatpush.msra.mxu0 0.0
        %601 = vmatpush.msra.mxu0 0.0
        %602 = vmatpush.msra.mxu0 0.0
        %603 = vmatpush.msra.mxu0 0.0
        %604 = vmatpush.msra.mxu0 0.0
        %605 = vmatpush.msra.mxu0 0.0
        %606 = vmatpush.msra.mxu0 0.0
        %607 = vmatpush.msra.mxu0 0.0
        %608 = vmatpush.msra.mxu0 0.0
        %609 = vmatpush.msra.mxu0 %v566
        %610 = vmatmul.f32.gmra.mxu0 %v572
        %v611 = vpop.f32.mrf.mxu0
        %v612 = vadd.f32 0.0, %v611
        %613 = vdwg.mxu0
        %614 = vmatpush.msra.mxu0 0.0
        %615 = vmatpush.msra.mxu0 0.0
        %616 = vmatpush.msra.mxu0 0.0
        %617 = vmatpush.msra.mxu0 0.0
        %618 = vmatpush.msra.mxu0 0.0
        %619 = vmatpush.msra.mxu0 0.0
        %620 = vmatpush.msra.mxu0 0.0
        %621 = vmatpush.msra.mxu0 0.0
        %622 = vmatpush.msra.mxu0 0.0
        %623 = vmatpush.msra.mxu0 0.0
        %624 = vmatpush.msra.mxu0 0.0
        %625 = vmatpush.msra.mxu0 0.0
        %626 = vmatpush.msra.mxu0 0.0
        %627 = vmatpush.msra.mxu0 0.0
        %628 = vmatpush.msra.mxu0 0.0
        %629 = vmatpush.msra.mxu0 %v567
        %630 = vmatmul.f32.gmra.mxu0 %v572
        %v631 = vpop.f32.mrf.mxu0
        %v632 = vadd.f32 0.0, %v631
        %633 = vdwg.mxu0
        %v634 = vadd.f32 %v512, %v592
        %v635 = vadd.f32 %v532, %v612
        %v636 = vadd.f32 %v552, %v632
        %s637 = scalar_lea.vmem %s2, 24
        %v638 = vld [vmem:[%s637] sm:$0xff]
        %639 = vrot.lane.b32.xlu0 %v387, 1
        %v640 = vpop.permute.xlu0 %639
        %641 = vrot.lane.b32.xlu0 %v388, 1
        %v642 = vpop.permute.xlu0 %641
        %643 = vrot.lane.b32.xlu0 %v389, 1
        %v644 = vpop.permute.xlu0 %643
        %645 = vrot.lane.b32.xlu0 %v390, 1
        %v646 = vpop.permute.xlu0 %645
        %vm647 = vcmask 7168
        %v648 = vsel %vm647, %v640, %v642
        %v649 = vsel %vm647, %v642, %v644
        %v650 = vsel %vm647, %v644, %v646
        %v655 = vsel %vm412, %v638, 0
        %657 = vmatpush.msra.mxu0 0.0
        %658 = vmatpush.msra.mxu0 0.0
        %659 = vmatpush.msra.mxu0 0.0
        %660 = vmatpush.msra.mxu0 0.0
        %661 = vmatpush.msra.mxu0 0.0
        %662 = vmatpush.msra.mxu0 0.0
        %663 = vmatpush.msra.mxu0 0.0
        %664 = vmatpush.msra.mxu0 0.0
        %665 = vmatpush.msra.mxu0 0.0
        %666 = vmatpush.msra.mxu0 0.0
        %667 = vmatpush.msra.mxu0 0.0
        %668 = vmatpush.msra.mxu0 0.0
        %669 = vmatpush.msra.mxu0 0.0
        %670 = vmatpush.msra.mxu0 0.0
        %671 = vmatpush.msra.mxu0 0.0
        %672 = vmatpush.msra.mxu0 %v648
        %673 = vmatmul.f32.gmra.mxu0 %v655
        %v674 = vpop.f32.mrf.mxu0
        %v675 = vadd.f32 0.0, %v674
        %676 = vdwg.mxu0
        %677 = vmatpush.msra.mxu0 0.0
        %678 = vmatpush.msra.mxu0 0.0
        %679 = vmatpush.msra.mxu0 0.0
        %680 = vmatpush.msra.mxu0 0.0
        %681 = vmatpush.msra.mxu0 0.0
        %682 = vmatpush.msra.mxu0 0.0
        %683 = vmatpush.msra.mxu0 0.0
        %684 = vmatpush.msra.mxu0 0.0
        %685 = vmatpush.msra.mxu0 0.0
        %686 = vmatpush.msra.mxu0 0.0
        %687 = vmatpush.msra.mxu0 0.0
        %688 = vmatpush.msra.mxu0 0.0
        %689 = vmatpush.msra.mxu0 0.0
        %690 = vmatpush.msra.mxu0 0.0
        %691 = vmatpush.msra.mxu0 0.0
        %692 = vmatpush.msra.mxu0 %v649
        %693 = vmatmul.f32.gmra.mxu0 %v655
        %v694 = vpop.f32.mrf.mxu0
        %v695 = vadd.f32 0.0, %v694
        %696 = vdwg.mxu0
        %697 = vmatpush.msra.mxu0 0.0
        %698 = vmatpush.msra.mxu0 0.0
        %699 = vmatpush.msra.mxu0 0.0
        %700 = vmatpush.msra.mxu0 0.0
        %701 = vmatpush.msra.mxu0 0.0
        %702 = vmatpush.msra.mxu0 0.0
        %703 = vmatpush.msra.mxu0 0.0
        %704 = vmatpush.msra.mxu0 0.0
        %705 = vmatpush.msra.mxu0 0.0
        %706 = vmatpush.msra.mxu0 0.0
        %707 = vmatpush.msra.mxu0 0.0
        %708 = vmatpush.msra.mxu0 0.0
        %709 = vmatpush.msra.mxu0 0.0
        %710 = vmatpush.msra.mxu0 0.0
        %711 = vmatpush.msra.mxu0 0.0
        %712 = vmatpush.msra.mxu0 %v650
        %713 = vmatmul.f32.gmra.mxu0 %v655
        %v714 = vpop.f32.mrf.mxu0
        %v715 = vadd.f32 0.0, %v714
        %716 = vdwg.mxu0
        %v717 = vadd.f32 %v634, %v675
        %v718 = vadd.f32 %v635, %v695
        %v719 = vadd.f32 %v636, %v715
        %s720 = scalar_lea.vmem %s2, 32
        %v721 = vld [vmem:[%s720] sm:$0xff]
        %v723 = vsel %vm412, %v721, 0
        %725 = vmatpush.msra.mxu0 0.0
        %726 = vmatpush.msra.mxu0 0.0
        %727 = vmatpush.msra.mxu0 0.0
        %728 = vmatpush.msra.mxu0 0.0
        %729 = vmatpush.msra.mxu0 0.0
        %730 = vmatpush.msra.mxu0 0.0
        %731 = vmatpush.msra.mxu0 0.0
        %732 = vmatpush.msra.mxu0 0.0
        %733 = vmatpush.msra.mxu0 0.0
        %734 = vmatpush.msra.mxu0 0.0
        %735 = vmatpush.msra.mxu0 0.0
        %736 = vmatpush.msra.mxu0 0.0
        %737 = vmatpush.msra.mxu0 0.0
        %738 = vmatpush.msra.mxu0 0.0
        %739 = vmatpush.msra.mxu0 0.0
        %740 = vmatpush.msra.mxu0 %v388
        %741 = vmatmul.f32.gmra.mxu0 %v723
        %v742 = vpop.f32.mrf.mxu0
        %v743 = vadd.f32 0.0, %v742
        %744 = vdwg.mxu0
        %745 = vmatpush.msra.mxu0 0.0
        %746 = vmatpush.msra.mxu0 0.0
        %747 = vmatpush.msra.mxu0 0.0
        %748 = vmatpush.msra.mxu0 0.0
        %749 = vmatpush.msra.mxu0 0.0
        %750 = vmatpush.msra.mxu0 0.0
        %751 = vmatpush.msra.mxu0 0.0
        %752 = vmatpush.msra.mxu0 0.0
        %753 = vmatpush.msra.mxu0 0.0
        %754 = vmatpush.msra.mxu0 0.0
        %755 = vmatpush.msra.mxu0 0.0
        %756 = vmatpush.msra.mxu0 0.0
        %757 = vmatpush.msra.mxu0 0.0
        %758 = vmatpush.msra.mxu0 0.0
        %759 = vmatpush.msra.mxu0 0.0
        %760 = vmatpush.msra.mxu0 %v389
        %761 = vmatmul.f32.gmra.mxu0 %v723
        %v762 = vpop.f32.mrf.mxu0
        %v763 = vadd.f32 0.0, %v762
        %764 = vdwg.mxu0
        %765 = vmatpush.msra.mxu0 0.0
        %766 = vmatpush.msra.mxu0 0.0
        %767 = vmatpush.msra.mxu0 0.0
        %768 = vmatpush.msra.mxu0 0.0
        %769 = vmatpush.msra.mxu0 0.0
        %770 = vmatpush.msra.mxu0 0.0
        %771 = vmatpush.msra.mxu0 0.0
        %772 = vmatpush.msra.mxu0 0.0
        %773 = vmatpush.msra.mxu0 0.0
        %774 = vmatpush.msra.mxu0 0.0
        %775 = vmatpush.msra.mxu0 0.0
        %776 = vmatpush.msra.mxu0 0.0
        %777 = vmatpush.msra.mxu0 0.0
        %778 = vmatpush.msra.mxu0 0.0
        %779 = vmatpush.msra.mxu0 0.0
        %780 = vmatpush.msra.mxu0 %v390
        %781 = vmatmul.f32.gmra.mxu0 %v723
        %v782 = vpop.f32.mrf.mxu0
        %v783 = vadd.f32 0.0, %v782
        %784 = vdwg.mxu0
        %v785 = vadd.f32 %v717, %v743
        %v786 = vadd.f32 %v718, %v763
        %v787 = vadd.f32 %v719, %v783
        %s788 = scalar_lea.vmem %s2, 40
        %v789 = vld [vmem:[%s788] sm:$0xff]
        %v790 = vld [vmem:[#allocation2 + $0x8] sm:$0xff]
        %v791 = vld [vmem:[#allocation2 + $0x10] sm:$0xff]
        %v792 = vld [vmem:[#allocation2 + $0x18] sm:$0xff]
        %v793 = vld [vmem:[#allocation2 + $0x20] sm:$0xff]
        %798 = vrot.lane.b32.xlu0 %v790, 127
        %v799 = vpop.permute.xlu0 %798
        %800 = vrot.lane.b32.xlu0 %v791, 127
        %v801 = vpop.permute.xlu0 %800
        %802 = vrot.lane.b32.xlu0 %v792, 127
        %v803 = vpop.permute.xlu0 %802
        %804 = vrot.lane.b32.xlu0 %v793, 127
        %v805 = vpop.permute.xlu0 %804
        %vm806 = vcmask 1039360
        %v807 = vsel %vm806, %v799, %v801
        %v808 = vsel %vm806, %v801, %v803
        %v809 = vsel %vm806, %v803, %v805
        %v814 = vsel %vm412, %v789, 0
        %816 = vmatpush.msra.mxu0 0.0
        %817 = vmatpush.msra.mxu0 0.0
        %818 = vmatpush.msra.mxu0 0.0
        %819 = vmatpush.msra.mxu0 0.0
        %820 = vmatpush.msra.mxu0 0.0
        %821 = vmatpush.msra.mxu0 0.0
        %822 = vmatpush.msra.mxu0 0.0
        %823 = vmatpush.msra.mxu0 0.0
        %824 = vmatpush.msra.mxu0 0.0
        %825 = vmatpush.msra.mxu0 0.0
        %826 = vmatpush.msra.mxu0 0.0
        %827 = vmatpush.msra.mxu0 0.0
        %828 = vmatpush.msra.mxu0 0.0
        %829 = vmatpush.msra.mxu0 0.0
        %830 = vmatpush.msra.mxu0 0.0
        %831 = vmatpush.msra.mxu0 %v807
        %832 = vmatmul.f32.gmra.mxu0 %v814
        %v833 = vpop.f32.mrf.mxu0
        %v834 = vadd.f32 0.0, %v833
        %835 = vdwg.mxu0
        %836 = vmatpush.msra.mxu0 0.0
        %837 = vmatpush.msra.mxu0 0.0
        %838 = vmatpush.msra.mxu0 0.0
        %839 = vmatpush.msra.mxu0 0.0
        %840 = vmatpush.msra.mxu0 0.0
        %841 = vmatpush.msra.mxu0 0.0
        %842 = vmatpush.msra.mxu0 0.0
        %843 = vmatpush.msra.mxu0 0.0
        %844 = vmatpush.msra.mxu0 0.0
        %845 = vmatpush.msra.mxu0 0.0
        %846 = vmatpush.msra.mxu0 0.0
        %847 = vmatpush.msra.mxu0 0.0
        %848 = vmatpush.msra.mxu0 0.0
        %849 = vmatpush.msra.mxu0 0.0
        %850 = vmatpush.msra.mxu0 0.0
        %851 = vmatpush.msra.mxu0 %v808
        %852 = vmatmul.f32.gmra.mxu0 %v814
        %v853 = vpop.f32.mrf.mxu0
        %v854 = vadd.f32 0.0, %v853
        %855 = vdwg.mxu0
        %856 = vmatpush.msra.mxu0 0.0
        %857 = vmatpush.msra.mxu0 0.0
        %858 = vmatpush.msra.mxu0 0.0
        %859 = vmatpush.msra.mxu0 0.0
        %860 = vmatpush.msra.mxu0 0.0
        %861 = vmatpush.msra.mxu0 0.0
        %862 = vmatpush.msra.mxu0 0.0
        %863 = vmatpush.msra.mxu0 0.0
        %864 = vmatpush.msra.mxu0 0.0
        %865 = vmatpush.msra.mxu0 0.0
        %866 = vmatpush.msra.mxu0 0.0
        %867 = vmatpush.msra.mxu0 0.0
        %868 = vmatpush.msra.mxu0 0.0
        %869 = vmatpush.msra.mxu0 0.0
        %870 = vmatpush.msra.mxu0 0.0
        %871 = vmatpush.msra.mxu0 %v809
        %872 = vmatmul.f32.gmra.mxu0 %v814
        %v873 = vpop.f32.mrf.mxu0
        %v874 = vadd.f32 0.0, %v873
        %875 = vdwg.mxu0
        %v876 = vadd.f32 %v785, %v834
        %v877 = vadd.f32 %v786, %v854
        %v878 = vadd.f32 %v787, %v874
        %s879 = scalar_lea.vmem %s2, 48
        %v880 = vld [vmem:[%s879] sm:$0xff]
        %881 = vrot.lane.b32.xlu0 %v790, 111
        %v882 = vpop.permute.xlu0 %881
        %883 = vrot.lane.b32.xlu0 %v791, 111
        %v884 = vpop.permute.xlu0 %883
        %885 = vrot.lane.b32.xlu0 %v792, 111
        %v886 = vpop.permute.xlu0 %885
        %887 = vrot.lane.b32.xlu0 %v793, 111
        %v888 = vpop.permute.xlu0 %887
        %vm889 = vcmask 908288
        %v890 = vsel %vm889, %v882, %v884
        %v891 = vsel %vm889, %v884, %v886
        %v892 = vsel %vm889, %v886, %v888
        %v897 = vsel %vm412, %v880, 0
        %899 = vmatpush.msra.mxu0 0.0
        %900 = vmatpush.msra.mxu0 0.0
        %901 = vmatpush.msra.mxu0 0.0
        %902 = vmatpush.msra.mxu0 0.0
        %903 = vmatpush.msra.mxu0 0.0
        %904 = vmatpush.msra.mxu0 0.0
        %905 = vmatpush.msra.mxu0 0.0
        %906 = vmatpush.msra.mxu0 0.0
        %907 = vmatpush.msra.mxu0 0.0
        %908 = vmatpush.msra.mxu0 0.0
        %909 = vmatpush.msra.mxu0 0.0
        %910 = vmatpush.msra.mxu0 0.0
        %911 = vmatpush.msra.mxu0 0.0
        %912 = vmatpush.msra.mxu0 0.0
        %913 = vmatpush.msra.mxu0 0.0
        %914 = vmatpush.msra.mxu0 %v890
        %915 = vmatmul.f32.gmra.mxu0 %v897
        %v916 = vpop.f32.mrf.mxu0
        %v917 = vadd.f32 0.0, %v916
        %918 = vdwg.mxu0
        %919 = vmatpush.msra.mxu0 0.0
        %920 = vmatpush.msra.mxu0 0.0
        %921 = vmatpush.msra.mxu0 0.0
        %922 = vmatpush.msra.mxu0 0.0
        %923 = vmatpush.msra.mxu0 0.0
        %924 = vmatpush.msra.mxu0 0.0
        %925 = vmatpush.msra.mxu0 0.0
        %926 = vmatpush.msra.mxu0 0.0
        %927 = vmatpush.msra.mxu0 0.0
        %928 = vmatpush.msra.mxu0 0.0
        %929 = vmatpush.msra.mxu0 0.0
        %930 = vmatpush.msra.mxu0 0.0
        %931 = vmatpush.msra.mxu0 0.0
        %932 = vmatpush.msra.mxu0 0.0
        %933 = vmatpush.msra.mxu0 0.0
        %934 = vmatpush.msra.mxu0 %v891
        %935 = vmatmul.f32.gmra.mxu0 %v897
        %v936 = vpop.f32.mrf.mxu0
        %v937 = vadd.f32 0.0, %v936
        %938 = vdwg.mxu0
        %939 = vmatpush.msra.mxu0 0.0
        %940 = vmatpush.msra.mxu0 0.0
        %941 = vmatpush.msra.mxu0 0.0
        %942 = vmatpush.msra.mxu0 0.0
        %943 = vmatpush.msra.mxu0 0.0
        %944 = vmatpush.msra.mxu0 0.0
        %945 = vmatpush.msra.mxu0 0.0
        %946 = vmatpush.msra.mxu0 0.0
        %947 = vmatpush.msra.mxu0 0.0
        %948 = vmatpush.msra.mxu0 0.0
        %949 = vmatpush.msra.mxu0 0.0
        %950 = vmatpush.msra.mxu0 0.0
        %951 = vmatpush.msra.mxu0 0.0
        %952 = vmatpush.msra.mxu0 0.0
        %953 = vmatpush.msra.mxu0 0.0
        %954 = vmatpush.msra.mxu0 %v892
        %955 = vmatmul.f32.gmra.mxu0 %v897
        %v956 = vpop.f32.mrf.mxu0
        %v957 = vadd.f32 0.0, %v956
        %958 = vdwg.mxu0
        %v959 = vadd.f32 %v876, %v917
        %v960 = vadd.f32 %v877, %v937
        %v961 = vadd.f32 %v878, %v957
        %s962 = scalar_lea.vmem %s2, 56
        %v963 = vld [vmem:[%s962] sm:$0xff]
        %964 = vrot.lane.b32.xlu0 %v790, 110
        %v965 = vpop.permute.xlu0 %964
        %966 = vrot.lane.b32.xlu0 %v791, 110
        %v967 = vpop.permute.xlu0 %966
        %968 = vrot.lane.b32.xlu0 %v792, 110
        %v969 = vpop.permute.xlu0 %968
        %970 = vrot.lane.b32.xlu0 %v793, 110
        %v971 = vpop.permute.xlu0 %970
        %vm972 = vcmask 900096
        %v973 = vsel %vm972, %v965, %v967
        %v974 = vsel %vm972, %v967, %v969
        %v975 = vsel %vm972, %v969, %v971
        %v980 = vsel %vm412, %v963, 0
        %982 = vmatpush.msra.mxu0 0.0
        %983 = vmatpush.msra.mxu0 0.0
        %984 = vmatpush.msra.mxu0 0.0
        %985 = vmatpush.msra.mxu0 0.0
        %986 = vmatpush.msra.mxu0 0.0
        %987 = vmatpush.msra.mxu0 0.0
        %988 = vmatpush.msra.mxu0 0.0
        %989 = vmatpush.msra.mxu0 0.0
        %990 = vmatpush.msra.mxu0 0.0
        %991 = vmatpush.msra.mxu0 0.0
        %992 = vmatpush.msra.mxu0 0.0
        %993 = vmatpush.msra.mxu0 0.0
        %994 = vmatpush.msra.mxu0 0.0
        %995 = vmatpush.msra.mxu0 0.0
        %996 = vmatpush.msra.mxu0 0.0
        %997 = vmatpush.msra.mxu0 %v973
        %998 = vmatmul.f32.gmra.mxu0 %v980
        %v999 = vpop.f32.mrf.mxu0
        %v1000 = vadd.f32 0.0, %v999
        %1001 = vdwg.mxu0
        %1002 = vmatpush.msra.mxu0 0.0
        %1003 = vmatpush.msra.mxu0 0.0
        %1004 = vmatpush.msra.mxu0 0.0
        %1005 = vmatpush.msra.mxu0 0.0
        %1006 = vmatpush.msra.mxu0 0.0
        %1007 = vmatpush.msra.mxu0 0.0
        %1008 = vmatpush.msra.mxu0 0.0
        %1009 = vmatpush.msra.mxu0 0.0
        %1010 = vmatpush.msra.mxu0 0.0
        %1011 = vmatpush.msra.mxu0 0.0
        %1012 = vmatpush.msra.mxu0 0.0
        %1013 = vmatpush.msra.mxu0 0.0
        %1014 = vmatpush.msra.mxu0 0.0
        %1015 = vmatpush.msra.mxu0 0.0
        %1016 = vmatpush.msra.mxu0 0.0
        %1017 = vmatpush.msra.mxu0 %v974
        %1018 = vmatmul.f32.gmra.mxu0 %v980
        %v1019 = vpop.f32.mrf.mxu0
        %v1020 = vadd.f32 0.0, %v1019
        %1021 = vdwg.mxu0
        %1022 = vmatpush.msra.mxu0 0.0
        %1023 = vmatpush.msra.mxu0 0.0
        %1024 = vmatpush.msra.mxu0 0.0
        %1025 = vmatpush.msra.mxu0 0.0
        %1026 = vmatpush.msra.mxu0 0.0
        %1027 = vmatpush.msra.mxu0 0.0
        %1028 = vmatpush.msra.mxu0 0.0
        %1029 = vmatpush.msra.mxu0 0.0
        %1030 = vmatpush.msra.mxu0 0.0
        %1031 = vmatpush.msra.mxu0 0.0
        %1032 = vmatpush.msra.mxu0 0.0
        %1033 = vmatpush.msra.mxu0 0.0
        %1034 = vmatpush.msra.mxu0 0.0
        %1035 = vmatpush.msra.mxu0 0.0
        %1036 = vmatpush.msra.mxu0 0.0
        %1037 = vmatpush.msra.mxu0 %v975
        %1038 = vmatmul.f32.gmra.mxu0 %v980
        %v1039 = vpop.f32.mrf.mxu0
        %v1040 = vadd.f32 0.0, %v1039
        %1041 = vdwg.mxu0
        %v1042 = vadd.f32 %v959, %v1000
        %v1043 = vadd.f32 %v960, %v1020
        %v1044 = vadd.f32 %v961, %v1040
        %s1045 = scalar_lea.vmem %s2, 64
        %v1046 = vld [vmem:[%s1045] sm:$0xff]
        %1047 = vrot.lane.b32.xlu0 %v790, 109
        %v1048 = vpop.permute.xlu0 %1047
        %1049 = vrot.lane.b32.xlu0 %v791, 109
        %v1050 = vpop.permute.xlu0 %1049
        %1051 = vrot.lane.b32.xlu0 %v792, 109
        %v1052 = vpop.permute.xlu0 %1051
        %1053 = vrot.lane.b32.xlu0 %v793, 109
        %v1054 = vpop.permute.xlu0 %1053
        %vm1055 = vcmask 891904
        %v1056 = vsel %vm1055, %v1048, %v1050
        %v1057 = vsel %vm1055, %v1050, %v1052
        %v1058 = vsel %vm1055, %v1052, %v1054
        %v1063 = vsel %vm412, %v1046, 0
        %1065 = vmatpush.msra.mxu0 0.0
        %1066 = vmatpush.msra.mxu0 0.0
        %1067 = vmatpush.msra.mxu0 0.0
        %1068 = vmatpush.msra.mxu0 0.0
        %1069 = vmatpush.msra.mxu0 0.0
        %1070 = vmatpush.msra.mxu0 0.0
        %1071 = vmatpush.msra.mxu0 0.0
        %1072 = vmatpush.msra.mxu0 0.0
        %1073 = vmatpush.msra.mxu0 0.0
        %1074 = vmatpush.msra.mxu0 0.0
        %1075 = vmatpush.msra.mxu0 0.0
        %1076 = vmatpush.msra.mxu0 0.0
        %1077 = vmatpush.msra.mxu0 0.0
        %1078 = vmatpush.msra.mxu0 0.0
        %1079 = vmatpush.msra.mxu0 0.0
        %1080 = vmatpush.msra.mxu0 %v1056
        %1081 = vmatmul.f32.gmra.mxu0 %v1063
        %v1082 = vpop.f32.mrf.mxu0
        %v1083 = vadd.f32 0.0, %v1082
        %1084 = vdwg.mxu0
        %1085 = vmatpush.msra.mxu0 0.0
        %1086 = vmatpush.msra.mxu0 0.0
        %1087 = vmatpush.msra.mxu0 0.0
        %1088 = vmatpush.msra.mxu0 0.0
        %1089 = vmatpush.msra.mxu0 0.0
        %1090 = vmatpush.msra.mxu0 0.0
        %1091 = vmatpush.msra.mxu0 0.0
        %1092 = vmatpush.msra.mxu0 0.0
        %1093 = vmatpush.msra.mxu0 0.0
        %1094 = vmatpush.msra.mxu0 0.0
        %1095 = vmatpush.msra.mxu0 0.0
        %1096 = vmatpush.msra.mxu0 0.0
        %1097 = vmatpush.msra.mxu0 0.0
        %1098 = vmatpush.msra.mxu0 0.0
        %1099 = vmatpush.msra.mxu0 0.0
        %1100 = vmatpush.msra.mxu0 %v1057
        %1101 = vmatmul.f32.gmra.mxu0 %v1063
        %v1102 = vpop.f32.mrf.mxu0
        %v1103 = vadd.f32 0.0, %v1102
        %1104 = vdwg.mxu0
        %1105 = vmatpush.msra.mxu0 0.0
        %1106 = vmatpush.msra.mxu0 0.0
        %1107 = vmatpush.msra.mxu0 0.0
        %1108 = vmatpush.msra.mxu0 0.0
        %1109 = vmatpush.msra.mxu0 0.0
        %1110 = vmatpush.msra.mxu0 0.0
        %1111 = vmatpush.msra.mxu0 0.0
        %1112 = vmatpush.msra.mxu0 0.0
        %1113 = vmatpush.msra.mxu0 0.0
        %1114 = vmatpush.msra.mxu0 0.0
        %1115 = vmatpush.msra.mxu0 0.0
        %1116 = vmatpush.msra.mxu0 0.0
        %1117 = vmatpush.msra.mxu0 0.0
        %1118 = vmatpush.msra.mxu0 0.0
        %1119 = vmatpush.msra.mxu0 0.0
        %1120 = vmatpush.msra.mxu0 %v1058
        %1121 = vmatmul.f32.gmra.mxu0 %v1063
        %v1122 = vpop.f32.mrf.mxu0
        %v1123 = vadd.f32 0.0, %v1122
        %1124 = vdwg.mxu0
        %v1125 = vadd.f32 %v1042, %v1083
        %v1126 = vadd.f32 %v1043, %v1103
        %v1127 = vadd.f32 %v1044, %v1123
        %v1128 = vld [vmem:[%s3] sm:$0xff]
        %1130 = vset.pattern.permute.xlu0 0
        %1131 = vperm.xlu0 %1130, %v1128
        %v1132 = vpop.permute.xlu0 %1131
        %v1134 = vadd.f32 %v1125, %v1132
        %v1135 = vadd.f32 %v1126, %v1132
        %v1136 = vadd.f32 %v1127, %v1132
        %vm1137 = vcmp.ge.f32.partialorder %v1134, 0.0
        %vm1138 = vcmp.ge.f32.partialorder %v1135, 0.0
        %vm1139 = vcmp.ge.f32.partialorder %v1136, 0.0
        %v1140 = vmul.f32 %v1134, 0.1
        %v1141 = vmul.f32 %v1135, 0.1
        %v1142 = vmul.f32 %v1136, 0.1
        %v1143 = vsel %vm1137, %v1134, %v1140
        %v1144 = vsel %vm1138, %v1135, %v1141
        %v1145 = vsel %vm1139, %v1136, %v1142
        %v1146 = vsel %vm385, 1, 0
        %v1147 = vperm.slane %v1146, 0
        %v1148 = vperm.slane %v1146, 1
        %v1149 = vperm.slane %v1146, 2
        %vm1150 = vcmp.eq.s32.totalorder %v1147, 1
        %vm1151 = vcmp.eq.s32.totalorder %v1148, 1
        %vm1152 = vcmp.eq.s32.totalorder %v1149, 1
        %v1153 = vsel %vm1150, %v1143, 0.0
        %v1154 = vsel %vm1151, %v1144, 0.0
        %v1155 = vsel %vm1152, %v1145, 0.0
        %1156 = vst [vmem:[#allocation2 + $0x30] sm:$0xff] %v1153
        %1157 = vst [vmem:[#allocation2 + $0x38] sm:$0xff] %v1154
        %1158 = vst [vmem:[#allocation2 + $0x40] sm:$0xff] %v1155
        %v1159 = vld [vmem:[%s4] sm:$0xff]
        %v1160 = vld [vmem:[#allocation2] sm:$0xff]
        %v1161 = vld [vmem:[#allocation2 + $0x8] sm:$0xff]
        %v1162 = vld [vmem:[#allocation2 + $0x10] sm:$0xff]
        %v1163 = vld [vmem:[#allocation2 + $0x18] sm:$0xff]
        %v1164 = vld [vmem:[#allocation2 + $0x28] sm:$0xff]
        %v1165 = vld [vmem:[#allocation2 + $0x30] sm:$0xff]
        %v1166 = vld [vmem:[#allocation2 + $0x38] sm:$0xff]
        %v1167 = vld [vmem:[#allocation2 + $0x40] sm:$0xff]
        %s1168 = scalar_lea.vmem %s4, 8
        %v1169 = vld [vmem:[%s1168] sm:$0xff]
        %1178 = vrot.lane.b32.xlu0 %v1160, 18
        %v1179 = vpop.permute.xlu0 %1178
        %1180 = vrot.lane.b32.xlu0 %v1161, 18
        %v1181 = vpop.permute.xlu0 %1180
        %1182 = vrot.lane.b32.xlu0 %v1162, 18
        %v1183 = vpop.permute.xlu0 %1182
        %1184 = vrot.lane.b32.xlu0 %v1163, 18
        %v1185 = vpop.permute.xlu0 %1184
        %1186 = vrot.lane.b32.xlu0 %v1164, 18
        %v1187 = vpop.permute.xlu0 %1186
        %1188 = vrot.lane.b32.xlu0 %v1165, 18
        %v1189 = vpop.permute.xlu0 %1188
        %1190 = vrot.lane.b32.xlu0 %v1166, 18
        %v1191 = vpop.permute.xlu0 %1190
        %1192 = vrot.lane.b32.xlu0 %v1167, 18
        %v1193 = vpop.permute.xlu0 %1192
        %v1194 = vsel %vm405, %v1179, %v1181
        %v1195 = vsel %vm405, %v1181, %v1183
        %v1196 = vsel %vm405, %v1183, %v1185
        %v1197 = vsel %vm405, %v1187, %v1189
        %v1198 = vsel %vm405, %v1189, %v1191
        %v1199 = vsel %vm405, %v1191, %v1193
        %vm1206 = vcmask 130048
        %v1208 = vsel %vm1206, %v1169, 0
        %1210 = vmatpush.msra.mxu0 0.0
        %1211 = vmatpush.msra.mxu0 0.0
        %1212 = vmatpush.msra.mxu0 0.0
        %1213 = vmatpush.msra.mxu0 0.0
        %1214 = vmatpush.msra.mxu0 0.0
        %1215 = vmatpush.msra.mxu0 0.0
        %1216 = vmatpush.msra.mxu0 0.0
        %1217 = vmatpush.msra.mxu0 0.0
        %1218 = vmatpush.msra.mxu0 0.0
        %1219 = vmatpush.msra.mxu0 0.0
        %1220 = vmatpush.msra.mxu0 0.0
        %1221 = vmatpush.msra.mxu0 0.0
        %1222 = vmatpush.msra.mxu0 0.0
        %1223 = vmatpush.msra.mxu0 0.0
        %1224 = vmatpush.msra.mxu0 %v1197
        %1225 = vmatpush.msra.mxu0 %v1194
        %1226 = vmatmul.f32.gmra.mxu0 %v1208
        %v1227 = vpop.f32.mrf.mxu0
        %v1228 = vadd.f32 0.0, %v1227
        %1229 = vdwg.mxu0
        %1230 = vmatpush.msra.mxu0 0.0
        %1231 = vmatpush.msra.mxu0 0.0
        %1232 = vmatpush.msra.mxu0 0.0
        %1233 = vmatpush.msra.mxu0 0.0
        %1234 = vmatpush.msra.mxu0 0.0
        %1235 = vmatpush.msra.mxu0 0.0
        %1236 = vmatpush.msra.mxu0 0.0
        %1237 = vmatpush.msra.mxu0 0.0
        %1238 = vmatpush.msra.mxu0 0.0
        %1239 = vmatpush.msra.mxu0 0.0
        %1240 = vmatpush.msra.mxu0 0.0
        %1241 = vmatpush.msra.mxu0 0.0
        %1242 = vmatpush.msra.mxu0 0.0
        %1243 = vmatpush.msra.mxu0 0.0
        %1244 = vmatpush.msra.mxu0 %v1198
        %1245 = vmatpush.msra.mxu0 %v1195
        %1246 = vmatmul.f32.gmra.mxu0 %v1208
        %v1247 = vpop.f32.mrf.mxu0
        %v1248 = vadd.f32 0.0, %v1247
        %1249 = vdwg.mxu0
        %1250 = vmatpush.msra.mxu0 0.0
        %1251 = vmatpush.msra.mxu0 0.0
        %1252 = vmatpush.msra.mxu0 0.0
        %1253 = vmatpush.msra.mxu0 0.0
        %1254 = vmatpush.msra.mxu0 0.0
        %1255 = vmatpush.msra.mxu0 0.0
        %1256 = vmatpush.msra.mxu0 0.0
        %1257 = vmatpush.msra.mxu0 0.0
        %1258 = vmatpush.msra.mxu0 0.0
        %1259 = vmatpush.msra.mxu0 0.0
        %1260 = vmatpush.msra.mxu0 0.0
        %1261 = vmatpush.msra.mxu0 0.0
        %1262 = vmatpush.msra.mxu0 0.0
        %1263 = vmatpush.msra.mxu0 0.0
        %1264 = vmatpush.msra.mxu0 %v1199
        %1265 = vmatpush.msra.mxu0 %v1196
        %1266 = vmatmul.f32.gmra.mxu0 %v1208
        %v1267 = vpop.f32.mrf.mxu0
        %v1268 = vadd.f32 0.0, %v1267
        %1269 = vdwg.mxu0
        %1270 = vrot.lane.b32.xlu0 %v1160, 19
        %v1271 = vpop.permute.xlu0 %1270
        %1272 = vrot.lane.b32.xlu0 %v1161, 19
        %v1273 = vpop.permute.xlu0 %1272
        %1274 = vrot.lane.b32.xlu0 %v1162, 19
        %v1275 = vpop.permute.xlu0 %1274
        %1276 = vrot.lane.b32.xlu0 %v1163, 19
        %v1277 = vpop.permute.xlu0 %1276
        %1278 = vrot.lane.b32.xlu0 %v1164, 19
        %v1279 = vpop.permute.xlu0 %1278
        %1280 = vrot.lane.b32.xlu0 %v1165, 19
        %v1281 = vpop.permute.xlu0 %1280
        %1282 = vrot.lane.b32.xlu0 %v1166, 19
        %v1283 = vpop.permute.xlu0 %1282
        %1284 = vrot.lane.b32.xlu0 %v1167, 19
        %v1285 = vpop.permute.xlu0 %1284
        %v1286 = vsel %vm484, %v1271, %v1273
        %v1287 = vsel %vm484, %v1273, %v1275
        %v1288 = vsel %vm484, %v1275, %v1277
        %v1289 = vsel %vm484, %v1279, %v1281
        %v1290 = vsel %vm484, %v1281, %v1283
        %v1291 = vsel %vm484, %v1283, %v1285
        %v1299 = vsel %vm1206, %v1159, 0
        %1301 = vmatpush.msra.mxu0 0.0
        %1302 = vmatpush.msra.mxu0 0.0
        %1303 = vmatpush.msra.mxu0 0.0
        %1304 = vmatpush.msra.mxu0 0.0
        %1305 = vmatpush.msra.mxu0 0.0
        %1306 = vmatpush.msra.mxu0 0.0
        %1307 = vmatpush.msra.mxu0 0.0
        %1308 = vmatpush.msra.mxu0 0.0
        %1309 = vmatpush.msra.mxu0 0.0
        %1310 = vmatpush.msra.mxu0 0.0
        %1311 = vmatpush.msra.mxu0 0.0
        %1312 = vmatpush.msra.mxu0 0.0
        %1313 = vmatpush.msra.mxu0 0.0
        %1314 = vmatpush.msra.mxu0 0.0
        %1315 = vmatpush.msra.mxu0 %v1289
        %1316 = vmatpush.msra.mxu0 %v1286
        %1317 = vmatmul.f32.gmra.mxu0 %v1299
        %v1318 = vpop.f32.mrf.mxu0
        %v1319 = vadd.f32 %v1228, %v1318
        %1320 = vdwg.mxu0
        %1321 = vmatpush.msra.mxu0 0.0
        %1322 = vmatpush.msra.mxu0 0.0
        %1323 = vmatpush.msra.mxu0 0.0
        %1324 = vmatpush.msra.mxu0 0.0
        %1325 = vmatpush.msra.mxu0 0.0
        %1326 = vmatpush.msra.mxu0 0.0
        %1327 = vmatpush.msra.mxu0 0.0
        %1328 = vmatpush.msra.mxu0 0.0
        %1329 = vmatpush.msra.mxu0 0.0
        %1330 = vmatpush.msra.mxu0 0.0
        %1331 = vmatpush.msra.mxu0 0.0
        %1332 = vmatpush.msra.mxu0 0.0
        %1333 = vmatpush.msra.mxu0 0.0
        %1334 = vmatpush.msra.mxu0 0.0
        %1335 = vmatpush.msra.mxu0 %v1290
        %1336 = vmatpush.msra.mxu0 %v1287
        %1337 = vmatmul.f32.gmra.mxu0 %v1299
        %v1338 = vpop.f32.mrf.mxu0
        %v1339 = vadd.f32 %v1248, %v1338
        %1340 = vdwg.mxu0
        %1341 = vmatpush.msra.mxu0 0.0
        %1342 = vmatpush.msra.mxu0 0.0
        %1343 = vmatpush.msra.mxu0 0.0
        %1344 = vmatpush.msra.mxu0 0.0
        %1345 = vmatpush.msra.mxu0 0.0
        %1346 = vmatpush.msra.mxu0 0.0
        %1347 = vmatpush.msra.mxu0 0.0
        %1348 = vmatpush.msra.mxu0 0.0
        %1349 = vmatpush.msra.mxu0 0.0
        %1350 = vmatpush.msra.mxu0 0.0
        %1351 = vmatpush.msra.mxu0 0.0
        %1352 = vmatpush.msra.mxu0 0.0
        %1353 = vmatpush.msra.mxu0 0.0
        %1354 = vmatpush.msra.mxu0 0.0
        %1355 = vmatpush.msra.mxu0 %v1291
        %1356 = vmatpush.msra.mxu0 %v1288
        %1357 = vmatmul.f32.gmra.mxu0 %v1299
        %v1358 = vpop.f32.mrf.mxu0
        %v1359 = vadd.f32 %v1268, %v1358
        %1360 = vdwg.mxu0
        %s1361 = scalar_lea.vmem %s4, 16
        %v1362 = vld [vmem:[%s1361] sm:$0xff]
        %1363 = vrot.lane.b32.xlu0 %v1160, 17
        %v1364 = vpop.permute.xlu0 %1363
        %1365 = vrot.lane.b32.xlu0 %v1161, 17
        %v1366 = vpop.permute.xlu0 %1365
        %1367 = vrot.lane.b32.xlu0 %v1162, 17
        %v1368 = vpop.permute.xlu0 %1367
        %1369 = vrot.lane.b32.xlu0 %v1163, 17
        %v1370 = vpop.permute.xlu0 %1369
        %1371 = vrot.lane.b32.xlu0 %v1164, 17
        %v1372 = vpop.permute.xlu0 %1371
        %1373 = vrot.lane.b32.xlu0 %v1165, 17
        %v1374 = vpop.permute.xlu0 %1373
        %1375 = vrot.lane.b32.xlu0 %v1166, 17
        %v1376 = vpop.permute.xlu0 %1375
        %1377 = vrot.lane.b32.xlu0 %v1167, 17
        %v1378 = vpop.permute.xlu0 %1377
        %v1379 = vsel %vm564, %v1364, %v1366
        %v1380 = vsel %vm564, %v1366, %v1368
        %v1381 = vsel %vm564, %v1368, %v1370
        %v1382 = vsel %vm564, %v1372, %v1374
        %v1383 = vsel %vm564, %v1374, %v1376
        %v1384 = vsel %vm564, %v1376, %v1378
        %v1392 = vsel %vm1206, %v1362, 0
        %1394 = vmatpush.msra.mxu0 0.0
        %1395 = vmatpush.msra.mxu0 0.0
        %1396 = vmatpush.msra.mxu0 0.0
        %1397 = vmatpush.msra.mxu0 0.0
        %1398 = vmatpush.msra.mxu0 0.0
        %1399 = vmatpush.msra.mxu0 0.0
        %1400 = vmatpush.msra.mxu0 0.0
        %1401 = vmatpush.msra.mxu0 0.0
        %1402 = vmatpush.msra.mxu0 0.0
        %1403 = vmatpush.msra.mxu0 0.0
        %1404 = vmatpush.msra.mxu0 0.0
        %1405 = vmatpush.msra.mxu0 0.0
        %1406 = vmatpush.msra.mxu0 0.0
        %1407 = vmatpush.msra.mxu0 0.0
        %1408 = vmatpush.msra.mxu0 %v1382
        %1409 = vmatpush.msra.mxu0 %v1379
        %1410 = vmatmul.f32.gmra.mxu0 %v1392
        %v1411 = vpop.f32.mrf.mxu0
        %v1412 = vadd.f32 0.0, %v1411
        %1413 = vdwg.mxu0
        %1414 = vmatpush.msra.mxu0 0.0
        %1415 = vmatpush.msra.mxu0 0.0
        %1416 = vmatpush.msra.mxu0 0.0
        %1417 = vmatpush.msra.mxu0 0.0
        %1418 = vmatpush.msra.mxu0 0.0
        %1419 = vmatpush.msra.mxu0 0.0
        %1420 = vmatpush.msra.mxu0 0.0
        %1421 = vmatpush.msra.mxu0 0.0
        %1422 = vmatpush.msra.mxu0 0.0
        %1423 = vmatpush.msra.mxu0 0.0
        %1424 = vmatpush.msra.mxu0 0.0
        %1425 = vmatpush.msra.mxu0 0.0
        %1426 = vmatpush.msra.mxu0 0.0
        %1427 = vmatpush.msra.mxu0 0.0
        %1428 = vmatpush.msra.mxu0 %v1383
        %1429 = vmatpush.msra.mxu0 %v1380
        %1430 = vmatmul.f32.gmra.mxu0 %v1392
        %v1431 = vpop.f32.mrf.mxu0
        %v1432 = vadd.f32 0.0, %v1431
        %1433 = vdwg.mxu0
        %1434 = vmatpush.msra.mxu0 0.0
        %1435 = vmatpush.msra.mxu0 0.0
        %1436 = vmatpush.msra.mxu0 0.0
        %1437 = vmatpush.msra.mxu0 0.0
        %1438 = vmatpush.msra.mxu0 0.0
        %1439 = vmatpush.msra.mxu0 0.0
        %1440 = vmatpush.msra.mxu0 0.0
        %1441 = vmatpush.msra.mxu0 0.0
        %1442 = vmatpush.msra.mxu0 0.0
        %1443 = vmatpush.msra.mxu0 0.0
        %1444 = vmatpush.msra.mxu0 0.0
        %1445 = vmatpush.msra.mxu0 0.0
        %1446 = vmatpush.msra.mxu0 0.0
        %1447 = vmatpush.msra.mxu0 0.0
        %1448 = vmatpush.msra.mxu0 %v1384
        %1449 = vmatpush.msra.mxu0 %v1381
        %1450 = vmatmul.f32.gmra.mxu0 %v1392
        %v1451 = vpop.f32.mrf.mxu0
        %v1452 = vadd.f32 0.0, %v1451
        %1453 = vdwg.mxu0
        %v1454 = vadd.f32 %v1319, %v1412
        %v1455 = vadd.f32 %v1339, %v1432
        %v1456 = vadd.f32 %v1359, %v1452
        %s1457 = scalar_lea.vmem %s4, 24
        %v1458 = vld [vmem:[%s1457] sm:$0xff]
        %1459 = vrot.lane.b32.xlu0 %v1160, 1
        %v1460 = vpop.permute.xlu0 %1459
        %1461 = vrot.lane.b32.xlu0 %v1161, 1
        %v1462 = vpop.permute.xlu0 %1461
        %1463 = vrot.lane.b32.xlu0 %v1162, 1
        %v1464 = vpop.permute.xlu0 %1463
        %1465 = vrot.lane.b32.xlu0 %v1163, 1
        %v1466 = vpop.permute.xlu0 %1465
        %1467 = vrot.lane.b32.xlu0 %v1164, 1
        %v1468 = vpop.permute.xlu0 %1467
        %1469 = vrot.lane.b32.xlu0 %v1165, 1
        %v1470 = vpop.permute.xlu0 %1469
        %1471 = vrot.lane.b32.xlu0 %v1166, 1
        %v1472 = vpop.permute.xlu0 %1471
        %1473 = vrot.lane.b32.xlu0 %v1167, 1
        %v1474 = vpop.permute.xlu0 %1473
        %v1475 = vsel %vm647, %v1460, %v1462
        %v1476 = vsel %vm647, %v1462, %v1464
        %v1477 = vsel %vm647, %v1464, %v1466
        %v1478 = vsel %vm647, %v1468, %v1470
        %v1479 = vsel %vm647, %v1470, %v1472
        %v1480 = vsel %vm647, %v1472, %v1474
        %v1488 = vsel %vm1206, %v1458, 0
        %1490 = vmatpush.msra.mxu0 0.0
        %1491 = vmatpush.msra.mxu0 0.0
        %1492 = vmatpush.msra.mxu0 0.0
        %1493 = vmatpush.msra.mxu0 0.0
        %1494 = vmatpush.msra.mxu0 0.0
        %1495 = vmatpush.msra.mxu0 0.0
        %1496 = vmatpush.msra.mxu0 0.0
        %1497 = vmatpush.msra.mxu0 0.0
        %1498 = vmatpush.msra.mxu0 0.0
        %1499 = vmatpush.msra.mxu0 0.0
        %1500 = vmatpush.msra.mxu0 0.0
        %1501 = vmatpush.msra.mxu0 0.0
        %1502 = vmatpush.msra.mxu0 0.0
        %1503 = vmatpush.msra.mxu0 0.0
        %1504 = vmatpush.msra.mxu0 %v1478
        %1505 = vmatpush.msra.mxu0 %v1475
        %1506 = vmatmul.f32.gmra.mxu0 %v1488
        %v1507 = vpop.f32.mrf.mxu0
        %v1508 = vadd.f32 0.0, %v1507
        %1509 = vdwg.mxu0
        %1510 = vmatpush.msra.mxu0 0.0
        %1511 = vmatpush.msra.mxu0 0.0
        %1512 = vmatpush.msra.mxu0 0.0
        %1513 = vmatpush.msra.mxu0 0.0
        %1514 = vmatpush.msra.mxu0 0.0
        %1515 = vmatpush.msra.mxu0 0.0
        %1516 = vmatpush.msra.mxu0 0.0
        %1517 = vmatpush.msra.mxu0 0.0
        %1518 = vmatpush.msra.mxu0 0.0
        %1519 = vmatpush.msra.mxu0 0.0
        %1520 = vmatpush.msra.mxu0 0.0
        %1521 = vmatpush.msra.mxu0 0.0
        %1522 = vmatpush.msra.mxu0 0.0
        %1523 = vmatpush.msra.mxu0 0.0
        %1524 = vmatpush.msra.mxu0 %v1479
        %1525 = vmatpush.msra.mxu0 %v1476
        %1526 = vmatmul.f32.gmra.mxu0 %v1488
        %v1527 = vpop.f32.mrf.mxu0
        %v1528 = vadd.f32 0.0, %v1527
        %1529 = vdwg.mxu0
        %1530 = vmatpush.msra.mxu0 0.0
        %1531 = vmatpush.msra.mxu0 0.0
        %1532 = vmatpush.msra.mxu0 0.0
        %1533 = vmatpush.msra.mxu0 0.0
        %1534 = vmatpush.msra.mxu0 0.0
        %1535 = vmatpush.msra.mxu0 0.0
        %1536 = vmatpush.msra.mxu0 0.0
        %1537 = vmatpush.msra.mxu0 0.0
        %1538 = vmatpush.msra.mxu0 0.0
        %1539 = vmatpush.msra.mxu0 0.0
        %1540 = vmatpush.msra.mxu0 0.0
        %1541 = vmatpush.msra.mxu0 0.0
        %1542 = vmatpush.msra.mxu0 0.0
        %1543 = vmatpush.msra.mxu0 0.0
        %1544 = vmatpush.msra.mxu0 %v1480
        %1545 = vmatpush.msra.mxu0 %v1477
        %1546 = vmatmul.f32.gmra.mxu0 %v1488
        %v1547 = vpop.f32.mrf.mxu0
        %v1548 = vadd.f32 0.0, %v1547
        %1549 = vdwg.mxu0
        %v1550 = vadd.f32 %v1454, %v1508
        %v1551 = vadd.f32 %v1455, %v1528
        %v1552 = vadd.f32 %v1456, %v1548
        %s1553 = scalar_lea.vmem %s4, 32
        %v1554 = vld [vmem:[%s1553] sm:$0xff]
        %v1556 = vsel %vm1206, %v1554, 0
        %1558 = vmatpush.msra.mxu0 0.0
        %1559 = vmatpush.msra.mxu0 0.0
        %1560 = vmatpush.msra.mxu0 0.0
        %1561 = vmatpush.msra.mxu0 0.0
        %1562 = vmatpush.msra.mxu0 0.0
        %1563 = vmatpush.msra.mxu0 0.0
        %1564 = vmatpush.msra.mxu0 0.0
        %1565 = vmatpush.msra.mxu0 0.0
        %1566 = vmatpush.msra.mxu0 0.0
        %1567 = vmatpush.msra.mxu0 0.0
        %1568 = vmatpush.msra.mxu0 0.0
        %1569 = vmatpush.msra.mxu0 0.0
        %1570 = vmatpush.msra.mxu0 0.0
        %1571 = vmatpush.msra.mxu0 0.0
        %1572 = vmatpush.msra.mxu0 %v1165
        %1573 = vmatpush.msra.mxu0 %v1161
        %1574 = vmatmul.f32.gmra.mxu0 %v1556
        %v1575 = vpop.f32.mrf.mxu0
        %v1576 = vadd.f32 0.0, %v1575
        %1577 = vdwg.mxu0
        %1578 = vmatpush.msra.mxu0 0.0
        %1579 = vmatpush.msra.mxu0 0.0
        %1580 = vmatpush.msra.mxu0 0.0
        %1581 = vmatpush.msra.mxu0 0.0
        %1582 = vmatpush.msra.mxu0 0.0
        %1583 = vmatpush.msra.mxu0 0.0
        %1584 = vmatpush.msra.mxu0 0.0
        %1585 = vmatpush.msra.mxu0 0.0
        %1586 = vmatpush.msra.mxu0 0.0
        %1587 = vmatpush.msra.mxu0 0.0
        %1588 = vmatpush.msra.mxu0 0.0
        %1589 = vmatpush.msra.mxu0 0.0
        %1590 = vmatpush.msra.mxu0 0.0
        %1591 = vmatpush.msra.mxu0 0.0
        %1592 = vmatpush.msra.mxu0 %v1166
        %1593 = vmatpush.msra.mxu0 %v1162
        %1594 = vmatmul.f32.gmra.mxu0 %v1556
        %v1595 = vpop.f32.mrf.mxu0
        %v1596 = vadd.f32 0.0, %v1595
        %1597 = vdwg.mxu0
        %1598 = vmatpush.msra.mxu0 0.0
        %1599 = vmatpush.msra.mxu0 0.0
        %1600 = vmatpush.msra.mxu0 0.0
        %1601 = vmatpush.msra.mxu0 0.0
        %1602 = vmatpush.msra.mxu0 0.0
        %1603 = vmatpush.msra.mxu0 0.0
        %1604 = vmatpush.msra.mxu0 0.0
        %1605 = vmatpush.msra.mxu0 0.0
        %1606 = vmatpush.msra.mxu0 0.0
        %1607 = vmatpush.msra.mxu0 0.0
        %1608 = vmatpush.msra.mxu0 0.0
        %1609 = vmatpush.msra.mxu0 0.0
        %1610 = vmatpush.msra.mxu0 0.0
        %1611 = vmatpush.msra.mxu0 0.0
        %1612 = vmatpush.msra.mxu0 %v1167
        %1613 = vmatpush.msra.mxu0 %v1163
        %1614 = vmatmul.f32.gmra.mxu0 %v1556
        %v1615 = vpop.f32.mrf.mxu0
        %v1616 = vadd.f32 0.0, %v1615
        %1617 = vdwg.mxu0
        %v1618 = vadd.f32 %v1550, %v1576
        %v1619 = vadd.f32 %v1551, %v1596
        %v1620 = vadd.f32 %v1552, %v1616
        %s1621 = scalar_lea.vmem %s4, 40
        %v1622 = vld [vmem:[%s1621] sm:$0xff]
        %v1623 = vld [vmem:[#allocation2 + $0x8] sm:$0xff]
        %v1624 = vld [vmem:[#allocation2 + $0x10] sm:$0xff]
        %v1625 = vld [vmem:[#allocation2 + $0x18] sm:$0xff]
        %v1626 = vld [vmem:[#allocation2 + $0x20] sm:$0xff]
        %v1627 = vld [vmem:[#allocation2 + $0x30] sm:$0xff]
        %v1628 = vld [vmem:[#allocation2 + $0x38] sm:$0xff]
        %v1629 = vld [vmem:[#allocation2 + $0x40] sm:$0xff]
        %v1630 = vld [vmem:[#allocation2 + $0x48] sm:$0xff]
        %1639 = vrot.lane.b32.xlu0 %v1623, 127
        %v1640 = vpop.permute.xlu0 %1639
        %1641 = vrot.lane.b32.xlu0 %v1624, 127
        %v1642 = vpop.permute.xlu0 %1641
        %1643 = vrot.lane.b32.xlu0 %v1625, 127
        %v1644 = vpop.permute.xlu0 %1643
        %1645 = vrot.lane.b32.xlu0 %v1626, 127
        %v1646 = vpop.permute.xlu0 %1645
        %1647 = vrot.lane.b32.xlu0 %v1627, 127
        %v1648 = vpop.permute.xlu0 %1647
        %1649 = vrot.lane.b32.xlu0 %v1628, 127
        %v1650 = vpop.permute.xlu0 %1649
        %1651 = vrot.lane.b32.xlu0 %v1629, 127
        %v1652 = vpop.permute.xlu0 %1651
        %1653 = vrot.lane.b32.xlu0 %v1630, 127
        %v1654 = vpop.permute.xlu0 %1653
        %v1655 = vsel %vm806, %v1640, %v1642
        %v1656 = vsel %vm806, %v1642, %v1644
        %v1657 = vsel %vm806, %v1644, %v1646
        %v1658 = vsel %vm806, %v1648, %v1650
        %v1659 = vsel %vm806, %v1650, %v1652
        %v1660 = vsel %vm806, %v1652, %v1654
        %v1668 = vsel %vm1206, %v1622, 0
        %1670 = vmatpush.msra.mxu0 0.0
        %1671 = vmatpush.msra.mxu0 0.0
        %1672 = vmatpush.msra.mxu0 0.0
        %1673 = vmatpush.msra.mxu0 0.0
        %1674 = vmatpush.msra.mxu0 0.0
        %1675 = vmatpush.msra.mxu0 0.0
        %1676 = vmatpush.msra.mxu0 0.0
        %1677 = vmatpush.msra.mxu0 0.0
        %1678 = vmatpush.msra.mxu0 0.0
        %1679 = vmatpush.msra.mxu0 0.0
        %1680 = vmatpush.msra.mxu0 0.0
        %1681 = vmatpush.msra.mxu0 0.0
        %1682 = vmatpush.msra.mxu0 0.0
        %1683 = vmatpush.msra.mxu0 0.0
        %1684 = vmatpush.msra.mxu0 %v1658
        %1685 = vmatpush.msra.mxu0 %v1655
        %1686 = vmatmul.f32.gmra.mxu0 %v1668
        %v1687 = vpop.f32.mrf.mxu0
        %v1688 = vadd.f32 0.0, %v1687
        %1689 = vdwg.mxu0
        %1690 = vmatpush.msra.mxu0 0.0
        %1691 = vmatpush.msra.mxu0 0.0
        %1692 = vmatpush.msra.mxu0 0.0
        %1693 = vmatpush.msra.mxu0 0.0
        %1694 = vmatpush.msra.mxu0 0.0
        %1695 = vmatpush.msra.mxu0 0.0
        %1696 = vmatpush.msra.mxu0 0.0
        %1697 = vmatpush.msra.mxu0 0.0
        %1698 = vmatpush.msra.mxu0 0.0
        %1699 = vmatpush.msra.mxu0 0.0
        %1700 = vmatpush.msra.mxu0 0.0
        %1701 = vmatpush.msra.mxu0 0.0
        %1702 = vmatpush.msra.mxu0 0.0
        %1703 = vmatpush.msra.mxu0 0.0
        %1704 = vmatpush.msra.mxu0 %v1659
        %1705 = vmatpush.msra.mxu0 %v1656
        %1706 = vmatmul.f32.gmra.mxu0 %v1668
        %v1707 = vpop.f32.mrf.mxu0
        %v1708 = vadd.f32 0.0, %v1707
        %1709 = vdwg.mxu0
        %1710 = vmatpush.msra.mxu0 0.0
        %1711 = vmatpush.msra.mxu0 0.0
        %1712 = vmatpush.msra.mxu0 0.0
        %1713 = vmatpush.msra.mxu0 0.0
        %1714 = vmatpush.msra.mxu0 0.0
        %1715 = vmatpush.msra.mxu0 0.0
        %1716 = vmatpush.msra.mxu0 0.0
        %1717 = vmatpush.msra.mxu0 0.0
        %1718 = vmatpush.msra.mxu0 0.0
        %1719 = vmatpush.msra.mxu0 0.0
        %1720 = vmatpush.msra.mxu0 0.0
        %1721 = vmatpush.msra.mxu0 0.0
        %1722 = vmatpush.msra.mxu0 0.0
        %1723 = vmatpush.msra.mxu0 0.0
        %1724 = vmatpush.msra.mxu0 %v1660
        %1725 = vmatpush.msra.mxu0 %v1657
        %1726 = vmatmul.f32.gmra.mxu0 %v1668
        %v1727 = vpop.f32.mrf.mxu0
        %v1728 = vadd.f32 0.0, %v1727
        %1729 = vdwg.mxu0
        %v1730 = vadd.f32 %v1618, %v1688
        %v1731 = vadd.f32 %v1619, %v1708
        %v1732 = vadd.f32 %v1620, %v1728
        %s1733 = scalar_lea.vmem %s4, 48
        %v1734 = vld [vmem:[%s1733] sm:$0xff]
        %1735 = vrot.lane.b32.xlu0 %v1623, 111
        %v1736 = vpop.permute.xlu0 %1735
        %1737 = vrot.lane.b32.xlu0 %v1624, 111
        %v1738 = vpop.permute.xlu0 %1737
        %1739 = vrot.lane.b32.xlu0 %v1625, 111
        %v1740 = vpop.permute.xlu0 %1739
        %1741 = vrot.lane.b32.xlu0 %v1626, 111
        %v1742 = vpop.permute.xlu0 %1741
        %1743 = vrot.lane.b32.xlu0 %v1627, 111
        %v1744 = vpop.permute.xlu0 %1743
        %1745 = vrot.lane.b32.xlu0 %v1628, 111
        %v1746 = vpop.permute.xlu0 %1745
        %1747 = vrot.lane.b32.xlu0 %v1629, 111
        %v1748 = vpop.permute.xlu0 %1747
        %1749 = vrot.lane.b32.xlu0 %v1630, 111
        %v1750 = vpop.permute.xlu0 %1749
        %v1751 = vsel %vm889, %v1736, %v1738
        %v1752 = vsel %vm889, %v1738, %v1740
        %v1753 = vsel %vm889, %v1740, %v1742
        %v1754 = vsel %vm889, %v1744, %v1746
        %v1755 = vsel %vm889, %v1746, %v1748
        %v1756 = vsel %vm889, %v1748, %v1750
        %v1764 = vsel %vm1206, %v1734, 0
        %1766 = vmatpush.msra.mxu0 0.0
        %1767 = vmatpush.msra.mxu0 0.0
        %1768 = vmatpush.msra.mxu0 0.0
        %1769 = vmatpush.msra.mxu0 0.0
        %1770 = vmatpush.msra.mxu0 0.0
        %1771 = vmatpush.msra.mxu0 0.0
        %1772 = vmatpush.msra.mxu0 0.0
        %1773 = vmatpush.msra.mxu0 0.0
        %1774 = vmatpush.msra.mxu0 0.0
        %1775 = vmatpush.msra.mxu0 0.0
        %1776 = vmatpush.msra.mxu0 0.0
        %1777 = vmatpush.msra.mxu0 0.0
        %1778 = vmatpush.msra.mxu0 0.0
        %1779 = vmatpush.msra.mxu0 0.0
        %1780 = vmatpush.msra.mxu0 %v1754
        %1781 = vmatpush.msra.mxu0 %v1751
        %1782 = vmatmul.f32.gmra.mxu0 %v1764
        %v1783 = vpop.f32.mrf.mxu0
        %v1784 = vadd.f32 0.0, %v1783
        %1785 = vdwg.mxu0
        %1786 = vmatpush.msra.mxu0 0.0
        %1787 = vmatpush.msra.mxu0 0.0
        %1788 = vmatpush.msra.mxu0 0.0
        %1789 = vmatpush.msra.mxu0 0.0
        %1790 = vmatpush.msra.mxu0 0.0
        %1791 = vmatpush.msra.mxu0 0.0
        %1792 = vmatpush.msra.mxu0 0.0
        %1793 = vmatpush.msra.mxu0 0.0
        %1794 = vmatpush.msra.mxu0 0.0
        %1795 = vmatpush.msra.mxu0 0.0
        %1796 = vmatpush.msra.mxu0 0.0
        %1797 = vmatpush.msra.mxu0 0.0
        %1798 = vmatpush.msra.mxu0 0.0
        %1799 = vmatpush.msra.mxu0 0.0
        %1800 = vmatpush.msra.mxu0 %v1755
        %1801 = vmatpush.msra.mxu0 %v1752
        %1802 = vmatmul.f32.gmra.mxu0 %v1764
        %v1803 = vpop.f32.mrf.mxu0
        %v1804 = vadd.f32 0.0, %v1803
        %1805 = vdwg.mxu0
        %1806 = vmatpush.msra.mxu0 0.0
        %1807 = vmatpush.msra.mxu0 0.0
        %1808 = vmatpush.msra.mxu0 0.0
        %1809 = vmatpush.msra.mxu0 0.0
        %1810 = vmatpush.msra.mxu0 0.0
        %1811 = vmatpush.msra.mxu0 0.0
        %1812 = vmatpush.msra.mxu0 0.0
        %1813 = vmatpush.msra.mxu0 0.0
        %1814 = vmatpush.msra.mxu0 0.0
        %1815 = vmatpush.msra.mxu0 0.0
        %1816 = vmatpush.msra.mxu0 0.0
        %1817 = vmatpush.msra.mxu0 0.0
        %1818 = vmatpush.msra.mxu0 0.0
        %1819 = vmatpush.msra.mxu0 0.0
        %1820 = vmatpush.msra.mxu0 %v1756
        %1821 = vmatpush.msra.mxu0 %v1753
        %1822 = vmatmul.f32.gmra.mxu0 %v1764
        %v1823 = vpop.f32.mrf.mxu0
        %v1824 = vadd.f32 0.0, %v1823
        %1825 = vdwg.mxu0
        %v1826 = vadd.f32 %v1730, %v1784
        %v1827 = vadd.f32 %v1731, %v1804
        %v1828 = vadd.f32 %v1732, %v1824
        %s1829 = scalar_lea.vmem %s4, 56
        %v1830 = vld [vmem:[%s1829] sm:$0xff]
        %1831 = vrot.lane.b32.xlu0 %v1623, 110
        %v1832 = vpop.permute.xlu0 %1831
        %1833 = vrot.lane.b32.xlu0 %v1624, 110
        %v1834 = vpop.permute.xlu0 %1833
        %1835 = vrot.lane.b32.xlu0 %v1625, 110
        %v1836 = vpop.permute.xlu0 %1835
        %1837 = vrot.lane.b32.xlu0 %v1626, 110
        %v1838 = vpop.permute.xlu0 %1837
        %1839 = vrot.lane.b32.xlu0 %v1627, 110
        %v1840 = vpop.permute.xlu0 %1839
        %1841 = vrot.lane.b32.xlu0 %v1628, 110
        %v1842 = vpop.permute.xlu0 %1841
        %1843 = vrot.lane.b32.xlu0 %v1629, 110
        %v1844 = vpop.permute.xlu0 %1843
        %1845 = vrot.lane.b32.xlu0 %v1630, 110
        %v1846 = vpop.permute.xlu0 %1845
        %v1847 = vsel %vm972, %v1832, %v1834
        %v1848 = vsel %vm972, %v1834, %v1836
        %v1849 = vsel %vm972, %v1836, %v1838
        %v1850 = vsel %vm972, %v1840, %v1842
        %v1851 = vsel %vm972, %v1842, %v1844
        %v1852 = vsel %vm972, %v1844, %v1846
        %v1860 = vsel %vm1206, %v1830, 0
        %1862 = vmatpush.msra.mxu0 0.0
        %1863 = vmatpush.msra.mxu0 0.0
        %1864 = vmatpush.msra.mxu0 0.0
        %1865 = vmatpush.msra.mxu0 0.0
        %1866 = vmatpush.msra.mxu0 0.0
        %1867 = vmatpush.msra.mxu0 0.0
        %1868 = vmatpush.msra.mxu0 0.0
        %1869 = vmatpush.msra.mxu0 0.0
        %1870 = vmatpush.msra.mxu0 0.0
        %1871 = vmatpush.msra.mxu0 0.0
        %1872 = vmatpush.msra.mxu0 0.0
        %1873 = vmatpush.msra.mxu0 0.0
        %1874 = vmatpush.msra.mxu0 0.0
        %1875 = vmatpush.msra.mxu0 0.0
        %1876 = vmatpush.msra.mxu0 %v1850
        %1877 = vmatpush.msra.mxu0 %v1847
        %1878 = vmatmul.f32.gmra.mxu0 %v1860
        %v1879 = vpop.f32.mrf.mxu0
        %v1880 = vadd.f32 0.0, %v1879
        %1881 = vdwg.mxu0
        %1882 = vmatpush.msra.mxu0 0.0
        %1883 = vmatpush.msra.mxu0 0.0
        %1884 = vmatpush.msra.mxu0 0.0
        %1885 = vmatpush.msra.mxu0 0.0
        %1886 = vmatpush.msra.mxu0 0.0
        %1887 = vmatpush.msra.mxu0 0.0
        %1888 = vmatpush.msra.mxu0 0.0
        %1889 = vmatpush.msra.mxu0 0.0
        %1890 = vmatpush.msra.mxu0 0.0
        %1891 = vmatpush.msra.mxu0 0.0
        %1892 = vmatpush.msra.mxu0 0.0
        %1893 = vmatpush.msra.mxu0 0.0
        %1894 = vmatpush.msra.mxu0 0.0
        %1895 = vmatpush.msra.mxu0 0.0
        %1896 = vmatpush.msra.mxu0 %v1851
        %1897 = vmatpush.msra.mxu0 %v1848
        %1898 = vmatmul.f32.gmra.mxu0 %v1860
        %v1899 = vpop.f32.mrf.mxu0
        %v1900 = vadd.f32 0.0, %v1899
        %1901 = vdwg.mxu0
        %1902 = vmatpush.msra.mxu0 0.0
        %1903 = vmatpush.msra.mxu0 0.0
        %1904 = vmatpush.msra.mxu0 0.0
        %1905 = vmatpush.msra.mxu0 0.0
        %1906 = vmatpush.msra.mxu0 0.0
        %1907 = vmatpush.msra.mxu0 0.0
        %1908 = vmatpush.msra.mxu0 0.0
        %1909 = vmatpush.msra.mxu0 0.0
        %1910 = vmatpush.msra.mxu0 0.0
        %1911 = vmatpush.msra.mxu0 0.0
        %1912 = vmatpush.msra.mxu0 0.0
        %1913 = vmatpush.msra.mxu0 0.0
        %1914 = vmatpush.msra.mxu0 0.0
        %1915 = vmatpush.msra.mxu0 0.0
        %1916 = vmatpush.msra.mxu0 %v1852
        %1917 = vmatpush.msra.mxu0 %v1849
        %1918 = vmatmul.f32.gmra.mxu0 %v1860
        %v1919 = vpop.f32.mrf.mxu0
        %v1920 = vadd.f32 0.0, %v1919
        %1921 = vdwg.mxu0
        %v1922 = vadd.f32 %v1826, %v1880
        %v1923 = vadd.f32 %v1827, %v1900
        %v1924 = vadd.f32 %v1828, %v1920
        %s1925 = scalar_lea.vmem %s4, 64
        %v1926 = vld [vmem:[%s1925] sm:$0xff]
        %1927 = vrot.lane.b32.xlu0 %v1623, 109
        %v1928 = vpop.permute.xlu0 %1927
        %1929 = vrot.lane.b32.xlu0 %v1624, 109
        %v1930 = vpop.permute.xlu0 %1929
        %1931 = vrot.lane.b32.xlu0 %v1625, 109
        %v1932 = vpop.permute.xlu0 %1931
        %1933 = vrot.lane.b32.xlu0 %v1626, 109
        %v1934 = vpop.permute.xlu0 %1933
        %1935 = vrot.lane.b32.xlu0 %v1627, 109
        %v1936 = vpop.permute.xlu0 %1935
        %1937 = vrot.lane.b32.xlu0 %v1628, 109
        %v1938 = vpop.permute.xlu0 %1937
        %1939 = vrot.lane.b32.xlu0 %v1629, 109
        %v1940 = vpop.permute.xlu0 %1939
        %1941 = vrot.lane.b32.xlu0 %v1630, 109
        %v1942 = vpop.permute.xlu0 %1941
        %v1943 = vsel %vm1055, %v1928, %v1930
        %v1944 = vsel %vm1055, %v1930, %v1932
        %v1945 = vsel %vm1055, %v1932, %v1934
        %v1946 = vsel %vm1055, %v1936, %v1938
        %v1947 = vsel %vm1055, %v1938, %v1940
        %v1948 = vsel %vm1055, %v1940, %v1942
        %v1956 = vsel %vm1206, %v1926, 0
        %1958 = vmatpush.msra.mxu0 0.0
        %1959 = vmatpush.msra.mxu0 0.0
        %1960 = vmatpush.msra.mxu0 0.0
        %1961 = vmatpush.msra.mxu0 0.0
        %1962 = vmatpush.msra.mxu0 0.0
        %1963 = vmatpush.msra.mxu0 0.0
        %1964 = vmatpush.msra.mxu0 0.0
        %1965 = vmatpush.msra.mxu0 0.0
        %1966 = vmatpush.msra.mxu0 0.0
        %1967 = vmatpush.msra.mxu0 0.0
        %1968 = vmatpush.msra.mxu0 0.0
        %1969 = vmatpush.msra.mxu0 0.0
        %1970 = vmatpush.msra.mxu0 0.0
        %1971 = vmatpush.msra.mxu0 0.0
        %1972 = vmatpush.msra.mxu0 %v1946
        %1973 = vmatpush.msra.mxu0 %v1943
        %1974 = vmatmul.f32.gmra.mxu0 %v1956
        %v1975 = vpop.f32.mrf.mxu0
        %v1976 = vadd.f32 0.0, %v1975
        %1977 = vdwg.mxu0
        %1978 = vmatpush.msra.mxu0 0.0
        %1979 = vmatpush.msra.mxu0 0.0
        %1980 = vmatpush.msra.mxu0 0.0
        %1981 = vmatpush.msra.mxu0 0.0
        %1982 = vmatpush.msra.mxu0 0.0
        %1983 = vmatpush.msra.mxu0 0.0
        %1984 = vmatpush.msra.mxu0 0.0
        %1985 = vmatpush.msra.mxu0 0.0
        %1986 = vmatpush.msra.mxu0 0.0
        %1987 = vmatpush.msra.mxu0 0.0
        %1988 = vmatpush.msra.mxu0 0.0
        %1989 = vmatpush.msra.mxu0 0.0
        %1990 = vmatpush.msra.mxu0 0.0
        %1991 = vmatpush.msra.mxu0 0.0
        %1992 = vmatpush.msra.mxu0 %v1947
        %1993 = vmatpush.msra.mxu0 %v1944
        %1994 = vmatmul.f32.gmra.mxu0 %v1956
        %v1995 = vpop.f32.mrf.mxu0
        %v1996 = vadd.f32 0.0, %v1995
        %1997 = vdwg.mxu0
        %1998 = vmatpush.msra.mxu0 0.0
        %1999 = vmatpush.msra.mxu0 0.0
        %2000 = vmatpush.msra.mxu0 0.0
        %2001 = vmatpush.msra.mxu0 0.0
        %2002 = vmatpush.msra.mxu0 0.0
        %2003 = vmatpush.msra.mxu0 0.0
        %2004 = vmatpush.msra.mxu0 0.0
        %2005 = vmatpush.msra.mxu0 0.0
        %2006 = vmatpush.msra.mxu0 0.0
        %2007 = vmatpush.msra.mxu0 0.0
        %2008 = vmatpush.msra.mxu0 0.0
        %2009 = vmatpush.msra.mxu0 0.0
        %2010 = vmatpush.msra.mxu0 0.0
        %2011 = vmatpush.msra.mxu0 0.0
        %2012 = vmatpush.msra.mxu0 %v1948
        %2013 = vmatpush.msra.mxu0 %v1945
        %2014 = vmatmul.f32.gmra.mxu0 %v1956
        %v2015 = vpop.f32.mrf.mxu0
        %v2016 = vadd.f32 0.0, %v2015
        %2017 = vdwg.mxu0
        %v2018 = vadd.f32 %v1922, %v1976
        %v2019 = vadd.f32 %v1923, %v1996
        %v2020 = vadd.f32 %v1924, %v2016
        %v2021 = vld [vmem:[%s5] sm:$0xff]
        %2023 = vset.pattern.permute.xlu0 0
        %2024 = vperm.xlu0 %2023, %v2021
        %v2025 = vpop.permute.xlu0 %2024
        %v2027 = vadd.f32 %v2018, %v2025
        %v2028 = vadd.f32 %v2019, %v2025
        %v2029 = vadd.f32 %v2020, %v2025
        %vm2030 = vcmp.ge.f32.partialorder %v2027, 0.0
        %vm2031 = vcmp.ge.f32.partialorder %v2028, 0.0
        %vm2032 = vcmp.ge.f32.partialorder %v2029, 0.0
        %v2033 = vmul.f32 %v2027, 0.1
        %v2034 = vmul.f32 %v2028, 0.1
        %v2035 = vmul.f32 %v2029, 0.1
        %v2036 = vsel %vm2030, %v2027, %v2033
        %v2037 = vsel %vm2031, %v2028, %v2034
        %v2038 = vsel %vm2032, %v2029, %v2035
        %v2039 = vsel %vm1150, %v2036, 0.0
        %v2040 = vsel %vm1151, %v2037, 0.0
        %v2041 = vsel %vm1152, %v2038, 0.0
        %2042 = vst [vmem:[#allocation2 + $0x58] sm:$0xff] %v2039
        %2043 = vst [vmem:[#allocation2 + $0x60] sm:$0xff] %v2040
        %2044 = vst [vmem:[#allocation2 + $0x68] sm:$0xff] %v2041
        %v2045 = vld [vmem:[%s6] sm:$0xff]
        %v2046 = vld [vmem:[#allocation2] sm:$0xff]
        %v2047 = vld [vmem:[#allocation2 + $0x8] sm:$0xff]
        %v2048 = vld [vmem:[#allocation2 + $0x10] sm:$0xff]
        %v2049 = vld [vmem:[#allocation2 + $0x18] sm:$0xff]
        %v2050 = vld [vmem:[#allocation2 + $0x28] sm:$0xff]
        %v2051 = vld [vmem:[#allocation2 + $0x30] sm:$0xff]
        %v2052 = vld [vmem:[#allocation2 + $0x38] sm:$0xff]
        %v2053 = vld [vmem:[#allocation2 + $0x40] sm:$0xff]
        %v2054 = vld [vmem:[#allocation2 + $0x50] sm:$0xff]
        %v2055 = vld [vmem:[#allocation2 + $0x58] sm:$0xff]
        %v2056 = vld [vmem:[#allocation2 + $0x60] sm:$0xff]
        %v2057 = vld [vmem:[#allocation2 + $0x68] sm:$0xff]
        %s2058 = scalar_lea.vmem %s6, 8
        %v2059 = vld [vmem:[%s2058] sm:$0xff]
        %2072 = vrot.lane.b32.xlu0 %v2046, 18
        %v2073 = vpop.permute.xlu0 %2072
        %2074 = vrot.lane.b32.xlu0 %v2047, 18
        %v2075 = vpop.permute.xlu0 %2074
        %2076 = vrot.lane.b32.xlu0 %v2048, 18
        %v2077 = vpop.permute.xlu0 %2076
        %2078 = vrot.lane.b32.xlu0 %v2049, 18
        %v2079 = vpop.permute.xlu0 %2078
        %2080 = vrot.lane.b32.xlu0 %v2050, 18
        %v2081 = vpop.permute.xlu0 %2080
        %2082 = vrot.lane.b32.xlu0 %v2051, 18
        %v2083 = vpop.permute.xlu0 %2082
        %2084 = vrot.lane.b32.xlu0 %v2052, 18
        %v2085 = vpop.permute.xlu0 %2084
        %2086 = vrot.lane.b32.xlu0 %v2053, 18
        %v2087 = vpop.permute.xlu0 %2086
        %2088 = vrot.lane.b32.xlu0 %v2054, 18
        %v2089 = vpop.permute.xlu0 %2088
        %2090 = vrot.lane.b32.xlu0 %v2055, 18
        %v2091 = vpop.permute.xlu0 %2090
        %2092 = vrot.lane.b32.xlu0 %v2056, 18
        %v2093 = vpop.permute.xlu0 %2092
        %2094 = vrot.lane.b32.xlu0 %v2057, 18
        %v2095 = vpop.permute.xlu0 %2094
        %v2096 = vsel %vm405, %v2073, %v2075
        %v2097 = vsel %vm405, %v2075, %v2077
        %v2098 = vsel %vm405, %v2077, %v2079
        %v2099 = vsel %vm405, %v2081, %v2083
        %v2100 = vsel %vm405, %v2083, %v2085
        %v2101 = vsel %vm405, %v2085, %v2087
        %v2102 = vsel %vm405, %v2089, %v2091
        %v2103 = vsel %vm405, %v2091, %v2093
        %v2104 = vsel %vm405, %v2093, %v2095
        %vm2114 = vcmask 195584
        %v2116 = vsel %vm2114, %v2059, 0
        %2118 = vmatpush.msra.mxu0 0.0
        %2119 = vmatpush.msra.mxu0 0.0
        %2120 = vmatpush.msra.mxu0 0.0
        %2121 = vmatpush.msra.mxu0 0.0
        %2122 = vmatpush.msra.mxu0 0.0
        %2123 = vmatpush.msra.mxu0 0.0
        %2124 = vmatpush.msra.mxu0 0.0
        %2125 = vmatpush.msra.mxu0 0.0
        %2126 = vmatpush.msra.mxu0 0.0
        %2127 = vmatpush.msra.mxu0 0.0
        %2128 = vmatpush.msra.mxu0 0.0
        %2129 = vmatpush.msra.mxu0 0.0
        %2130 = vmatpush.msra.mxu0 0.0
        %2131 = vmatpush.msra.mxu0 %v2102
        %2132 = vmatpush.msra.mxu0 %v2099
        %2133 = vmatpush.msra.mxu0 %v2096
        %2134 = vmatmul.f32.gmra.mxu0 %v2116
        %v2135 = vpop.f32.mrf.mxu0
        %v2136 = vadd.f32 0.0, %v2135
        %2137 = vdwg.mxu0
        %2138 = vmatpush.msra.mxu0 0.0
        %2139 = vmatpush.msra.mxu0 0.0
        %2140 = vmatpush.msra.mxu0 0.0
        %2141 = vmatpush.msra.mxu0 0.0
        %2142 = vmatpush.msra.mxu0 0.0
        %2143 = vmatpush.msra.mxu0 0.0
        %2144 = vmatpush.msra.mxu0 0.0
        %2145 = vmatpush.msra.mxu0 0.0
        %2146 = vmatpush.msra.mxu0 0.0
        %2147 = vmatpush.msra.mxu0 0.0
        %2148 = vmatpush.msra.mxu0 0.0
        %2149 = vmatpush.msra.mxu0 0.0
        %2150 = vmatpush.msra.mxu0 0.0
        %2151 = vmatpush.msra.mxu0 %v2103
        %2152 = vmatpush.msra.mxu0 %v2100
        %2153 = vmatpush.msra.mxu0 %v2097
        %2154 = vmatmul.f32.gmra.mxu0 %v2116
        %v2155 = vpop.f32.mrf.mxu0
        %v2156 = vadd.f32 0.0, %v2155
        %2157 = vdwg.mxu0
        %2158 = vmatpush.msra.mxu0 0.0
        %2159 = vmatpush.msra.mxu0 0.0
        %2160 = vmatpush.msra.mxu0 0.0
        %2161 = vmatpush.msra.mxu0 0.0
        %2162 = vmatpush.msra.mxu0 0.0
        %2163 = vmatpush.msra.mxu0 0.0
        %2164 = vmatpush.msra.mxu0 0.0
        %2165 = vmatpush.msra.mxu0 0.0
        %2166 = vmatpush.msra.mxu0 0.0
        %2167 = vmatpush.msra.mxu0 0.0
        %2168 = vmatpush.msra.mxu0 0.0
        %2169 = vmatpush.msra.mxu0 0.0
        %2170 = vmatpush.msra.mxu0 0.0
        %2171 = vmatpush.msra.mxu0 %v2104
        %2172 = vmatpush.msra.mxu0 %v2101
        %2173 = vmatpush.msra.mxu0 %v2098
        %2174 = vmatmul.f32.gmra.mxu0 %v2116
        %v2175 = vpop.f32.mrf.mxu0
        %v2176 = vadd.f32 0.0, %v2175
        %2177 = vdwg.mxu0
        %2178 = vrot.lane.b32.xlu0 %v2046, 19
        %v2179 = vpop.permute.xlu0 %2178
        %2180 = vrot.lane.b32.xlu0 %v2047, 19
        %v2181 = vpop.permute.xlu0 %2180
        %2182 = vrot.lane.b32.xlu0 %v2048, 19
        %v2183 = vpop.permute.xlu0 %2182
        %2184 = vrot.lane.b32.xlu0 %v2049, 19
        %v2185 = vpop.permute.xlu0 %2184
        %2186 = vrot.lane.b32.xlu0 %v2050, 19
        %v2187 = vpop.permute.xlu0 %2186
        %2188 = vrot.lane.b32.xlu0 %v2051, 19
        %v2189 = vpop.permute.xlu0 %2188
        %2190 = vrot.lane.b32.xlu0 %v2052, 19
        %v2191 = vpop.permute.xlu0 %2190
        %2192 = vrot.lane.b32.xlu0 %v2053, 19
        %v2193 = vpop.permute.xlu0 %2192
        %2194 = vrot.lane.b32.xlu0 %v2054, 19
        %v2195 = vpop.permute.xlu0 %2194
        %2196 = vrot.lane.b32.xlu0 %v2055, 19
        %v2197 = vpop.permute.xlu0 %2196
        %2198 = vrot.lane.b32.xlu0 %v2056, 19
        %v2199 = vpop.permute.xlu0 %2198
        %2200 = vrot.lane.b32.xlu0 %v2057, 19
        %v2201 = vpop.permute.xlu0 %2200
        %v2202 = vsel %vm484, %v2179, %v2181
        %v2203 = vsel %vm484, %v2181, %v2183
        %v2204 = vsel %vm484, %v2183, %v2185
        %v2205 = vsel %vm484, %v2187, %v2189
        %v2206 = vsel %vm484, %v2189, %v2191
        %v2207 = vsel %vm484, %v2191, %v2193
        %v2208 = vsel %vm484, %v2195, %v2197
        %v2209 = vsel %vm484, %v2197, %v2199
        %v2210 = vsel %vm484, %v2199, %v2201
        %v2221 = vsel %vm2114, %v2045, 0
        %2223 = vmatpush.msra.mxu0 0.0
        %2224 = vmatpush.msra.mxu0 0.0
        %2225 = vmatpush.msra.mxu0 0.0
        %2226 = vmatpush.msra.mxu0 0.0
        %2227 = vmatpush.msra.mxu0 0.0
        %2228 = vmatpush.msra.mxu0 0.0
        %2229 = vmatpush.msra.mxu0 0.0
        %2230 = vmatpush.msra.mxu0 0.0
        %2231 = vmatpush.msra.mxu0 0.0
        %2232 = vmatpush.msra.mxu0 0.0
        %2233 = vmatpush.msra.mxu0 0.0
        %2234 = vmatpush.msra.mxu0 0.0
        %2235 = vmatpush.msra.mxu0 0.0
        %2236 = vmatpush.msra.mxu0 %v2208
        %2237 = vmatpush.msra.mxu0 %v2205
        %2238 = vmatpush.msra.mxu0 %v2202
        %2239 = vmatmul.f32.gmra.mxu0 %v2221
        %v2240 = vpop.f32.mrf.mxu0
        %v2241 = vadd.f32 %v2136, %v2240
        %2242 = vdwg.mxu0
        %2243 = vmatpush.msra.mxu0 0.0
        %2244 = vmatpush.msra.mxu0 0.0
        %2245 = vmatpush.msra.mxu0 0.0
        %2246 = vmatpush.msra.mxu0 0.0
        %2247 = vmatpush.msra.mxu0 0.0
        %2248 = vmatpush.msra.mxu0 0.0
        %2249 = vmatpush.msra.mxu0 0.0
        %2250 = vmatpush.msra.mxu0 0.0
        %2251 = vmatpush.msra.mxu0 0.0
        %2252 = vmatpush.msra.mxu0 0.0
        %2253 = vmatpush.msra.mxu0 0.0
        %2254 = vmatpush.msra.mxu0 0.0
        %2255 = vmatpush.msra.mxu0 0.0
        %2256 = vmatpush.msra.mxu0 %v2209
        %2257 = vmatpush.msra.mxu0 %v2206
        %2258 = vmatpush.msra.mxu0 %v2203
        %2259 = vmatmul.f32.gmra.mxu0 %v2221
        %v2260 = vpop.f32.mrf.mxu0
        %v2261 = vadd.f32 %v2156, %v2260
        %2262 = vdwg.mxu0
        %2263 = vmatpush.msra.mxu0 0.0
        %2264 = vmatpush.msra.mxu0 0.0
        %2265 = vmatpush.msra.mxu0 0.0
        %2266 = vmatpush.msra.mxu0 0.0
        %2267 = vmatpush.msra.mxu0 0.0
        %2268 = vmatpush.msra.mxu0 0.0
        %2269 = vmatpush.msra.mxu0 0.0
        %2270 = vmatpush.msra.mxu0 0.0
        %2271 = vmatpush.msra.mxu0 0.0
        %2272 = vmatpush.msra.mxu0 0.0
        %2273 = vmatpush.msra.mxu0 0.0
        %2274 = vmatpush.msra.mxu0 0.0
        %2275 = vmatpush.msra.mxu0 0.0
        %2276 = vmatpush.msra.mxu0 %v2210
        %2277 = vmatpush.msra.mxu0 %v2207
        %2278 = vmatpush.msra.mxu0 %v2204
        %2279 = vmatmul.f32.gmra.mxu0 %v2221
        %v2280 = vpop.f32.mrf.mxu0
        %v2281 = vadd.f32 %v2176, %v2280
        %2282 = vdwg.mxu0
        %s2283 = scalar_lea.vmem %s6, 16
        %v2284 = vld [vmem:[%s2283] sm:$0xff]
        %2285 = vrot.lane.b32.xlu0 %v2046, 17
        %v2286 = vpop.permute.xlu0 %2285
        %2287 = vrot.lane.b32.xlu0 %v2047, 17
        %v2288 = vpop.permute.xlu0 %2287
        %2289 = vrot.lane.b32.xlu0 %v2048, 17
        %v2290 = vpop.permute.xlu0 %2289
        %2291 = vrot.lane.b32.xlu0 %v2049, 17
        %v2292 = vpop.permute.xlu0 %2291
        %2293 = vrot.lane.b32.xlu0 %v2050, 17
        %v2294 = vpop.permute.xlu0 %2293
        %2295 = vrot.lane.b32.xlu0 %v2051, 17
        %v2296 = vpop.permute.xlu0 %2295
        %2297 = vrot.lane.b32.xlu0 %v2052, 17
        %v2298 = vpop.permute.xlu0 %2297
        %2299 = vrot.lane.b32.xlu0 %v2053, 17
        %v2300 = vpop.permute.xlu0 %2299
        %2301 = vrot.lane.b32.xlu0 %v2054, 17
        %v2302 = vpop.permute.xlu0 %2301
        %2303 = vrot.lane.b32.xlu0 %v2055, 17
        %v2304 = vpop.permute.xlu0 %2303
        %2305 = vrot.lane.b32.xlu0 %v2056, 17
        %v2306 = vpop.permute.xlu0 %2305
        %2307 = vrot.lane.b32.xlu0 %v2057, 17
        %v2308 = vpop.permute.xlu0 %2307
        %v2309 = vsel %vm564, %v2286, %v2288
        %v2310 = vsel %vm564, %v2288, %v2290
        %v2311 = vsel %vm564, %v2290, %v2292
        %v2312 = vsel %vm564, %v2294, %v2296
        %v2313 = vsel %vm564, %v2296, %v2298
        %v2314 = vsel %vm564, %v2298, %v2300
        %v2315 = vsel %vm564, %v2302, %v2304
        %v2316 = vsel %vm564, %v2304, %v2306
        %v2317 = vsel %vm564, %v2306, %v2308
        %v2328 = vsel %vm2114, %v2284, 0
        %2330 = vmatpush.msra.mxu0 0.0
        %2331 = vmatpush.msra.mxu0 0.0
        %2332 = vmatpush.msra.mxu0 0.0
        %2333 = vmatpush.msra.mxu0 0.0
        %2334 = vmatpush.msra.mxu0 0.0
        %2335 = vmatpush.msra.mxu0 0.0
        %2336 = vmatpush.msra.mxu0 0.0
        %2337 = vmatpush.msra.mxu0 0.0
        %2338 = vmatpush.msra.mxu0 0.0
        %2339 = vmatpush.msra.mxu0 0.0
        %2340 = vmatpush.msra.mxu0 0.0
        %2341 = vmatpush.msra.mxu0 0.0
        %2342 = vmatpush.msra.mxu0 0.0
        %2343 = vmatpush.msra.mxu0 %v2315
        %2344 = vmatpush.msra.mxu0 %v2312
        %2345 = vmatpush.msra.mxu0 %v2309
        %2346 = vmatmul.f32.gmra.mxu0 %v2328
        %v2347 = vpop.f32.mrf.mxu0
        %v2348 = vadd.f32 0.0, %v2347
        %2349 = vdwg.mxu0
        %2350 = vmatpush.msra.mxu0 0.0
        %2351 = vmatpush.msra.mxu0 0.0
        %2352 = vmatpush.msra.mxu0 0.0
        %2353 = vmatpush.msra.mxu0 0.0
        %2354 = vmatpush.msra.mxu0 0.0
        %2355 = vmatpush.msra.mxu0 0.0
        %2356 = vmatpush.msra.mxu0 0.0
        %2357 = vmatpush.msra.mxu0 0.0
        %2358 = vmatpush.msra.mxu0 0.0
        %2359 = vmatpush.msra.mxu0 0.0
        %2360 = vmatpush.msra.mxu0 0.0
        %2361 = vmatpush.msra.mxu0 0.0
        %2362 = vmatpush.msra.mxu0 0.0
        %2363 = vmatpush.msra.mxu0 %v2316
        %2364 = vmatpush.msra.mxu0 %v2313
        %2365 = vmatpush.msra.mxu0 %v2310
        %2366 = vmatmul.f32.gmra.mxu0 %v2328
        %v2367 = vpop.f32.mrf.mxu0
        %v2368 = vadd.f32 0.0, %v2367
        %2369 = vdwg.mxu0
        %2370 = vmatpush.msra.mxu0 0.0
        %2371 = vmatpush.msra.mxu0 0.0
        %2372 = vmatpush.msra.mxu0 0.0
        %2373 = vmatpush.msra.mxu0 0.0
        %2374 = vmatpush.msra.mxu0 0.0
        %2375 = vmatpush.msra.mxu0 0.0
        %2376 = vmatpush.msra.mxu0 0.0
        %2377 = vmatpush.msra.mxu0 0.0
        %2378 = vmatpush.msra.mxu0 0.0
        %2379 = vmatpush.msra.mxu0 0.0
        %2380 = vmatpush.msra.mxu0 0.0
        %2381 = vmatpush.msra.mxu0 0.0
        %2382 = vmatpush.msra.mxu0 0.0
        %2383 = vmatpush.msra.mxu0 %v2317
        %2384 = vmatpush.msra.mxu0 %v2314
        %2385 = vmatpush.msra.mxu0 %v2311
        %2386 = vmatmul.f32.gmra.mxu0 %v2328
        %v2387 = vpop.f32.mrf.mxu0
        %v2388 = vadd.f32 0.0, %v2387
        %2389 = vdwg.mxu0
        %v2390 = vadd.f32 %v2241, %v2348
        %v2391 = vadd.f32 %v2261, %v2368
        %v2392 = vadd.f32 %v2281, %v2388
        %s2393 = scalar_lea.vmem %s6, 24
        %v2394 = vld [vmem:[%s2393] sm:$0xff]
        %2395 = vrot.lane.b32.xlu0 %v2046, 1
        %v2396 = vpop.permute.xlu0 %2395
        %2397 = vrot.lane.b32.xlu0 %v2047, 1
        %v2398 = vpop.permute.xlu0 %2397
        %2399 = vrot.lane.b32.xlu0 %v2048, 1
        %v2400 = vpop.permute.xlu0 %2399
        %2401 = vrot.lane.b32.xlu0 %v2049, 1
        %v2402 = vpop.permute.xlu0 %2401
        %2403 = vrot.lane.b32.xlu0 %v2050, 1
        %v2404 = vpop.permute.xlu0 %2403
        %2405 = vrot.lane.b32.xlu0 %v2051, 1
        %v2406 = vpop.permute.xlu0 %2405
        %2407 = vrot.lane.b32.xlu0 %v2052, 1
        %v2408 = vpop.permute.xlu0 %2407
        %2409 = vrot.lane.b32.xlu0 %v2053, 1
        %v2410 = vpop.permute.xlu0 %2409
        %2411 = vrot.lane.b32.xlu0 %v2054, 1
        %v2412 = vpop.permute.xlu0 %2411
        %2413 = vrot.lane.b32.xlu0 %v2055, 1
        %v2414 = vpop.permute.xlu0 %2413
        %2415 = vrot.lane.b32.xlu0 %v2056, 1
        %v2416 = vpop.permute.xlu0 %2415
        %2417 = vrot.lane.b32.xlu0 %v2057, 1
        %v2418 = vpop.permute.xlu0 %2417
        %v2419 = vsel %vm647, %v2396, %v2398
        %v2420 = vsel %vm647, %v2398, %v2400
        %v2421 = vsel %vm647, %v2400, %v2402
        %v2422 = vsel %vm647, %v2404, %v2406
        %v2423 = vsel %vm647, %v2406, %v2408
        %v2424 = vsel %vm647, %v2408, %v2410
        %v2425 = vsel %vm647, %v2412, %v2414
        %v2426 = vsel %vm647, %v2414, %v2416
        %v2427 = vsel %vm647, %v2416, %v2418
        %v2438 = vsel %vm2114, %v2394, 0
        %2440 = vmatpush.msra.mxu0 0.0
        %2441 = vmatpush.msra.mxu0 0.0
        %2442 = vmatpush.msra.mxu0 0.0
        %2443 = vmatpush.msra.mxu0 0.0
        %2444 = vmatpush.msra.mxu0 0.0
        %2445 = vmatpush.msra.mxu0 0.0
        %2446 = vmatpush.msra.mxu0 0.0
        %2447 = vmatpush.msra.mxu0 0.0
        %2448 = vmatpush.msra.mxu0 0.0
        %2449 = vmatpush.msra.mxu0 0.0
        %2450 = vmatpush.msra.mxu0 0.0
        %2451 = vmatpush.msra.mxu0 0.0
        %2452 = vmatpush.msra.mxu0 0.0
        %2453 = vmatpush.msra.mxu0 %v2425
        %2454 = vmatpush.msra.mxu0 %v2422
        %2455 = vmatpush.msra.mxu0 %v2419
        %2456 = vmatmul.f32.gmra.mxu0 %v2438
        %v2457 = vpop.f32.mrf.mxu0
        %v2458 = vadd.f32 0.0, %v2457
        %2459 = vdwg.mxu0
        %2460 = vmatpush.msra.mxu0 0.0
        %2461 = vmatpush.msra.mxu0 0.0
        %2462 = vmatpush.msra.mxu0 0.0
        %2463 = vmatpush.msra.mxu0 0.0
        %2464 = vmatpush.msra.mxu0 0.0
        %2465 = vmatpush.msra.mxu0 0.0
        %2466 = vmatpush.msra.mxu0 0.0
        %2467 = vmatpush.msra.mxu0 0.0
        %2468 = vmatpush.msra.mxu0 0.0
        %2469 = vmatpush.msra.mxu0 0.0
        %2470 = vmatpush.msra.mxu0 0.0
        %2471 = vmatpush.msra.mxu0 0.0
        %2472 = vmatpush.msra.mxu0 0.0
        %2473 = vmatpush.msra.mxu0 %v2426
        %2474 = vmatpush.msra.mxu0 %v2423
        %2475 = vmatpush.msra.mxu0 %v2420
        %2476 = vmatmul.f32.gmra.mxu0 %v2438
        %v2477 = vpop.f32.mrf.mxu0
        %v2478 = vadd.f32 0.0, %v2477
        %2479 = vdwg.mxu0
        %2480 = vmatpush.msra.mxu0 0.0
        %2481 = vmatpush.msra.mxu0 0.0
        %2482 = vmatpush.msra.mxu0 0.0
        %2483 = vmatpush.msra.mxu0 0.0
        %2484 = vmatpush.msra.mxu0 0.0
        %2485 = vmatpush.msra.mxu0 0.0
        %2486 = vmatpush.msra.mxu0 0.0
        %2487 = vmatpush.msra.mxu0 0.0
        %2488 = vmatpush.msra.mxu0 0.0
        %2489 = vmatpush.msra.mxu0 0.0
        %2490 = vmatpush.msra.mxu0 0.0
        %2491 = vmatpush.msra.mxu0 0.0
        %2492 = vmatpush.msra.mxu0 0.0
        %2493 = vmatpush.msra.mxu0 %v2427
        %2494 = vmatpush.msra.mxu0 %v2424
        %2495 = vmatpush.msra.mxu0 %v2421
        %2496 = vmatmul.f32.gmra.mxu0 %v2438
        %v2497 = vpop.f32.mrf.mxu0
        %v2498 = vadd.f32 0.0, %v2497
        %2499 = vdwg.mxu0
        %v2500 = vadd.f32 %v2390, %v2458
        %v2501 = vadd.f32 %v2391, %v2478
        %v2502 = vadd.f32 %v2392, %v2498
        %s2503 = scalar_lea.vmem %s6, 32
        %v2504 = vld [vmem:[%s2503] sm:$0xff]
        %v2506 = vsel %vm2114, %v2504, 0
        %2508 = vmatpush.msra.mxu0 0.0
        %2509 = vmatpush.msra.mxu0 0.0
        %2510 = vmatpush.msra.mxu0 0.0
        %2511 = vmatpush.msra.mxu0 0.0
        %2512 = vmatpush.msra.mxu0 0.0
        %2513 = vmatpush.msra.mxu0 0.0
        %2514 = vmatpush.msra.mxu0 0.0
        %2515 = vmatpush.msra.mxu0 0.0
        %2516 = vmatpush.msra.mxu0 0.0
        %2517 = vmatpush.msra.mxu0 0.0
        %2518 = vmatpush.msra.mxu0 0.0
        %2519 = vmatpush.msra.mxu0 0.0
        %2520 = vmatpush.msra.mxu0 0.0
        %2521 = vmatpush.msra.mxu0 %v2055
        %2522 = vmatpush.msra.mxu0 %v2051
        %2523 = vmatpush.msra.mxu0 %v2047
        %2524 = vmatmul.f32.gmra.mxu0 %v2506
        %v2525 = vpop.f32.mrf.mxu0
        %v2526 = vadd.f32 0.0, %v2525
        %2527 = vdwg.mxu0
        %2528 = vmatpush.msra.mxu0 0.0
        %2529 = vmatpush.msra.mxu0 0.0
        %2530 = vmatpush.msra.mxu0 0.0
        %2531 = vmatpush.msra.mxu0 0.0
        %2532 = vmatpush.msra.mxu0 0.0
        %2533 = vmatpush.msra.mxu0 0.0
        %2534 = vmatpush.msra.mxu0 0.0
        %2535 = vmatpush.msra.mxu0 0.0
        %2536 = vmatpush.msra.mxu0 0.0
        %2537 = vmatpush.msra.mxu0 0.0
        %2538 = vmatpush.msra.mxu0 0.0
        %2539 = vmatpush.msra.mxu0 0.0
        %2540 = vmatpush.msra.mxu0 0.0
        %2541 = vmatpush.msra.mxu0 %v2056
        %2542 = vmatpush.msra.mxu0 %v2052
        %2543 = vmatpush.msra.mxu0 %v2048
        %2544 = vmatmul.f32.gmra.mxu0 %v2506
        %v2545 = vpop.f32.mrf.mxu0
        %v2546 = vadd.f32 0.0, %v2545
        %2547 = vdwg.mxu0
        %2548 = vmatpush.msra.mxu0 0.0
        %2549 = vmatpush.msra.mxu0 0.0
        %2550 = vmatpush.msra.mxu0 0.0
        %2551 = vmatpush.msra.mxu0 0.0
        %2552 = vmatpush.msra.mxu0 0.0
        %2553 = vmatpush.msra.mxu0 0.0
        %2554 = vmatpush.msra.mxu0 0.0
        %2555 = vmatpush.msra.mxu0 0.0
        %2556 = vmatpush.msra.mxu0 0.0
        %2557 = vmatpush.msra.mxu0 0.0
        %2558 = vmatpush.msra.mxu0 0.0
        %2559 = vmatpush.msra.mxu0 0.0
        %2560 = vmatpush.msra.mxu0 0.0
        %2561 = vmatpush.msra.mxu0 %v2057
        %2562 = vmatpush.msra.mxu0 %v2053
        %2563 = vmatpush.msra.mxu0 %v2049
        %2564 = vmatmul.f32.gmra.mxu0 %v2506
        %v2565 = vpop.f32.mrf.mxu0
        %v2566 = vadd.f32 0.0, %v2565
        %2567 = vdwg.mxu0
        %v2568 = vadd.f32 %v2500, %v2526
        %v2569 = vadd.f32 %v2501, %v2546
        %v2570 = vadd.f32 %v2502, %v2566
        %s2571 = scalar_lea.vmem %s6, 40
        %v2572 = vld [vmem:[%s2571] sm:$0xff]
        %v2573 = vld [vmem:[#allocation2 + $0x8] sm:$0xff]
        %v2574 = vld [vmem:[#allocation2 + $0x10] sm:$0xff]
        %v2575 = vld [vmem:[#allocation2 + $0x18] sm:$0xff]
        %v2576 = vld [vmem:[#allocation2 + $0x20] sm:$0xff]
        %v2577 = vld [vmem:[#allocation2 + $0x30] sm:$0xff]
        %v2578 = vld [vmem:[#allocation2 + $0x38] sm:$0xff]
        %v2579 = vld [vmem:[#allocation2 + $0x40] sm:$0xff]
        %v2580 = vld [vmem:[#allocation2 + $0x48] sm:$0xff]
        %v2581 = vld [vmem:[#allocation2 + $0x58] sm:$0xff]
        %v2582 = vld [vmem:[#allocation2 + $0x60] sm:$0xff]
        %v2583 = vld [vmem:[#allocation2 + $0x68] sm:$0xff]
        %v2584 = vld [vmem:[#allocation2 + $0x70] sm:$0xff]
        %2597 = vrot.lane.b32.xlu0 %v2573, 127
        %v2598 = vpop.permute.xlu0 %2597
        %2599 = vrot.lane.b32.xlu0 %v2574, 127
        %v2600 = vpop.permute.xlu0 %2599
        %2601 = vrot.lane.b32.xlu0 %v2575, 127
        %v2602 = vpop.permute.xlu0 %2601
        %2603 = vrot.lane.b32.xlu0 %v2576, 127
        %v2604 = vpop.permute.xlu0 %2603
        %2605 = vrot.lane.b32.xlu0 %v2577, 127
        %v2606 = vpop.permute.xlu0 %2605
        %2607 = vrot.lane.b32.xlu0 %v2578, 127
        %v2608 = vpop.permute.xlu0 %2607
        %2609 = vrot.lane.b32.xlu0 %v2579, 127
        %v2610 = vpop.permute.xlu0 %2609
        %2611 = vrot.lane.b32.xlu0 %v2580, 127
        %v2612 = vpop.permute.xlu0 %2611
        %2613 = vrot.lane.b32.xlu0 %v2581, 127
        %v2614 = vpop.permute.xlu0 %2613
        %2615 = vrot.lane.b32.xlu0 %v2582, 127
        %v2616 = vpop.permute.xlu0 %2615
        %2617 = vrot.lane.b32.xlu0 %v2583, 127
        %v2618 = vpop.permute.xlu0 %2617
        %2619 = vrot.lane.b32.xlu0 %v2584, 127
        %v2620 = vpop.permute.xlu0 %2619
        %v2621 = vsel %vm806, %v2598, %v2600
        %v2622 = vsel %vm806, %v2600, %v2602
        %v2623 = vsel %vm806, %v2602, %v2604
        %v2624 = vsel %vm806, %v2606, %v2608
        %v2625 = vsel %vm806, %v2608, %v2610
        %v2626 = vsel %vm806, %v2610, %v2612
        %v2627 = vsel %vm806, %v2614, %v2616
        %v2628 = vsel %vm806, %v2616, %v2618
        %v2629 = vsel %vm806, %v2618, %v2620
        %v2640 = vsel %vm2114, %v2572, 0
        %2642 = vmatpush.msra.mxu0 0.0
        %2643 = vmatpush.msra.mxu0 0.0
        %2644 = vmatpush.msra.mxu0 0.0
        %2645 = vmatpush.msra.mxu0 0.0
        %2646 = vmatpush.msra.mxu0 0.0
        %2647 = vmatpush.msra.mxu0 0.0
        %2648 = vmatpush.msra.mxu0 0.0
        %2649 = vmatpush.msra.mxu0 0.0
        %2650 = vmatpush.msra.mxu0 0.0
        %2651 = vmatpush.msra.mxu0 0.0
        %2652 = vmatpush.msra.mxu0 0.0
        %2653 = vmatpush.msra.mxu0 0.0
        %2654 = vmatpush.msra.mxu0 0.0
        %2655 = vmatpush.msra.mxu0 %v2627
        %2656 = vmatpush.msra.mxu0 %v2624
        %2657 = vmatpush.msra.mxu0 %v2621
        %2658 = vmatmul.f32.gmra.mxu0 %v2640
        %v2659 = vpop.f32.mrf.mxu0
        %v2660 = vadd.f32 0.0, %v2659
        %2661 = vdwg.mxu0
        %2662 = vmatpush.msra.mxu0 0.0
        %2663 = vmatpush.msra.mxu0 0.0
        %2664 = vmatpush.msra.mxu0 0.0
        %2665 = vmatpush.msra.mxu0 0.0
        %2666 = vmatpush.msra.mxu0 0.0
        %2667 = vmatpush.msra.mxu0 0.0
        %2668 = vmatpush.msra.mxu0 0.0
        %2669 = vmatpush.msra.mxu0 0.0
        %2670 = vmatpush.msra.mxu0 0.0
        %2671 = vmatpush.msra.mxu0 0.0
        %2672 = vmatpush.msra.mxu0 0.0
        %2673 = vmatpush.msra.mxu0 0.0
        %2674 = vmatpush.msra.mxu0 0.0
        %2675 = vmatpush.msra.mxu0 %v2628
        %2676 = vmatpush.msra.mxu0 %v2625
        %2677 = vmatpush.msra.mxu0 %v2622
        %2678 = vmatmul.f32.gmra.mxu0 %v2640
        %v2679 = vpop.f32.mrf.mxu0
        %v2680 = vadd.f32 0.0, %v2679
        %2681 = vdwg.mxu0
        %2682 = vmatpush.msra.mxu0 0.0
        %2683 = vmatpush.msra.mxu0 0.0
        %2684 = vmatpush.msra.mxu0 0.0
        %2685 = vmatpush.msra.mxu0 0.0
        %2686 = vmatpush.msra.mxu0 0.0
        %2687 = vmatpush.msra.mxu0 0.0
        %2688 = vmatpush.msra.mxu0 0.0
        %2689 = vmatpush.msra.mxu0 0.0
        %2690 = vmatpush.msra.mxu0 0.0
        %2691 = vmatpush.msra.mxu0 0.0
        %2692 = vmatpush.msra.mxu0 0.0
        %2693 = vmatpush.msra.mxu0 0.0
        %2694 = vmatpush.msra.mxu0 0.0
        %2695 = vmatpush.msra.mxu0 %v2629
        %2696 = vmatpush.msra.mxu0 %v2626
        %2697 = vmatpush.msra.mxu0 %v2623
        %2698 = vmatmul.f32.gmra.mxu0 %v2640
        %v2699 = vpop.f32.mrf.mxu0
        %v2700 = vadd.f32 0.0, %v2699
        %2701 = vdwg.mxu0
        %v2702 = vadd.f32 %v2568, %v2660
        %v2703 = vadd.f32 %v2569, %v2680
        %v2704 = vadd.f32 %v2570, %v2700
        %s2705 = scalar_lea.vmem %s6, 48
        %v2706 = vld [vmem:[%s2705] sm:$0xff]
        %2707 = vrot.lane.b32.xlu0 %v2573, 111
        %v2708 = vpop.permute.xlu0 %2707
        %2709 = vrot.lane.b32.xlu0 %v2574, 111
        %v2710 = vpop.permute.xlu0 %2709
        %2711 = vrot.lane.b32.xlu0 %v2575, 111
        %v2712 = vpop.permute.xlu0 %2711
        %2713 = vrot.lane.b32.xlu0 %v2576, 111
        %v2714 = vpop.permute.xlu0 %2713
        %2715 = vrot.lane.b32.xlu0 %v2577, 111
        %v2716 = vpop.permute.xlu0 %2715
        %2717 = vrot.lane.b32.xlu0 %v2578, 111
        %v2718 = vpop.permute.xlu0 %2717
        %2719 = vrot.lane.b32.xlu0 %v2579, 111
        %v2720 = vpop.permute.xlu0 %2719
        %2721 = vrot.lane.b32.xlu0 %v2580, 111
        %v2722 = vpop.permute.xlu0 %2721
        %2723 = vrot.lane.b32.xlu0 %v2581, 111
        %v2724 = vpop.permute.xlu0 %2723
        %2725 = vrot.lane.b32.xlu0 %v2582, 111
        %v2726 = vpop.permute.xlu0 %2725
        %2727 = vrot.lane.b32.xlu0 %v2583, 111
        %v2728 = vpop.permute.xlu0 %2727
        %2729 = vrot.lane.b32.xlu0 %v2584, 111
        %v2730 = vpop.permute.xlu0 %2729
        %v2731 = vsel %vm889, %v2708, %v2710
        %v2732 = vsel %vm889, %v2710, %v2712
        %v2733 = vsel %vm889, %v2712, %v2714
        %v2734 = vsel %vm889, %v2716, %v2718
        %v2735 = vsel %vm889, %v2718, %v2720
        %v2736 = vsel %vm889, %v2720, %v2722
        %v2737 = vsel %vm889, %v2724, %v2726
        %v2738 = vsel %vm889, %v2726, %v2728
        %v2739 = vsel %vm889, %v2728, %v2730
        %v2750 = vsel %vm2114, %v2706, 0
        %2752 = vmatpush.msra.mxu0 0.0
        %2753 = vmatpush.msra.mxu0 0.0
        %2754 = vmatpush.msra.mxu0 0.0
        %2755 = vmatpush.msra.mxu0 0.0
        %2756 = vmatpush.msra.mxu0 0.0
        %2757 = vmatpush.msra.mxu0 0.0
        %2758 = vmatpush.msra.mxu0 0.0
        %2759 = vmatpush.msra.mxu0 0.0
        %2760 = vmatpush.msra.mxu0 0.0
        %2761 = vmatpush.msra.mxu0 0.0
        %2762 = vmatpush.msra.mxu0 0.0
        %2763 = vmatpush.msra.mxu0 0.0
        %2764 = vmatpush.msra.mxu0 0.0
        %2765 = vmatpush.msra.mxu0 %v2737
        %2766 = vmatpush.msra.mxu0 %v2734
        %2767 = vmatpush.msra.mxu0 %v2731
        %2768 = vmatmul.f32.gmra.mxu0 %v2750
        %v2769 = vpop.f32.mrf.mxu0
        %v2770 = vadd.f32 0.0, %v2769
        %2771 = vdwg.mxu0
        %2772 = vmatpush.msra.mxu0 0.0
        %2773 = vmatpush.msra.mxu0 0.0
        %2774 = vmatpush.msra.mxu0 0.0
        %2775 = vmatpush.msra.mxu0 0.0
        %2776 = vmatpush.msra.mxu0 0.0
        %2777 = vmatpush.msra.mxu0 0.0
        %2778 = vmatpush.msra.mxu0 0.0
        %2779 = vmatpush.msra.mxu0 0.0
        %2780 = vmatpush.msra.mxu0 0.0
        %2781 = vmatpush.msra.mxu0 0.0
        %2782 = vmatpush.msra.mxu0 0.0
        %2783 = vmatpush.msra.mxu0 0.0
        %2784 = vmatpush.msra.mxu0 0.0
        %2785 = vmatpush.msra.mxu0 %v2738
        %2786 = vmatpush.msra.mxu0 %v2735
        %2787 = vmatpush.msra.mxu0 %v2732
        %2788 = vmatmul.f32.gmra.mxu0 %v2750
        %v2789 = vpop.f32.mrf.mxu0
        %v2790 = vadd.f32 0.0, %v2789
        %2791 = vdwg.mxu0
        %2792 = vmatpush.msra.mxu0 0.0
        %2793 = vmatpush.msra.mxu0 0.0
        %2794 = vmatpush.msra.mxu0 0.0
        %2795 = vmatpush.msra.mxu0 0.0
        %2796 = vmatpush.msra.mxu0 0.0
        %2797 = vmatpush.msra.mxu0 0.0
        %2798 = vmatpush.msra.mxu0 0.0
        %2799 = vmatpush.msra.mxu0 0.0
        %2800 = vmatpush.msra.mxu0 0.0
        %2801 = vmatpush.msra.mxu0 0.0
        %2802 = vmatpush.msra.mxu0 0.0
        %2803 = vmatpush.msra.mxu0 0.0
        %2804 = vmatpush.msra.mxu0 0.0
        %2805 = vmatpush.msra.mxu0 %v2739
        %2806 = vmatpush.msra.mxu0 %v2736
        %2807 = vmatpush.msra.mxu0 %v2733
        %2808 = vmatmul.f32.gmra.mxu0 %v2750
        %v2809 = vpop.f32.mrf.mxu0
        %v2810 = vadd.f32 0.0, %v2809
        %2811 = vdwg.mxu0
        %v2812 = vadd.f32 %v2702, %v2770
        %v2813 = vadd.f32 %v2703, %v2790
        %v2814 = vadd.f32 %v2704, %v2810
        %s2815 = scalar_lea.vmem %s6, 56
        %v2816 = vld [vmem:[%s2815] sm:$0xff]
        %2817 = vrot.lane.b32.xlu0 %v2573, 110
        %v2818 = vpop.permute.xlu0 %2817
        %2819 = vrot.lane.b32.xlu0 %v2574, 110
        %v2820 = vpop.permute.xlu0 %2819
        %2821 = vrot.lane.b32.xlu0 %v2575, 110
        %v2822 = vpop.permute.xlu0 %2821
        %2823 = vrot.lane.b32.xlu0 %v2576, 110
        %v2824 = vpop.permute.xlu0 %2823
        %2825 = vrot.lane.b32.xlu0 %v2577, 110
        %v2826 = vpop.permute.xlu0 %2825
        %2827 = vrot.lane.b32.xlu0 %v2578, 110
        %v2828 = vpop.permute.xlu0 %2827
        %2829 = vrot.lane.b32.xlu0 %v2579, 110
        %v2830 = vpop.permute.xlu0 %2829
        %2831 = vrot.lane.b32.xlu0 %v2580, 110
        %v2832 = vpop.permute.xlu0 %2831
        %2833 = vrot.lane.b32.xlu0 %v2581, 110
        %v2834 = vpop.permute.xlu0 %2833
        %2835 = vrot.lane.b32.xlu0 %v2582, 110
        %v2836 = vpop.permute.xlu0 %2835
        %2837 = vrot.lane.b32.xlu0 %v2583, 110
        %v2838 = vpop.permute.xlu0 %2837
        %2839 = vrot.lane.b32.xlu0 %v2584, 110
        %v2840 = vpop.permute.xlu0 %2839
        %v2841 = vsel %vm972, %v2818, %v2820
        %v2842 = vsel %vm972, %v2820, %v2822
        %v2843 = vsel %vm972, %v2822, %v2824
        %v2844 = vsel %vm972, %v2826, %v2828
        %v2845 = vsel %vm972, %v2828, %v2830
        %v2846 = vsel %vm972, %v2830, %v2832
        %v2847 = vsel %vm972, %v2834, %v2836
        %v2848 = vsel %vm972, %v2836, %v2838
        %v2849 = vsel %vm972, %v2838, %v2840
        %v2860 = vsel %vm2114, %v2816, 0
        %2862 = vmatpush.msra.mxu0 0.0
        %2863 = vmatpush.msra.mxu0 0.0
        %2864 = vmatpush.msra.mxu0 0.0
        %2865 = vmatpush.msra.mxu0 0.0
        %2866 = vmatpush.msra.mxu0 0.0
        %2867 = vmatpush.msra.mxu0 0.0
        %2868 = vmatpush.msra.mxu0 0.0
        %2869 = vmatpush.msra.mxu0 0.0
        %2870 = vmatpush.msra.mxu0 0.0
        %2871 = vmatpush.msra.mxu0 0.0
        %2872 = vmatpush.msra.mxu0 0.0
        %2873 = vmatpush.msra.mxu0 0.0
        %2874 = vmatpush.msra.mxu0 0.0
        %2875 = vmatpush.msra.mxu0 %v2847
        %2876 = vmatpush.msra.mxu0 %v2844
        %2877 = vmatpush.msra.mxu0 %v2841
        %2878 = vmatmul.f32.gmra.mxu0 %v2860
        %v2879 = vpop.f32.mrf.mxu0
        %v2880 = vadd.f32 0.0, %v2879
        %2881 = vdwg.mxu0
        %2882 = vmatpush.msra.mxu0 0.0
        %2883 = vmatpush.msra.mxu0 0.0
        %2884 = vmatpush.msra.mxu0 0.0
        %2885 = vmatpush.msra.mxu0 0.0
        %2886 = vmatpush.msra.mxu0 0.0
        %2887 = vmatpush.msra.mxu0 0.0
        %2888 = vmatpush.msra.mxu0 0.0
        %2889 = vmatpush.msra.mxu0 0.0
        %2890 = vmatpush.msra.mxu0 0.0
        %2891 = vmatpush.msra.mxu0 0.0
        %2892 = vmatpush.msra.mxu0 0.0
        %2893 = vmatpush.msra.mxu0 0.0
        %2894 = vmatpush.msra.mxu0 0.0
        %2895 = vmatpush.msra.mxu0 %v2848
        %2896 = vmatpush.msra.mxu0 %v2845
        %2897 = vmatpush.msra.mxu0 %v2842
        %2898 = vmatmul.f32.gmra.mxu0 %v2860
        %v2899 = vpop.f32.mrf.mxu0
        %v2900 = vadd.f32 0.0, %v2899
        %2901 = vdwg.mxu0
        %2902 = vmatpush.msra.mxu0 0.0
        %2903 = vmatpush.msra.mxu0 0.0
        %2904 = vmatpush.msra.mxu0 0.0
        %2905 = vmatpush.msra.mxu0 0.0
        %2906 = vmatpush.msra.mxu0 0.0
        %2907 = vmatpush.msra.mxu0 0.0
        %2908 = vmatpush.msra.mxu0 0.0
        %2909 = vmatpush.msra.mxu0 0.0
        %2910 = vmatpush.msra.mxu0 0.0
        %2911 = vmatpush.msra.mxu0 0.0
        %2912 = vmatpush.msra.mxu0 0.0
        %2913 = vmatpush.msra.mxu0 0.0
        %2914 = vmatpush.msra.mxu0 0.0
        %2915 = vmatpush.msra.mxu0 %v2849
        %2916 = vmatpush.msra.mxu0 %v2846
        %2917 = vmatpush.msra.mxu0 %v2843
        %2918 = vmatmul.f32.gmra.mxu0 %v2860
        %v2919 = vpop.f32.mrf.mxu0
        %v2920 = vadd.f32 0.0, %v2919
        %2921 = vdwg.mxu0
        %v2922 = vadd.f32 %v2812, %v2880
        %v2923 = vadd.f32 %v2813, %v2900
        %v2924 = vadd.f32 %v2814, %v2920
        %s2925 = scalar_lea.vmem %s6, 64
        %v2926 = vld [vmem:[%s2925] sm:$0xff]
        %2927 = vrot.lane.b32.xlu0 %v2573, 109
        %v2928 = vpop.permute.xlu0 %2927
        %2929 = vrot.lane.b32.xlu0 %v2574, 109
        %v2930 = vpop.permute.xlu0 %2929
        %2931 = vrot.lane.b32.xlu0 %v2575, 109
        %v2932 = vpop.permute.xlu0 %2931
        %2933 = vrot.lane.b32.xlu0 %v2576, 109
        %v2934 = vpop.permute.xlu0 %2933
        %2935 = vrot.lane.b32.xlu0 %v2577, 109
        %v2936 = vpop.permute.xlu0 %2935
        %2937 = vrot.lane.b32.xlu0 %v2578, 109
        %v2938 = vpop.permute.xlu0 %2937
        %2939 = vrot.lane.b32.xlu0 %v2579, 109
        %v2940 = vpop.permute.xlu0 %2939
        %2941 = vrot.lane.b32.xlu0 %v2580, 109
        %v2942 = vpop.permute.xlu0 %2941
        %2943 = vrot.lane.b32.xlu0 %v2581, 109
        %v2944 = vpop.permute.xlu0 %2943
        %2945 = vrot.lane.b32.xlu0 %v2582, 109
        %v2946 = vpop.permute.xlu0 %2945
        %2947 = vrot.lane.b32.xlu0 %v2583, 109
        %v2948 = vpop.permute.xlu0 %2947
        %2949 = vrot.lane.b32.xlu0 %v2584, 109
        %v2950 = vpop.permute.xlu0 %2949
        %v2951 = vsel %vm1055, %v2928, %v2930
        %v2952 = vsel %vm1055, %v2930, %v2932
        %v2953 = vsel %vm1055, %v2932, %v2934
        %v2954 = vsel %vm1055, %v2936, %v2938
        %v2955 = vsel %vm1055, %v2938, %v2940
        %v2956 = vsel %vm1055, %v2940, %v2942
        %v2957 = vsel %vm1055, %v2944, %v2946
        %v2958 = vsel %vm1055, %v2946, %v2948
        %v2959 = vsel %vm1055, %v2948, %v2950
        %v2970 = vsel %vm2114, %v2926, 0
        %2972 = vmatpush.msra.mxu0 0.0
        %2973 = vmatpush.msra.mxu0 0.0
        %2974 = vmatpush.msra.mxu0 0.0
        %2975 = vmatpush.msra.mxu0 0.0
        %2976 = vmatpush.msra.mxu0 0.0
        %2977 = vmatpush.msra.mxu0 0.0
        %2978 = vmatpush.msra.mxu0 0.0
        %2979 = vmatpush.msra.mxu0 0.0
        %2980 = vmatpush.msra.mxu0 0.0
        %2981 = vmatpush.msra.mxu0 0.0
        %2982 = vmatpush.msra.mxu0 0.0
        %2983 = vmatpush.msra.mxu0 0.0
        %2984 = vmatpush.msra.mxu0 0.0
        %2985 = vmatpush.msra.mxu0 %v2957
        %2986 = vmatpush.msra.mxu0 %v2954
        %2987 = vmatpush.msra.mxu0 %v2951
        %2988 = vmatmul.f32.gmra.mxu0 %v2970
        %v2989 = vpop.f32.mrf.mxu0
        %v2990 = vadd.f32 0.0, %v2989
        %2991 = vdwg.mxu0
        %2992 = vmatpush.msra.mxu0 0.0
        %2993 = vmatpush.msra.mxu0 0.0
        %2994 = vmatpush.msra.mxu0 0.0
        %2995 = vmatpush.msra.mxu0 0.0
        %2996 = vmatpush.msra.mxu0 0.0
        %2997 = vmatpush.msra.mxu0 0.0
        %2998 = vmatpush.msra.mxu0 0.0
        %2999 = vmatpush.msra.mxu0 0.0
        %3000 = vmatpush.msra.mxu0 0.0
        %3001 = vmatpush.msra.mxu0 0.0
        %3002 = vmatpush.msra.mxu0 0.0
        %3003 = vmatpush.msra.mxu0 0.0
        %3004 = vmatpush.msra.mxu0 0.0
        %3005 = vmatpush.msra.mxu0 %v2958
        %3006 = vmatpush.msra.mxu0 %v2955
        %3007 = vmatpush.msra.mxu0 %v2952
        %3008 = vmatmul.f32.gmra.mxu0 %v2970
        %v3009 = vpop.f32.mrf.mxu0
        %v3010 = vadd.f32 0.0, %v3009
        %3011 = vdwg.mxu0
        %3012 = vmatpush.msra.mxu0 0.0
        %3013 = vmatpush.msra.mxu0 0.0
        %3014 = vmatpush.msra.mxu0 0.0
        %3015 = vmatpush.msra.mxu0 0.0
        %3016 = vmatpush.msra.mxu0 0.0
        %3017 = vmatpush.msra.mxu0 0.0
        %3018 = vmatpush.msra.mxu0 0.0
        %3019 = vmatpush.msra.mxu0 0.0
        %3020 = vmatpush.msra.mxu0 0.0
        %3021 = vmatpush.msra.mxu0 0.0
        %3022 = vmatpush.msra.mxu0 0.0
        %3023 = vmatpush.msra.mxu0 0.0
        %3024 = vmatpush.msra.mxu0 0.0
        %3025 = vmatpush.msra.mxu0 %v2959
        %3026 = vmatpush.msra.mxu0 %v2956
        %3027 = vmatpush.msra.mxu0 %v2953
        %3028 = vmatmul.f32.gmra.mxu0 %v2970
        %v3029 = vpop.f32.mrf.mxu0
        %v3030 = vadd.f32 0.0, %v3029
        %3031 = vdwg.mxu0
        %v3032 = vadd.f32 %v2922, %v2990
        %v3033 = vadd.f32 %v2923, %v3010
        %v3034 = vadd.f32 %v2924, %v3030
        %v3035 = vld [vmem:[%s7] sm:$0xff]
        %3037 = vset.pattern.permute.xlu0 0
        %3038 = vperm.xlu0 %3037, %v3035
        %v3039 = vpop.permute.xlu0 %3038
        %v3041 = vadd.f32 %v3032, %v3039
        %v3042 = vadd.f32 %v3033, %v3039
        %v3043 = vadd.f32 %v3034, %v3039
        %vm3044 = vcmp.ge.f32.partialorder %v3041, 0.0
        %vm3045 = vcmp.ge.f32.partialorder %v3042, 0.0
        %vm3046 = vcmp.ge.f32.partialorder %v3043, 0.0
        %v3047 = vmul.f32 %v3041, 0.1
        %v3048 = vmul.f32 %v3042, 0.1
        %v3049 = vmul.f32 %v3043, 0.1
        %v3050 = vsel %vm3044, %v3041, %v3047
        %v3051 = vsel %vm3045, %v3042, %v3048
        %v3052 = vsel %vm3046, %v3043, %v3049
        %v3053 = vsel %vm1150, %v3050, 0.0
        %v3054 = vsel %vm1151, %v3051, 0.0
        %v3055 = vsel %vm1152, %v3052, 0.0
        %3056 = vst [vmem:[#allocation2 + $0x80] sm:$0xff] %v3053
        %3057 = vst [vmem:[#allocation2 + $0x88] sm:$0xff] %v3054
        %3058 = vst [vmem:[#allocation2 + $0x90] sm:$0xff] %v3055
        %v3059 = vld [vmem:[#allocation2 + $0x8] sm:$0xff]
        %v3060 = vld [vmem:[#allocation2 + $0x10] sm:$0xff]
        %v3061 = vld [vmem:[#allocation2 + $0x18] sm:$0xff]
        %v3062 = vld [vmem:[#allocation2 + $0x30] sm:$0xff]
        %v3063 = vld [vmem:[#allocation2 + $0x38] sm:$0xff]
        %v3064 = vld [vmem:[#allocation2 + $0x40] sm:$0xff]
        %v3065 = vld [vmem:[#allocation2 + $0x58] sm:$0xff]
        %v3066 = vld [vmem:[#allocation2 + $0x60] sm:$0xff]
        %v3067 = vld [vmem:[#allocation2 + $0x68] sm:$0xff]
        %v3068 = vld [vmem:[#allocation2 + $0x80] sm:$0xff]
        %v3069 = vld [vmem:[#allocation2 + $0x88] sm:$0xff]
        %v3070 = vld [vmem:[#allocation2 + $0x90] sm:$0xff]
        %v3071 = vld [vmem:[%s8] sm:$0xff]
        %v3072 = vld [vmem:[%s9] sm:$0xff]
        %3074 = vset.pattern.permute.xlu0 0
        %3075 = vperm.xlu0 %3074, %v3072
        %v3076 = vpop.permute.xlu0 %3075
        %vm3078 = vcmask 261120
        %v3080 = vsel %vm3078, %v3071, 0
        %3082 = vmatpush.msra.mxu0 0.0
        %3083 = vmatpush.msra.mxu0 0.0
        %3084 = vmatpush.msra.mxu0 0.0
        %3085 = vmatpush.msra.mxu0 0.0
        %3086 = vmatpush.msra.mxu0 0.0
        %3087 = vmatpush.msra.mxu0 0.0
        %3088 = vmatpush.msra.mxu0 0.0
        %3089 = vmatpush.msra.mxu0 0.0
        %3090 = vmatpush.msra.mxu0 0.0
        %3091 = vmatpush.msra.mxu0 0.0
        %3092 = vmatpush.msra.mxu0 0.0
        %3093 = vmatpush.msra.mxu0 0.0
        %3094 = vmatpush.msra.mxu0 %v3068
        %3095 = vmatpush.msra.mxu0 %v3065
        %3096 = vmatpush.msra.mxu0 %v3062
        %3097 = vmatpush.msra.mxu0 %v3059
        %3098 = vmatmul.f32.gmra.mxu0 %v3080
        %v3099 = vpop.f32.mrf.mxu0
        %v3100 = vadd.f32 %v3076, %v3099
        %3101 = vdwg.mxu0
        %3102 = vmatpush.msra.mxu0 0.0
        %3103 = vmatpush.msra.mxu0 0.0
        %3104 = vmatpush.msra.mxu0 0.0
        %3105 = vmatpush.msra.mxu0 0.0
        %3106 = vmatpush.msra.mxu0 0.0
        %3107 = vmatpush.msra.mxu0 0.0
        %3108 = vmatpush.msra.mxu0 0.0
        %3109 = vmatpush.msra.mxu0 0.0
        %3110 = vmatpush.msra.mxu0 0.0
        %3111 = vmatpush.msra.mxu0 0.0
        %3112 = vmatpush.msra.mxu0 0.0
        %3113 = vmatpush.msra.mxu0 0.0
        %3114 = vmatpush.msra.mxu0 %v3069
        %3115 = vmatpush.msra.mxu0 %v3066
        %3116 = vmatpush.msra.mxu0 %v3063
        %3117 = vmatpush.msra.mxu0 %v3060
        %3118 = vmatmul.f32.gmra.mxu0 %v3080
        %v3119 = vpop.f32.mrf.mxu0
        %v3120 = vadd.f32 %v3076, %v3119
        %3121 = vdwg.mxu0
        %3122 = vmatpush.msra.mxu0 0.0
        %3123 = vmatpush.msra.mxu0 0.0
        %3124 = vmatpush.msra.mxu0 0.0
        %3125 = vmatpush.msra.mxu0 0.0
        %3126 = vmatpush.msra.mxu0 0.0
        %3127 = vmatpush.msra.mxu0 0.0
        %3128 = vmatpush.msra.mxu0 0.0
        %3129 = vmatpush.msra.mxu0 0.0
        %3130 = vmatpush.msra.mxu0 0.0
        %3131 = vmatpush.msra.mxu0 0.0
        %3132 = vmatpush.msra.mxu0 0.0
        %3133 = vmatpush.msra.mxu0 0.0
        %3134 = vmatpush.msra.mxu0 %v3070
        %3135 = vmatpush.msra.mxu0 %v3067
        %3136 = vmatpush.msra.mxu0 %v3064
        %3137 = vmatpush.msra.mxu0 %v3061
        %3138 = vmatmul.f32.gmra.mxu0 %v3080
        %v3139 = vpop.f32.mrf.mxu0
        %v3140 = vadd.f32 %v3076, %v3139
        %3141 = vdwg.mxu0
        %v3142 = vadd.f32 %v3100, %v3059
        %v3143 = vadd.f32 %v3120, %v3060
        %v3144 = vadd.f32 %v3140, %v3061
        %3145 = vst [vmem:[%s377] sm:$0xff] %v3142
        %3146 = vst [vmem:[%s377 + $0x8] sm:$0xff] %v3143
        %3147 = vst [vmem:[%s377 + $0x10] sm:$0xff] %v3144
        %s3148 = sand.u32 %s250, 1
        %s3149 = scalar_lea.sflag [#allocation5], %s3148
        %s3150 = sand.u32 %s250, 1
        %s3151 = smul.addr %s3150, 24
        %s3152 = scalar_lea.vmem [#allocation6], %s3151
        // Predicated region
        $region65: #{tpu_custom_call.1} parent=59 // pred_check
          %p3153 = pneg %p260
        $region66: #{tpu_custom_call.1} parent=59 // pred_check_branch
          %3155 = sbr.rel (%p3153) target = $region68
        $region67: #{tpu_custom_call.1} parent=59 // pred_region
          %3157 = vsyncadd %s3149, 0
          %s3158 = smul.addr %s27, 3
          %s3159 = smul.addr %s3158, 8
          %s3160 = scalar_lea.hbm %s10, %s3159
          %s3162 = sshll.u32 %s3152, 4
          %s3163 = int_to_ptr.vmem [resolvable:$true] %s3162
          %s3164 = sshll.u32 %s3160, 4
          %s3165 = int_to_ptr.hbm [resolvable:$true] %s3164
          %3167 = dma.vmem_to_hbm [thread:$0]  %s3163, 384, %s3165, %s3149
        $region68: #{tpu_custom_call.1} parent=59 // pred_fallthru
          _
      $region60: #{tpu_custom_call.1} parent=5 // pred_fallthru
        _
      %p3168 = scmp.le.s32.totalorder 2, %s22
      // Predicated region
      $region69: #{tpu_custom_call.1} parent=5 // pred_check
        %p3169 = pneg %p3168
      $region70: #{tpu_custom_call.1} parent=5 // pred_check_branch
        %3171 = sbr.rel (%p3169) target = $region72
      $region71: #{tpu_custom_call.1} parent=5 // pred_region
        %s3172 = ssub.s32 %s22, 2
        // Predicated region
        $region73: #{tpu_custom_call.1} parent=71 // pred_check
          %p3173 = pneg %p266
        $region74: #{tpu_custom_call.1} parent=71 // pred_check_branch
          %3175 = sbr.rel (%p3173) target = $region76
        $region75: #{tpu_custom_call.1} parent=71 // pred_region
          %s3176 = sand.u32 %s251, 1
          %s3177 = scalar_lea.sflag [#allocation5], %s3176
          %s3178 = sand.u32 %s251, 1
          %s3179 = smul.addr %s3178, 24
          %s3180 = scalar_lea.vmem [#allocation6], %s3179
          %3182 = dma.done %s3177, 384
        $region76: #{tpu_custom_call.1} parent=71 // pred_fallthru
          _
      $region72: #{tpu_custom_call.1} parent=5 // pred_fallthru
        _
    $region6: #{tpu_custom_call.1} parent=1 // loop_footer
      %s26 = sadd.s32 1, %s22
    $region7: #{tpu_custom_call.1} parent=1 // loop_footer_branch
      %21 = sbr.rel target = $region3
    $region8: #{tpu_custom_call.1} parent=1 // loop_exit
      _
    %3183 = vsyncpa [#allocation4], 1
    %s3184 = scalar_lea.sflag [#allocation4], 1
    %3185 = vsyncpa %s3184, 1
    %3186 = vsyncpa [#allocation5], 1
    %s3187 = scalar_lea.sflag [#allocation5], 1
    %3188 = vsyncpa %s3187, 1

</llo_original>
